<compile_context>
chip_gen: v7x
topology: tpu7x:2x2x1
jax: 0.10.0
libtpu: 0.0.40
codegen_flags: <defaults>
</compile_context>

<pallas_src>
import jax
import jax.numpy as jnp
import numpy as np
from jax.experimental import pallas as pl
from jax.experimental.pallas import tpu as pltpu


def _fused_kernel(x_ref, cw_ref, cb_ref, w1_ref, b1_ref, w2_ref, b2_ref,
                  o_ref, feats_ref):
    """One image per grid step: 3x3 conv + bias + ReLU + global-avg-pool into feats scratch;
    on the last step run the fc/classifier head and write the (N, 2) log-probs.

    x_ref:  (1, H+2, W+2, C)  zero-padded NHWC image, bf16
    cw_ref: (9, C, Fp)        conv weight per 3x3 tap (HWIO flattened over taps), bf16
    cb_ref: (1, Fp)           conv bias (zero-padded), f32
    w1_ref: (Fp, 256) b1_ref: (1, 256)   fc (zero-padded rows), f32
    w2_ref: (256, 2)  b2_ref: (1, 2)     classifier Linear, f32
    o_ref:  (N, 2)            log-softmax output
    feats_ref: (N, Fp)        VMEM scratch holding pooled features across grid steps
    """
    n = pl.program_id(0)
    Hp2, Wp2, C = x_ref.shape[1], x_ref.shape[2], x_ref.shape[3]
    H, W = Hp2 - 2, Wp2 - 2
    HW = H * W
    Fp = cw_ref.shape[2]

    xi = x_ref[0]                                              # (H+2, W+2, C) bf16, loaded once

    # 3x3 SAME conv as 9 accumulated matmuls over statically shifted windows (MXU, bf16 in / f32 acc).
    acc = jnp.zeros((HW, Fp), jnp.float32)
    for t in range(9):                                         # statically unrolled taps
        kh, kw = t // 3, t % 3
        win = xi[kh:kh + H, kw:kw + W, :].reshape(HW, C)       # (HW, C) bf16
        acc = acc + jnp.dot(win, cw_ref[t], preferred_element_type=jnp.float32)

    y = jnp.maximum(acc + cb_ref[...], 0.0)                    # conv bias + ReLU, f32 (HW, Fp)

    # AdaptiveAvgPool2d(1): sum over spatial positions, scale once.
    pooled = jnp.sum(y, axis=0, keepdims=True) * (1.0 / HW)    # (1, Fp)
    feats_ref[pl.ds(n, 1), :] = pooled

    # Head fused into the same kernel: runs once, after the last image's features are in scratch.
    @pl.when(n == pl.num_programs(0) - 1)
    def _head():
        f = feats_ref[...]                                                         # (N, Fp)
        h = jnp.dot(f, w1_ref[...], preferred_element_type=jnp.float32) + b1_ref[...]
        h = jnp.maximum(h, 0.0)
        # TODO(synk): nn.Dropout(0.5) is identity at inference; training-mode masking not implemented.
        logits = jnp.dot(h, w2_ref[...], preferred_element_type=jnp.float32) + b2_ref[...]
        m = jnp.max(logits, axis=1, keepdims=True)
        lse = jnp.log(jnp.sum(jnp.exp(logits - m), axis=1, keepdims=True)) + m
        o_ref[...] = logits - lse


def _round_up(v, m):
    return (v + m - 1) // m * m


def conv_pre_net_forward(x_nchw, params):
    N, C, H, W = x_nchw.shape
    F = params["conv_w"].shape[-1]              # num_infeature
    Fp = _round_up(max(F, 128), 128)            # lane-dense feature width (128-aligned; fine on v5e too)

    # --- glue: NCHW -> NHWC, 1-pixel zero pad for the SAME 3x3 conv, cast matmul stream to bf16 ---
    x = jnp.transpose(x_nchw, (0, 2, 3, 1)).astype(jnp.float32)
    xp = jnp.pad(x, ((0, 0), (1, 1), (1, 1), (0, 0))).astype(jnp.bfloat16)   # (N, H+2, W+2, C)

    # --- glue: zero-pad the feature axis to Fp (padded lanes stay exactly 0 through conv/pool/fc) ---
    cw = jnp.pad(params["conv_w"], ((0, 0), (0, 0), (0, 0), (0, Fp - F)))
    cw = cw.reshape(9, C, Fp).astype(jnp.bfloat16)                           # per-tap (C, Fp)
    cb = jnp.pad(params["conv_b"], ((0, 0), (0, Fp - F))).astype(jnp.float32)  # (1, Fp)
    w1 = jnp.pad(params["fc_w"], ((0, Fp - F), (0, 0))).astype(jnp.float32)    # (Fp, 256)
    b1 = params["fc_b"].astype(jnp.float32)
    w2 = params["cls_w"].astype(jnp.float32)
    b2 = params["cls_b"].astype(jnp.float32)

    # VMEM per grid step: (H+2)(W+2)*C bf16 x2 bufs + HW*Fp f32 acc + weights — a few hundred KiB here.
    # TODO(synk): for realistic image sizes tile HW inside the kernel (partial-sum pooling with a
    # pl.when finalize) so the block stays under v7x's 64 MiB VMEM.
    return pl.pallas_call(
        _fused_kernel,
        out_shape=jax.ShapeDtypeStruct((N, 2), jnp.float32),
        grid=(N,),
        in_specs=[
            pl.BlockSpec((1, H + 2, W + 2, C), lambda n: (n, 0, 0, 0)),
            pl.BlockSpec((9, C, Fp), lambda n: (0, 0, 0)),
            pl.BlockSpec((1, Fp), lambda n: (0, 0)),
            pl.BlockSpec((Fp, 256), lambda n: (0, 0)),
            pl.BlockSpec((1, 256), lambda n: (0, 0)),
            pl.BlockSpec((256, 2), lambda n: (0, 0)),
            pl.BlockSpec((1, 2), lambda n: (0, 0)),
        ],
        out_specs=pl.BlockSpec((N, 2), lambda n: (0, 0)),
        scratch_shapes=[pltpu.VMEM((N, Fp), jnp.float32)],
        # The pooled-feature scratch and the single (N, 2) output block carry across grid steps,
        # so the image axis must be sequential ("arbitrary") rather than megacore-sharded.
        compiler_params=pltpu.CompilerParams(dimension_semantics=("arbitrary",)),
    )(xp, cw, cb, w1, b1, w2, b2)


def init_params(key, in_channels=4, num_infeature=32):
    ks = jax.random.split(key, 6)
    return {
        # synthetic backbone conv: Conv2d(in_channels, num_infeature, 3, padding=1)
        "conv_w": 0.1 * jax.random.normal(ks[0], (3, 3, in_channels, num_infeature), jnp.float32),
        "conv_b": 0.1 * jax.random.normal(ks[1], (1, num_infeature), jnp.float32),
        # self.fc = nn.Linear(num_infeature, 256)   (stored as (in, out))
        "fc_w": 0.1 * jax.random.normal(ks[2], (num_infeature, 256), jnp.float32),
        "fc_b": 0.1 * jax.random.normal(ks[3], (1, 256), jnp.float32),
        # classifier Linear(256, 2)
        "cls_w": 0.1 * jax.random.normal(ks[4], (256, 2), jnp.float32),
        "cls_b": 0.1 * jax.random.normal(ks[5], (1, 2), jnp.float32),
    }


def reference_forward(x_nchw, params):
    """Pure-JAX reference (same math, highest precision)."""
    x = jnp.transpose(x_nchw, (0, 2, 3, 1)).astype(jnp.float32)
    y = jax.lax.conv_general_dilated(
        x, params["conv_w"], window_strides=(1, 1), padding="SAME",
        dimension_numbers=("NHWC", "HWIO", "NHWC"),
        precision=jax.lax.Precision.HIGHEST)
    y = jnp.maximum(y + params["conv_b"].reshape(1, 1, 1, -1), 0.0)
    f = jnp.mean(y, axis=(1, 2))
    h = jnp.dot(f, params["fc_w"], precision=jax.lax.Precision.HIGHEST) + params["fc_b"]
    h = jnp.maximum(h, 0.0)
    logits = jnp.dot(h, params["cls_w"], precision=jax.lax.Precision.HIGHEST) + params["cls_b"]
    return jax.nn.log_softmax(logits, axis=1)


if __name__ == "__main__":
    key = jax.random.PRNGKey(0)
    pkey, xkey = jax.random.split(key)

    params = init_params(pkey, in_channels=4, num_infeature=32)
    x = jax.random.normal(xkey, (2, 4, 16, 16), jnp.float32)   # NCHW like the PyTorch module

    fwd = jax.jit(conv_pre_net_forward)
    out = jax.block_until_ready(fwd(x, params))

    ref = reference_forward(x, params)
    np.testing.assert_allclose(np.asarray(out), np.asarray(ref), atol=2e-3, rtol=2e-3)
    assert out.shape == (2, 2)

    print("KERNEL_OK")
</pallas_src>

<mosaic_0001>
module attributes {stable_mosaic.version = 11 : i64} {
  func.func @_fused_kernel(%arg0: i32, %arg1: memref<1x18x18x4xbf16, #tpu.memory_space<vmem>>, %arg2: memref<9x4x128xbf16, #tpu.memory_space<vmem>>, %arg3: memref<1x128xf32, #tpu.memory_space<vmem>>, %arg4: memref<128x256xf32, #tpu.memory_space<vmem>>, %arg5: memref<1x256xf32, #tpu.memory_space<vmem>>, %arg6: memref<256x2xf32, #tpu.memory_space<vmem>>, %arg7: memref<1x2xf32, #tpu.memory_space<vmem>>, %arg8: memref<2x2xf32, #tpu.memory_space<vmem>>, %arg9: memref<2x128xf32, #tpu.memory_space<vmem>>) attributes {dimension_semantics = [#tpu.dimension_semantics<arbitrary>], iteration_bounds = array<i64: 2>, scalar_prefetch = 0 : i64, scratch_operands = 1 : i64, tpu.core_type = #tpu.core_type<tc>, window_params = [{transform_indices = @transform_0, window_bounds = array<i64: 1, 18, 18, 4>}, {pipeline_mode = #tpu.pipeline_mode<synchronous>, transform_indices = @transform_1, window_bounds = array<i64: 9, 4, 128>}, {pipeline_mode = #tpu.pipeline_mode<synchronous>, transform_indices = @transform_2, window_bounds = array<i64: 1, 128>}, {pipeline_mode = #tpu.pipeline_mode<synchronous>, transform_indices = @transform_3, window_bounds = array<i64: 128, 256>}, {pipeline_mode = #tpu.pipeline_mode<synchronous>, transform_indices = @transform_4, window_bounds = array<i64: 1, 256>}, {pipeline_mode = #tpu.pipeline_mode<synchronous>, transform_indices = @transform_5, window_bounds = array<i64: 256, 2>}, {pipeline_mode = #tpu.pipeline_mode<synchronous>, transform_indices = @transform_6, window_bounds = array<i64: 1, 2>}, {pipeline_mode = #tpu.pipeline_mode<synchronous>, transform_indices = @transform_7, window_bounds = array<i64: 2, 2>}]} {
    %c0 = arith.constant 0 : index
    %c0_0 = arith.constant 0 : index
    %c0_1 = arith.constant 0 : index
    %c0_2 = arith.constant 0 : index
    %0 = vector.load %arg1[%c0, %c0_0, %c0_1, %c0_2] : memref<1x18x18x4xbf16, #tpu.memory_space<vmem>>, vector<1x18x18x4xbf16>
    %1 = vector.shape_cast %0 : vector<1x18x18x4xbf16> to vector<18x18x4xbf16>
    %cst = arith.constant 0.000000e+00 : f32
    %2 = vector.broadcast %cst : f32 to vector<256x128xf32>
    %3 = vector.extract_strided_slice %1 {offsets = [0, 0, 0], sizes = [16, 16, 4], strides = [1, 1, 1]} : vector<18x18x4xbf16> to vector<16x16x4xbf16>
    %4 = vector.shape_cast %3 : vector<16x16x4xbf16> to vector<256x4xbf16>
    %c0_3 = arith.constant 0 : index
    %c0_4 = arith.constant 0 : index
    %c0_5 = arith.constant 0 : index
    %5 = vector.load %arg2[%c0_3, %c0_4, %c0_5] : memref<9x4x128xbf16, #tpu.memory_space<vmem>>, vector<1x4x128xbf16>
    %6 = vector.shape_cast %5 : vector<1x4x128xbf16> to vector<4x128xbf16>
    %cst_6 = arith.constant dense<0.000000e+00> : vector<256x128xf32>
    %7 = tpu.matmul %4, %6, %cst_6 {dimension_numbers = #tpu.dot_dimension_numbers<[1], [0], [0], [1], [0, 0, 1, 1], [], []>} : vector<256x4xbf16>, vector<4x128xbf16>, vector<256x128xf32> -> vector<256x128xf32>
    %8 = arith.addf %2, %7 : vector<256x128xf32>
    %9 = vector.extract_strided_slice %1 {offsets = [0, 1, 0], sizes = [16, 16, 4], strides = [1, 1, 1]} : vector<18x18x4xbf16> to vector<16x16x4xbf16>
    %10 = vector.shape_cast %9 : vector<16x16x4xbf16> to vector<256x4xbf16>
    %c1 = arith.constant 1 : index
    %c0_7 = arith.constant 0 : index
    %c0_8 = arith.constant 0 : index
    %11 = vector.load %arg2[%c1, %c0_7, %c0_8] : memref<9x4x128xbf16, #tpu.memory_space<vmem>>, vector<1x4x128xbf16>
    %12 = vector.shape_cast %11 : vector<1x4x128xbf16> to vector<4x128xbf16>
    %cst_9 = arith.constant dense<0.000000e+00> : vector<256x128xf32>
    %13 = tpu.matmul %10, %12, %cst_9 {dimension_numbers = #tpu.dot_dimension_numbers<[1], [0], [0], [1], [0, 0, 1, 1], [], []>} : vector<256x4xbf16>, vector<4x128xbf16>, vector<256x128xf32> -> vector<256x128xf32>
    %14 = arith.addf %8, %13 : vector<256x128xf32>
    %15 = vector.extract_strided_slice %1 {offsets = [0, 2, 0], sizes = [16, 16, 4], strides = [1, 1, 1]} : vector<18x18x4xbf16> to vector<16x16x4xbf16>
    %16 = vector.shape_cast %15 : vector<16x16x4xbf16> to vector<256x4xbf16>
    %c2 = arith.constant 2 : index
    %c0_10 = arith.constant 0 : index
    %c0_11 = arith.constant 0 : index
    %17 = vector.load %arg2[%c2, %c0_10, %c0_11] : memref<9x4x128xbf16, #tpu.memory_space<vmem>>, vector<1x4x128xbf16>
    %18 = vector.shape_cast %17 : vector<1x4x128xbf16> to vector<4x128xbf16>
    %cst_12 = arith.constant dense<0.000000e+00> : vector<256x128xf32>
    %19 = tpu.matmul %16, %18, %cst_12 {dimension_numbers = #tpu.dot_dimension_numbers<[1], [0], [0], [1], [0, 0, 1, 1], [], []>} : vector<256x4xbf16>, vector<4x128xbf16>, vector<256x128xf32> -> vector<256x128xf32>
    %20 = arith.addf %14, %19 : vector<256x128xf32>
    %21 = vector.extract_strided_slice %1 {offsets = [1, 0, 0], sizes = [16, 16, 4], strides = [1, 1, 1]} : vector<18x18x4xbf16> to vector<16x16x4xbf16>
    %22 = vector.shape_cast %21 : vector<16x16x4xbf16> to vector<256x4xbf16>
    %c3 = arith.constant 3 : index
    %c0_13 = arith.constant 0 : index
    %c0_14 = arith.constant 0 : index
    %23 = vector.load %arg2[%c3, %c0_13, %c0_14] : memref<9x4x128xbf16, #tpu.memory_space<vmem>>, vector<1x4x128xbf16>
    %24 = vector.shape_cast %23 : vector<1x4x128xbf16> to vector<4x128xbf16>
    %cst_15 = arith.constant dense<0.000000e+00> : vector<256x128xf32>
    %25 = tpu.matmul %22, %24, %cst_15 {dimension_numbers = #tpu.dot_dimension_numbers<[1], [0], [0], [1], [0, 0, 1, 1], [], []>} : vector<256x4xbf16>, vector<4x128xbf16>, vector<256x128xf32> -> vector<256x128xf32>
    %26 = arith.addf %20, %25 : vector<256x128xf32>
    %27 = vector.extract_strided_slice %1 {offsets = [1, 1, 0], sizes = [16, 16, 4], strides = [1, 1, 1]} : vector<18x18x4xbf16> to vector<16x16x4xbf16>
    %28 = vector.shape_cast %27 : vector<16x16x4xbf16> to vector<256x4xbf16>
    %c4 = arith.constant 4 : index
    %c0_16 = arith.constant 0 : index
    %c0_17 = arith.constant 0 : index
    %29 = vector.load %arg2[%c4, %c0_16, %c0_17] : memref<9x4x128xbf16, #tpu.memory_space<vmem>>, vector<1x4x128xbf16>
    %30 = vector.shape_cast %29 : vector<1x4x128xbf16> to vector<4x128xbf16>
    %cst_18 = arith.constant dense<0.000000e+00> : vector<256x128xf32>
    %31 = tpu.matmul %28, %30, %cst_18 {dimension_numbers = #tpu.dot_dimension_numbers<[1], [0], [0], [1], [0, 0, 1, 1], [], []>} : vector<256x4xbf16>, vector<4x128xbf16>, vector<256x128xf32> -> vector<256x128xf32>
    %32 = arith.addf %26, %31 : vector<256x128xf32>
    %33 = vector.extract_strided_slice %1 {offsets = [1, 2, 0], sizes = [16, 16, 4], strides = [1, 1, 1]} : vector<18x18x4xbf16> to vector<16x16x4xbf16>
    %34 = vector.shape_cast %33 : vector<16x16x4xbf16> to vector<256x4xbf16>
    %c5 = arith.constant 5 : index
    %c0_19 = arith.constant 0 : index
    %c0_20 = arith.constant 0 : index
    %35 = vector.load %arg2[%c5, %c0_19, %c0_20] : memref<9x4x128xbf16, #tpu.memory_space<vmem>>, vector<1x4x128xbf16>
    %36 = vector.shape_cast %35 : vector<1x4x128xbf16> to vector<4x128xbf16>
    %cst_21 = arith.constant dense<0.000000e+00> : vector<256x128xf32>
    %37 = tpu.matmul %34, %36, %cst_21 {dimension_numbers = #tpu.dot_dimension_numbers<[1], [0], [0], [1], [0, 0, 1, 1], [], []>} : vector<256x4xbf16>, vector<4x128xbf16>, vector<256x128xf32> -> vector<256x128xf32>
    %38 = arith.addf %32, %37 : vector<256x128xf32>
    %39 = vector.extract_strided_slice %1 {offsets = [2, 0, 0], sizes = [16, 16, 4], strides = [1, 1, 1]} : vector<18x18x4xbf16> to vector<16x16x4xbf16>
    %40 = vector.shape_cast %39 : vector<16x16x4xbf16> to vector<256x4xbf16>
    %c6 = arith.constant 6 : index
    %c0_22 = arith.constant 0 : index
    %c0_23 = arith.constant 0 : index
    %41 = vector.load %arg2[%c6, %c0_22, %c0_23] : memref<9x4x128xbf16, #tpu.memory_space<vmem>>, vector<1x4x128xbf16>
    %42 = vector.shape_cast %41 : vector<1x4x128xbf16> to vector<4x128xbf16>
    %cst_24 = arith.constant dense<0.000000e+00> : vector<256x128xf32>
    %43 = tpu.matmul %40, %42, %cst_24 {dimension_numbers = #tpu.dot_dimension_numbers<[1], [0], [0], [1], [0, 0, 1, 1], [], []>} : vector<256x4xbf16>, vector<4x128xbf16>, vector<256x128xf32> -> vector<256x128xf32>
    %44 = arith.addf %38, %43 : vector<256x128xf32>
    %45 = vector.extract_strided_slice %1 {offsets = [2, 1, 0], sizes = [16, 16, 4], strides = [1, 1, 1]} : vector<18x18x4xbf16> to vector<16x16x4xbf16>
    %46 = vector.shape_cast %45 : vector<16x16x4xbf16> to vector<256x4xbf16>
    %c7 = arith.constant 7 : index
    %c0_25 = arith.constant 0 : index
    %c0_26 = arith.constant 0 : index
    %47 = vector.load %arg2[%c7, %c0_25, %c0_26] : memref<9x4x128xbf16, #tpu.memory_space<vmem>>, vector<1x4x128xbf16>
    %48 = vector.shape_cast %47 : vector<1x4x128xbf16> to vector<4x128xbf16>
    %cst_27 = arith.constant dense<0.000000e+00> : vector<256x128xf32>
    %49 = tpu.matmul %46, %48, %cst_27 {dimension_numbers = #tpu.dot_dimension_numbers<[1], [0], [0], [1], [0, 0, 1, 1], [], []>} : vector<256x4xbf16>, vector<4x128xbf16>, vector<256x128xf32> -> vector<256x128xf32>
    %50 = arith.addf %44, %49 : vector<256x128xf32>
    %51 = vector.extract_strided_slice %1 {offsets = [2, 2, 0], sizes = [16, 16, 4], strides = [1, 1, 1]} : vector<18x18x4xbf16> to vector<16x16x4xbf16>
    %52 = vector.shape_cast %51 : vector<16x16x4xbf16> to vector<256x4xbf16>
    %c8 = arith.constant 8 : index
    %c0_28 = arith.constant 0 : index
    %c0_29 = arith.constant 0 : index
    %53 = vector.load %arg2[%c8, %c0_28, %c0_29] : memref<9x4x128xbf16, #tpu.memory_space<vmem>>, vector<1x4x128xbf16>
    %54 = vector.shape_cast %53 : vector<1x4x128xbf16> to vector<4x128xbf16>
    %cst_30 = arith.constant dense<0.000000e+00> : vector<256x128xf32>
    %55 = tpu.matmul %52, %54, %cst_30 {dimension_numbers = #tpu.dot_dimension_numbers<[1], [0], [0], [1], [0, 0, 1, 1], [], []>} : vector<256x4xbf16>, vector<4x128xbf16>, vector<256x128xf32> -> vector<256x128xf32>
    %56 = arith.addf %50, %55 : vector<256x128xf32>
    %c0_31 = arith.constant 0 : index
    %c0_32 = arith.constant 0 : index
    %57 = vector.load %arg3[%c0_31, %c0_32] : memref<1x128xf32, #tpu.memory_space<vmem>>, vector<1x128xf32>
    %58 = vector.broadcast %57 : vector<1x128xf32> to vector<256x128xf32>
    %59 = arith.addf %56, %58 : vector<256x128xf32>
    %cst_33 = arith.constant 0.000000e+00 : f32
    %60 = vector.broadcast %cst_33 : f32 to vector<256x128xf32>
    %61 = arith.maximumf %59, %60 : vector<256x128xf32>
    %cst_34 = arith.constant dense<0.000000e+00> : vector<128xf32>
    %62 = vector.multi_reduction <add>, %61, %cst_34 [0] : vector<256x128xf32> to vector<128xf32>
    %63 = vector.shape_cast %62 : vector<128xf32> to vector<1x128xf32>
    %cst_35 = arith.constant 3.906250e-03 : f32
    %64 = vector.broadcast %cst_35 : f32 to vector<1x128xf32>
    %65 = arith.mulf %63, %64 : vector<1x128xf32>
    %66 = arith.index_cast %arg0 : i32 to index
    %c0_36 = arith.constant 0 : index
    %67 = vector.load %arg9[%66, %c0_36] : memref<2x128xf32, #tpu.memory_space<vmem>>, vector<1x128xf32>
    tpu.vector_store %arg9[%66, %c0_36], %65 {strides = array<i32>} : memref<2x128xf32, #tpu.memory_space<vmem>>, vector<1x128xf32>,
    %c1_i32 = arith.constant 1 : i32
    %68 = arith.cmpi eq, %arg0, %c1_i32 : i32
    %69 = arith.extui %68 : i1 to i32
    %c0_i32 = arith.constant 0 : i32
    %70 = arith.cmpi ne, %69, %c0_i32 : i32
    scf.if %70 {
      %c0_37 = arith.constant 0 : index
      %c0_38 = arith.constant 0 : index
      %71 = vector.load %arg9[%c0_37, %c0_38] : memref<2x128xf32, #tpu.memory_space<vmem>>, vector<2x128xf32>
      %c0_39 = arith.constant 0 : index
      %c0_40 = arith.constant 0 : index
      %72 = vector.load %arg4[%c0_39, %c0_40] : memref<128x256xf32, #tpu.memory_space<vmem>>, vector<128x256xf32>
      %cst_41 = arith.constant dense<0.000000e+00> : vector<2x256xf32>
      %73 = tpu.matmul %71, %72, %cst_41 {dimension_numbers = #tpu.dot_dimension_numbers<[1], [0], [0], [1], [0, 0, 1, 1], [], []>} : vector<2x128xf32>, vector<128x256xf32>, vector<2x256xf32> -> vector<2x256xf32>
      %c0_42 = arith.constant 0 : index
      %c0_43 = arith.constant 0 : index
      %74 = vector.load %arg5[%c0_42, %c0_43] : memref<1x256xf32, #tpu.memory_space<vmem>>, vector<1x256xf32>
      %75 = vector.broadcast %74 : vector<1x256xf32> to vector<2x256xf32>
      %76 = arith.addf %73, %75 : vector<2x256xf32>
      %cst_44 = arith.constant 0.000000e+00 : f32
      %77 = vector.broadcast %cst_44 : f32 to vector<2x256xf32>
      %78 = arith.maximumf %76, %77 : vector<2x256xf32>
      %c0_45 = arith.constant 0 : index
      %c0_46 = arith.constant 0 : index
      %79 = vector.load %arg6[%c0_45, %c0_46] : memref<256x2xf32, #tpu.memory_space<vmem>>, vector<256x2xf32>
      %cst_47 = arith.constant dense<0.000000e+00> : vector<2x2xf32>
      %80 = tpu.matmul %78, %79, %cst_47 {dimension_numbers = #tpu.dot_dimension_numbers<[1], [0], [0], [1], [0, 0, 1, 1], [], []>} : vector<2x256xf32>, vector<256x2xf32>, vector<2x2xf32> -> vector<2x2xf32>
      %c0_48 = arith.constant 0 : index
      %c0_49 = arith.constant 0 : index
      %81 = vector.load %arg7[%c0_48, %c0_49] : memref<1x2xf32, #tpu.memory_space<vmem>>, vector<1x2xf32>
      %82 = vector.broadcast %81 : vector<1x2xf32> to vector<2x2xf32>
      %83 = arith.addf %80, %82 : vector<2x2xf32>
      %cst_50 = arith.constant dense<0xFF800000> : vector<2xf32>
      %84 = vector.multi_reduction <maximumf>, %83, %cst_50 [1] : vector<2x2xf32> to vector<2xf32>
      %85 = vector.shape_cast %84 : vector<2xf32> to vector<2x1xf32>
      %86 = vector.broadcast %85 : vector<2x1xf32> to vector<2x2xf32>
      %87 = arith.subf %83, %86 : vector<2x2xf32>
      %88 = math.exp %87 : vector<2x2xf32>
      %cst_51 = arith.constant dense<0.000000e+00> : vector<2xf32>
      %89 = vector.multi_reduction <add>, %88, %cst_51 [1] : vector<2x2xf32> to vector<2xf32>
      %90 = vector.shape_cast %89 : vector<2xf32> to vector<2x1xf32>
      %91 = math.log %90 : vector<2x1xf32>
      %92 = arith.addf %91, %85 : vector<2x1xf32>
      %93 = vector.broadcast %92 : vector<2x1xf32> to vector<2x2xf32>
      %94 = arith.subf %83, %93 : vector<2x2xf32>
      %c0_52 = arith.constant 0 : index
      %c0_53 = arith.constant 0 : index
      %95 = vector.load %arg8[%c0_52, %c0_53] : memref<2x2xf32, #tpu.memory_space<vmem>>, vector<2x2xf32>
      tpu.vector_store %arg8[%c0_52, %c0_53], %94 {strides = array<i32>} : memref<2x2xf32, #tpu.memory_space<vmem>>, vector<2x2xf32>,
    } else {
    }
    return
  }
  func.func @transform_0(%arg0: i32) -> (i32, i32, i32, i32) {
    %c0_i32 = arith.constant 0 : i32
    %c0_i32_0 = arith.constant 0 : i32
    %c0_i32_1 = arith.constant 0 : i32
    %c0_i32_2 = arith.constant 0 : i32
    return %arg0, %c0_i32, %c0_i32_0, %c0_i32_1 : i32, i32, i32, i32
  }
  func.func @transform_1(%arg0: i32) -> (i32, i32, i32) {
    %c0_i32 = arith.constant 0 : i32
    %c0_i32_0 = arith.constant 0 : i32
    %c0_i32_1 = arith.constant 0 : i32
    %c0_i32_2 = arith.constant 0 : i32
    return %c0_i32, %c0_i32_0, %c0_i32_1 : i32, i32, i32
  }
  func.func @transform_2(%arg0: i32) -> (i32, i32) {
    %c0_i32 = arith.constant 0 : i32
    %c0_i32_0 = arith.constant 0 : i32
    %c0_i32_1 = arith.constant 0 : i32
    return %c0_i32, %c0_i32_0 : i32, i32
  }
  func.func @transform_3(%arg0: i32) -> (i32, i32) {
    %c0_i32 = arith.constant 0 : i32
    %c0_i32_0 = arith.constant 0 : i32
    %c0_i32_1 = arith.constant 0 : i32
    return %c0_i32, %c0_i32_0 : i32, i32
  }
  func.func @transform_4(%arg0: i32) -> (i32, i32) {
    %c0_i32 = arith.constant 0 : i32
    %c0_i32_0 = arith.constant 0 : i32
    %c0_i32_1 = arith.constant 0 : i32
    return %c0_i32, %c0_i32_0 : i32, i32
  }
  func.func @transform_5(%arg0: i32) -> (i32, i32) {
    %c0_i32 = arith.constant 0 : i32
    %c0_i32_0 = arith.constant 0 : i32
    %c0_i32_1 = arith.constant 0 : i32
    return %c0_i32, %c0_i32_0 : i32, i32
  }
  func.func @transform_6(%arg0: i32) -> (i32, i32) {
    %c0_i32 = arith.constant 0 : i32
    %c0_i32_0 = arith.constant 0 : i32
    %c0_i32_1 = arith.constant 0 : i32
    return %c0_i32, %c0_i32_0 : i32, i32
  }
  func.func @transform_7(%arg0: i32) -> (i32, i32) {
    %c0_i32 = arith.constant 0 : i32
    %c0_i32_0 = arith.constant 0 : i32
    %c0_i32_1 = arith.constant 0 : i32
    return %c0_i32, %c0_i32_0 : i32, i32
  }
}

</mosaic_0001>

<llo_original>
// kernel: conv_pre_net_forward.1
$region0: #{conv_pre_net_forward.1}
  #allocation0 [shape = 'u32[]', space=smem, size = 0x4, offset = 0x4, fixed_abs, tag = 'smem constant byte address 0x4 - core index']
  #allocation1 [shape = 'u32[144,128]{1,0:T(1,128)}', space=vmem, size = 0x12000, scoped, tag = 'internal scratch']
  #allocation2 [shape = 'f32[2,128]{1,0:T(2,128)}', space=vmem, size = 0x400, scoped, tag = 'scratch operand']
  %s0 = inlined_call_operand.vmem [shape: bf16[2,18,18,4], index: 0, kind: input, shape index: {}]
  %s1 = inlined_call_operand.vmem [shape: bf16[9,4,128], index: 1, kind: input, shape index: {}]
  %s2 = inlined_call_operand.vmem [shape: f32[1,128], index: 2, kind: input, shape index: {}]
  %s3 = inlined_call_operand.vmem [shape: f32[128,256], index: 3, kind: input, shape index: {}]
  %s4 = inlined_call_operand.vmem [shape: f32[1,256], index: 4, kind: input, shape index: {}]
  %s5 = inlined_call_operand.vmem [shape: f32[256,2], index: 5, kind: input, shape index: {}]
  %s6 = inlined_call_operand.vmem [shape: f32[1,2], index: 6, kind: input, shape index: {}]
  %s7 = inlined_call_operand.hbm [shape: f32[2,2], index: 7, kind: output, shape index: {}]
  %s8 = sld [smem:[#allocation0]]
  $region65: #{conv_pre_net_forward.1} parent=0
    _
  %s10 = ssub.s32 1, %s8
  %s11 = scalar_select 0, %s10, %s8
  $region1: #{conv_pre_net_forward.1} parent=0
    #allocation3 [shape = 'u8[1024]{0}', space=vmem, size = 0x400, scoped, tag = 'output window, operand 0, single buffered']
    #allocation4 [shape = 's32[2]{0}', space=sflag, size = 0x8, scoped, tag = 'scoped memory for conv_pre_net_forward.1']
    %12 = vsyncpa [#allocation4], 0
    loop: start=0, step=1, limit=4
    $region2: #{conv_pre_net_forward.1} parent=1 // loop_pre_header
      _
    $region3: #{conv_pre_net_forward.1} parent=1 // loop_header
      %s14 = sphi 0, %s18
      %p15 = scmp.ge.s32.totalorder %s14, 4
      %s24 = sphi 0, %s26
      %s27 = sphi 0, %s24
      %s28 = sphi 0, %s27
      %s44 = sphi 0, %s28
      %s48 = sphi 0, %s48
      %s50 = sphi 0, %s48
      %s51 = sphi 0, %s50
      %s65 = sphi 0, %s51
      %s69 = sphi 0, %s69
      %s71 = sphi 0, %s69
      %s72 = sphi 0, %s71
      %s86 = sphi 0, %s72
      %s90 = sphi 0, %s90
      %s92 = sphi 0, %s90
      %s93 = sphi 0, %s92
      %s107 = sphi 0, %s93
      %s111 = sphi 0, %s111
      %s113 = sphi 0, %s111
      %s114 = sphi 0, %s113
      %s128 = sphi 0, %s114
      %s132 = sphi 0, %s132
      %s134 = sphi 0, %s132
      %s135 = sphi 0, %s134
      %s149 = sphi 0, %s135
      %s153 = sphi 0, %s153
      %s155 = sphi 0, %s153
      %s156 = sphi 0, %s155
      %s170 = sphi 0, %s156
      %s174 = sphi 0, %s174
      %s176 = sphi 0, %s174
      %s177 = sphi 0, %s176
      %s191 = sphi 0, %s177
    $region4: #{conv_pre_net_forward.1} parent=1 // loop_header_branch
      %17 = sbr.rel (%p15) target = $region8
    $region5: #{conv_pre_net_forward.1} parent=1 // loop_body
      %s19 = ssub.s32 %s14, 1
      %s20 = ssub.s32 %s14, 2
      %s21 = sadd.s32 %s14, 1
      %s22 = ssub.s32 %s14, %s21
      %p23 = scmp.eq.s32.totalorder %s22, 0
      %s25 = sadd.s32 %s24, 1
      %s26 = scalar_select %p23, %s24, %s25
      %p29 = pneg %p23
      %p30 = scmp.eq.s32.totalorder %s14, 1
      %p31 = por %p29, %p30
      %p32 = scmp.ne.s32.totalorder %s24, %s27
      %p33 = scmp.eq.s32.totalorder %s14, 0
      %p34 = por %p32, %p33
      %p35 = scmp.ne.s32.totalorder %s24, %s27
      %p36 = scmp.eq.s32.totalorder %s19, 1
      %p37 = por %p35, %p36
      %p38 = scmp.ne.s32.totalorder %s27, %s28
      %p39 = scmp.eq.s32.totalorder %s19, 0
      %p40 = por %p38, %p39
      %p41 = scmp.ne.s32.totalorder %s27, %s28
      %p42 = scmp.eq.s32.totalorder %s20, 1
      %p43 = por %p41, %p42
      %p45 = scmp.ne.s32.totalorder %s28, %s44
      %p46 = scmp.eq.s32.totalorder %s20, 0
      %p47 = por %p45, %p46
      %s49 = sadd.s32 %s48, 1
      %p52 = scmp.eq.s32.totalorder %s14, 1
      %p53 = scmp.ne.s32.totalorder %s48, %s50
      %p54 = scmp.eq.s32.totalorder %s14, 0
      %p55 = por %p53, %p54
      %p56 = scmp.ne.s32.totalorder %s48, %s50
      %p57 = scmp.eq.s32.totalorder %s19, 1
      %p58 = por %p56, %p57
      %p59 = scmp.ne.s32.totalorder %s50, %s51
      %p60 = scmp.eq.s32.totalorder %s19, 0
      %p61 = por %p59, %p60
      %p62 = scmp.ne.s32.totalorder %s50, %s51
      %p63 = scmp.eq.s32.totalorder %s20, 1
      %p64 = por %p62, %p63
      %p66 = scmp.ne.s32.totalorder %s51, %s65
      %p67 = scmp.eq.s32.totalorder %s20, 0
      %p68 = por %p66, %p67
      %s70 = sadd.s32 %s69, 1
      %p73 = scmp.eq.s32.totalorder %s14, 1
      %p74 = scmp.ne.s32.totalorder %s69, %s71
      %p75 = scmp.eq.s32.totalorder %s14, 0
      %p76 = por %p74, %p75
      %p77 = scmp.ne.s32.totalorder %s69, %s71
      %p78 = scmp.eq.s32.totalorder %s19, 1
      %p79 = por %p77, %p78
      %p80 = scmp.ne.s32.totalorder %s71, %s72
      %p81 = scmp.eq.s32.totalorder %s19, 0
      %p82 = por %p80, %p81
      %p83 = scmp.ne.s32.totalorder %s71, %s72
      %p84 = scmp.eq.s32.totalorder %s20, 1
      %p85 = por %p83, %p84
      %p87 = scmp.ne.s32.totalorder %s72, %s86
      %p88 = scmp.eq.s32.totalorder %s20, 0
      %p89 = por %p87, %p88
      %s91 = sadd.s32 %s90, 1
      %p94 = scmp.eq.s32.totalorder %s14, 1
      %p95 = scmp.ne.s32.totalorder %s90, %s92
      %p96 = scmp.eq.s32.totalorder %s14, 0
      %p97 = por %p95, %p96
      %p98 = scmp.ne.s32.totalorder %s90, %s92
      %p99 = scmp.eq.s32.totalorder %s19, 1
      %p100 = por %p98, %p99
      %p101 = scmp.ne.s32.totalorder %s92, %s93
      %p102 = scmp.eq.s32.totalorder %s19, 0
      %p103 = por %p101, %p102
      %p104 = scmp.ne.s32.totalorder %s92, %s93
      %p105 = scmp.eq.s32.totalorder %s20, 1
      %p106 = por %p104, %p105
      %p108 = scmp.ne.s32.totalorder %s93, %s107
      %p109 = scmp.eq.s32.totalorder %s20, 0
      %p110 = por %p108, %p109
      %s112 = sadd.s32 %s111, 1
      %p115 = scmp.eq.s32.totalorder %s14, 1
      %p116 = scmp.ne.s32.totalorder %s111, %s113
      %p117 = scmp.eq.s32.totalorder %s14, 0
      %p118 = por %p116, %p117
      %p119 = scmp.ne.s32.totalorder %s111, %s113
      %p120 = scmp.eq.s32.totalorder %s19, 1
      %p121 = por %p119, %p120
      %p122 = scmp.ne.s32.totalorder %s113, %s114
      %p123 = scmp.eq.s32.totalorder %s19, 0
      %p124 = por %p122, %p123
      %p125 = scmp.ne.s32.totalorder %s113, %s114
      %p126 = scmp.eq.s32.totalorder %s20, 1
      %p127 = por %p125, %p126
      %p129 = scmp.ne.s32.totalorder %s114, %s128
      %p130 = scmp.eq.s32.totalorder %s20, 0
      %p131 = por %p129, %p130
      %s133 = sadd.s32 %s132, 1
      %p136 = scmp.eq.s32.totalorder %s14, 1
      %p137 = scmp.ne.s32.totalorder %s132, %s134
      %p138 = scmp.eq.s32.totalorder %s14, 0
      %p139 = por %p137, %p138
      %p140 = scmp.ne.s32.totalorder %s132, %s134
      %p141 = scmp.eq.s32.totalorder %s19, 1
      %p142 = por %p140, %p141
      %p143 = scmp.ne.s32.totalorder %s134, %s135
      %p144 = scmp.eq.s32.totalorder %s19, 0
      %p145 = por %p143, %p144
      %p146 = scmp.ne.s32.totalorder %s134, %s135
      %p147 = scmp.eq.s32.totalorder %s20, 1
      %p148 = por %p146, %p147
      %p150 = scmp.ne.s32.totalorder %s135, %s149
      %p151 = scmp.eq.s32.totalorder %s20, 0
      %p152 = por %p150, %p151
      %s154 = sadd.s32 %s153, 1
      %p157 = scmp.eq.s32.totalorder %s14, 1
      %p158 = scmp.ne.s32.totalorder %s153, %s155
      %p159 = scmp.eq.s32.totalorder %s14, 0
      %p160 = por %p158, %p159
      %p161 = scmp.ne.s32.totalorder %s153, %s155
      %p162 = scmp.eq.s32.totalorder %s19, 1
      %p163 = por %p161, %p162
      %p164 = scmp.ne.s32.totalorder %s155, %s156
      %p165 = scmp.eq.s32.totalorder %s19, 0
      %p166 = por %p164, %p165
      %p167 = scmp.ne.s32.totalorder %s155, %s156
      %p168 = scmp.eq.s32.totalorder %s20, 1
      %p169 = por %p167, %p168
      %p171 = scmp.ne.s32.totalorder %s156, %s170
      %p172 = scmp.eq.s32.totalorder %s20, 0
      %p173 = por %p171, %p172
      %s175 = sadd.s32 %s174, 1
      %p178 = scmp.eq.s32.totalorder %s14, 1
      %p179 = scmp.ne.s32.totalorder %s174, %s176
      %p180 = scmp.eq.s32.totalorder %s14, 0
      %p181 = por %p179, %p180
      %p182 = scmp.ne.s32.totalorder %s174, %s176
      %p183 = scmp.eq.s32.totalorder %s19, 1
      %p184 = por %p182, %p183
      %p185 = scmp.ne.s32.totalorder %s176, %s177
      %p186 = scmp.eq.s32.totalorder %s19, 0
      %p187 = por %p185, %p186
      %p188 = scmp.ne.s32.totalorder %s176, %s177
      %p189 = scmp.eq.s32.totalorder %s20, 1
      %p190 = por %p188, %p189
      %p192 = scmp.ne.s32.totalorder %s177, %s191
      %p193 = scmp.eq.s32.totalorder %s20, 0
      %p194 = por %p192, %p193
      %p195 = scmp.le.s32.totalorder 1, %s14
      %p196 = scmp.lt.s32.totalorder %s14, 3
      %p197 = pnand %p195, %p196
      %p198 = pneg %p197
      // Predicated region
      $region9: #{conv_pre_net_forward.1} parent=5 // pred_check
        _
      $region10: #{conv_pre_net_forward.1} parent=5 // pred_check_branch
        %200 = sbr.rel (%p197) target = $region12
      $region11: #{conv_pre_net_forward.1} parent=5 // pred_region
        %s201 = ssub.s32 %s14, 1
        // Predicated region
        $region13: #{conv_pre_net_forward.1} parent=11 // pred_check
          %p202 = pneg %p61
        $region14: #{conv_pre_net_forward.1} parent=11 // pred_check_branch
          %204 = sbr.rel (%p202) target = $region16
        $region15: #{conv_pre_net_forward.1} parent=11 // pred_region
          _
        $region16: #{conv_pre_net_forward.1} parent=11 // pred_fallthru
          _
        // Predicated region
        $region17: #{conv_pre_net_forward.1} parent=11 // pred_check
          %p205 = pneg %p82
        $region18: #{conv_pre_net_forward.1} parent=11 // pred_check_branch
          %207 = sbr.rel (%p205) target = $region20
        $region19: #{conv_pre_net_forward.1} parent=11 // pred_region
          _
        $region20: #{conv_pre_net_forward.1} parent=11 // pred_fallthru
          _
        // Predicated region
        $region21: #{conv_pre_net_forward.1} parent=11 // pred_check
          %p208 = pneg %p103
        $region22: #{conv_pre_net_forward.1} parent=11 // pred_check_branch
          %210 = sbr.rel (%p208) target = $region24
        $region23: #{conv_pre_net_forward.1} parent=11 // pred_region
          _
        $region24: #{conv_pre_net_forward.1} parent=11 // pred_fallthru
          _
        // Predicated region
        $region25: #{conv_pre_net_forward.1} parent=11 // pred_check
          %p211 = pneg %p124
        $region26: #{conv_pre_net_forward.1} parent=11 // pred_check_branch
          %213 = sbr.rel (%p211) target = $region28
        $region27: #{conv_pre_net_forward.1} parent=11 // pred_region
          _
        $region28: #{conv_pre_net_forward.1} parent=11 // pred_fallthru
          _
        // Predicated region
        $region29: #{conv_pre_net_forward.1} parent=11 // pred_check
          %p214 = pneg %p145
        $region30: #{conv_pre_net_forward.1} parent=11 // pred_check_branch
          %216 = sbr.rel (%p214) target = $region32
        $region31: #{conv_pre_net_forward.1} parent=11 // pred_region
          _
        $region32: #{conv_pre_net_forward.1} parent=11 // pred_fallthru
          _
        // Predicated region
        $region33: #{conv_pre_net_forward.1} parent=11 // pred_check
          %p217 = pneg %p166
        $region34: #{conv_pre_net_forward.1} parent=11 // pred_check_branch
          %219 = sbr.rel (%p217) target = $region36
        $region35: #{conv_pre_net_forward.1} parent=11 // pred_region
          _
        $region36: #{conv_pre_net_forward.1} parent=11 // pred_fallthru
          _
      $region12: #{conv_pre_net_forward.1} parent=5 // pred_fallthru
        _
      %p220 = scmp.lt.s32.totalorder %s14, 2
      // Predicated region
      $region37: #{conv_pre_net_forward.1} parent=5 // pred_check
        %p221 = pneg %p220
      $region38: #{conv_pre_net_forward.1} parent=5 // pred_check_branch
        %223 = sbr.rel (%p221) target = $region40
      $region39: #{conv_pre_net_forward.1} parent=5 // pred_region
        // Predicated region
        $region41: #{conv_pre_net_forward.1} parent=39 // pred_check
          %p224 = pneg %p34
        $region42: #{conv_pre_net_forward.1} parent=39 // pred_check_branch
          %226 = sbr.rel (%p224) target = $region44
        $region43: #{conv_pre_net_forward.1} parent=39 // pred_region
          %p227 = scmp.lt.s32.totalorder %s14, 1
          %s228 = scalar_select %p227, %s14, 1
          %s229 = smul.addr %s228, 54
          %s230 = smul.addr %s229, 4
          %s231 = scalar_lea.vmem %s0, %s230
        $region44: #{conv_pre_net_forward.1} parent=39 // pred_fallthru
          _
      $region40: #{conv_pre_net_forward.1} parent=5 // pred_fallthru
        _
      %p232 = scmp.le.s32.totalorder 1, %s14
      %p233 = scmp.lt.s32.totalorder %s14, 3
      %p234 = pnand %p232, %p233
      %p235 = pneg %p234
      // Predicated region
      $region45: #{conv_pre_net_forward.1} parent=5 // pred_check
        _
      $region46: #{conv_pre_net_forward.1} parent=5 // pred_check_branch
        %237 = sbr.rel (%p234) target = $region48
      $region47: #{conv_pre_net_forward.1} parent=5 // pred_region
        %s238 = ssub.s32 %s14, 1
        %p239 = scmp.lt.s32.totalorder %s19, 1
        %s240 = scalar_select %p239, %s19, 1
        %s241 = smul.addr %s240, 54
        %s242 = smul.addr %s241, 4
        %s243 = scalar_lea.vmem %s0, %s242
        %p244 = pneg %p40
        %p245 = pneg %p37
        %p246 = pneg %p61
        %p247 = pneg %p58
        %p248 = pneg %p82
        %p249 = pneg %p79
        %p250 = pneg %p103
        %p251 = pneg %p100
        %p252 = pneg %p124
        %p253 = pneg %p121
        %p254 = pneg %p145
        %p255 = pneg %p142
        %p256 = pneg %p166
        %p257 = pneg %p163
        %p258 = pneg %p187
        %p259 = pneg %p184
        %p260 = scmp.lt.s32.totalorder %s19, 1
        %s261 = scalar_select %p260, %s19, 1
        %s262 = smul.addr %s261, 54
        %s263 = smul.addr %s262, 4
        %s264 = scalar_lea.vmem %s0, %s263
        %v266 = vld [vmem:[%s264] sm:$0xf]
        %v267 = vld [vmem:[%s264 + $0x4] sm:$0xf]
        %v268 = vld [vmem:[%s264 + $0x8] sm:$0x1]
        %v269 = vld [vmem:[%s264 + $0xc] sm:$0xf]
        %v270 = vld [vmem:[%s264 + $0x10] sm:$0xf]
        %v271 = vld [vmem:[%s264 + $0x14] sm:$0x1]
        %v272 = vld [vmem:[%s264 + $0x18] sm:$0xf]
        %v273 = vld [vmem:[%s264 + $0x1c] sm:$0xf]
        %v274 = vld [vmem:[%s264 + $0x20] sm:$0x1]
        %v275 = vld [vmem:[%s264 + $0x24] sm:$0xf]
        %v276 = vld [vmem:[%s264 + $0x28] sm:$0xf]
        %v277 = vld [vmem:[%s264 + $0x2c] sm:$0x1]
        %v278 = vld [vmem:[%s264 + $0x30] sm:$0xf]
        %v279 = vld [vmem:[%s264 + $0x34] sm:$0xf]
        %v280 = vld [vmem:[%s264 + $0x38] sm:$0x1]
        %v281 = vld [vmem:[%s264 + $0x3c] sm:$0xf]
        %v282 = vld [vmem:[%s264 + $0x40] sm:$0xf]
        %v283 = vld [vmem:[%s264 + $0x44] sm:$0x1]
        %v284 = vld [vmem:[%s264 + $0x48] sm:$0xf]
        %v285 = vld [vmem:[%s264 + $0x4c] sm:$0xf]
        %v286 = vld [vmem:[%s264 + $0x50] sm:$0x1]
        %v287 = vld [vmem:[%s264 + $0x54] sm:$0xf]
        %v288 = vld [vmem:[%s264 + $0x58] sm:$0xf]
        %v289 = vld [vmem:[%s264 + $0x5c] sm:$0x1]
        %v290 = vld [vmem:[%s264 + $0x60] sm:$0xf]
        %v291 = vld [vmem:[%s264 + $0x64] sm:$0xf]
        %v292 = vld [vmem:[%s264 + $0x68] sm:$0x1]
        %v293 = vld [vmem:[%s264 + $0x6c] sm:$0xf]
        %v294 = vld [vmem:[%s264 + $0x70] sm:$0xf]
        %v295 = vld [vmem:[%s264 + $0x74] sm:$0x1]
        %v296 = vld [vmem:[%s264 + $0x78] sm:$0xf]
        %v297 = vld [vmem:[%s264 + $0x7c] sm:$0xf]
        %v298 = vld [vmem:[%s264 + $0x80] sm:$0x1]
        %v299 = vld [vmem:[%s264 + $0x84] sm:$0xf]
        %v300 = vld [vmem:[%s264 + $0x88] sm:$0xf]
        %v301 = vld [vmem:[%s264 + $0x8c] sm:$0x1]
        %v302 = vld [vmem:[%s264 + $0x90] sm:$0xf]
        %v303 = vld [vmem:[%s264 + $0x94] sm:$0xf]
        %v304 = vld [vmem:[%s264 + $0x98] sm:$0x1]
        %v305 = vld [vmem:[%s264 + $0x9c] sm:$0xf]
        %v306 = vld [vmem:[%s264 + $0xa0] sm:$0xf]
        %v307 = vld [vmem:[%s264 + $0xa4] sm:$0x1]
        %v308 = vld [vmem:[%s264 + $0xa8] sm:$0xf]
        %v309 = vld [vmem:[%s264 + $0xac] sm:$0xf]
        %v310 = vld [vmem:[%s264 + $0xb0] sm:$0x1]
        %v311 = vld [vmem:[%s264 + $0xb4] sm:$0xf]
        %v312 = vld [vmem:[%s264 + $0xb8] sm:$0xf]
        %v313 = vld [vmem:[%s264 + $0xbc] sm:$0x1]
        %v314 = vld [vmem:[%s264 + $0xc0] sm:$0xf]
        %v315 = vld [vmem:[%s264 + $0xc4] sm:$0xf]
        %v316 = vld [vmem:[%s264 + $0xc8] sm:$0x1]
        %v317 = vld [vmem:[%s264 + $0xcc] sm:$0xf]
        %v318 = vld [vmem:[%s264 + $0xd0] sm:$0xf]
        %v319 = vld [vmem:[%s264 + $0xd4] sm:$0x1]
        %v320 = vld [vmem:[%s1] sm:$0x3]
        %vm321 = vsmask.f32 3328
        %vm322 = vsmask.f32 7440
        %vm323 = vmor %vm321, %vm322
        %v325 = vshrl.u32 %v266, 16
        %v327 = vrot.slane %v325, 4
        %v328 = vshll.u32 %v266, 16
        %v330 = vrot.slane %v328, 5
        %v331 = vor.u32 %v327, %v330
        %v332 = vrot.slane %v331, 4
        %v334 = vshll.u32 %v267, 16
        %v336 = vrot.slane %v334, 5
        %v337 = vsel %vm323, %v332, %v336
        %v338 = vshrl.u32 %v267, 16
        %v340 = vrot.slane %v338, 4
        %v341 = vor.u32 %v340, %v336
        %v342 = vrot.slane %v341, 4
        %v344 = vshll.u32 %v268, 16
        %v346 = vrot.slane %v344, 5
        %v347 = vsel %vm323, %v342, %v346
        %v349 = vshrl.u32 %v269, 16
        %v351 = vrot.slane %v349, 4
        %v352 = vshll.u32 %v269, 16
        %v354 = vrot.slane %v352, 5
        %v355 = vor.u32 %v351, %v354
        %v356 = vrot.slane %v355, 4
        %v358 = vshll.u32 %v270, 16
        %v360 = vrot.slane %v358, 5
        %v361 = vsel %vm323, %v356, %v360
        %v362 = vshrl.u32 %v270, 16
        %v364 = vrot.slane %v362, 4
        %v365 = vor.u32 %v364, %v360
        %v366 = vrot.slane %v365, 4
        %v368 = vshll.u32 %v271, 16
        %v370 = vrot.slane %v368, 5
        %v371 = vsel %vm323, %v366, %v370
        %v373 = vshrl.u32 %v272, 16
        %v375 = vrot.slane %v373, 4
        %v376 = vshll.u32 %v272, 16
        %v378 = vrot.slane %v376, 5
        %v379 = vor.u32 %v375, %v378
        %v380 = vrot.slane %v379, 4
        %v382 = vshll.u32 %v273, 16
        %v384 = vrot.slane %v382, 5
        %v385 = vsel %vm323, %v380, %v384
        %v386 = vshrl.u32 %v273, 16
        %v388 = vrot.slane %v386, 4
        %v389 = vor.u32 %v388, %v384
        %v390 = vrot.slane %v389, 4
        %v392 = vshll.u32 %v274, 16
        %v394 = vrot.slane %v392, 5
        %v395 = vsel %vm323, %v390, %v394
        %v397 = vshrl.u32 %v275, 16
        %v399 = vrot.slane %v397, 4
        %v400 = vshll.u32 %v275, 16
        %v402 = vrot.slane %v400, 5
        %v403 = vor.u32 %v399, %v402
        %v404 = vrot.slane %v403, 4
        %v406 = vshll.u32 %v276, 16
        %v408 = vrot.slane %v406, 5
        %v409 = vsel %vm323, %v404, %v408
        %v410 = vshrl.u32 %v276, 16
        %v412 = vrot.slane %v410, 4
        %v413 = vor.u32 %v412, %v408
        %v414 = vrot.slane %v413, 4
        %v416 = vshll.u32 %v277, 16
        %v418 = vrot.slane %v416, 5
        %v419 = vsel %vm323, %v414, %v418
        %v421 = vshrl.u32 %v278, 16
        %v423 = vrot.slane %v421, 4
        %v424 = vshll.u32 %v278, 16
        %v426 = vrot.slane %v424, 5
        %v427 = vor.u32 %v423, %v426
        %v428 = vrot.slane %v427, 4
        %v430 = vshll.u32 %v279, 16
        %v432 = vrot.slane %v430, 5
        %v433 = vsel %vm323, %v428, %v432
        %v434 = vshrl.u32 %v279, 16
        %v436 = vrot.slane %v434, 4
        %v437 = vor.u32 %v436, %v432
        %v438 = vrot.slane %v437, 4
        %v440 = vshll.u32 %v280, 16
        %v442 = vrot.slane %v440, 5
        %v443 = vsel %vm323, %v438, %v442
        %v445 = vshrl.u32 %v281, 16
        %v447 = vrot.slane %v445, 4
        %v448 = vshll.u32 %v281, 16
        %v450 = vrot.slane %v448, 5
        %v451 = vor.u32 %v447, %v450
        %v452 = vrot.slane %v451, 4
        %v454 = vshll.u32 %v282, 16
        %v456 = vrot.slane %v454, 5
        %v457 = vsel %vm323, %v452, %v456
        %v458 = vshrl.u32 %v282, 16
        %v460 = vrot.slane %v458, 4
        %v461 = vor.u32 %v460, %v456
        %v462 = vrot.slane %v461, 4
        %v464 = vshll.u32 %v283, 16
        %v466 = vrot.slane %v464, 5
        %v467 = vsel %vm323, %v462, %v466
        %v469 = vshrl.u32 %v284, 16
        %v471 = vrot.slane %v469, 4
        %v472 = vshll.u32 %v284, 16
        %v474 = vrot.slane %v472, 5
        %v475 = vor.u32 %v471, %v474
        %v476 = vrot.slane %v475, 4
        %v478 = vshll.u32 %v285, 16
        %v480 = vrot.slane %v478, 5
        %v481 = vsel %vm323, %v476, %v480
        %v482 = vshrl.u32 %v285, 16
        %v484 = vrot.slane %v482, 4
        %v485 = vor.u32 %v484, %v480
        %v486 = vrot.slane %v485, 4
        %v488 = vshll.u32 %v286, 16
        %v490 = vrot.slane %v488, 5
        %v491 = vsel %vm323, %v486, %v490
        %v493 = vshrl.u32 %v287, 16
        %v495 = vrot.slane %v493, 4
        %v496 = vshll.u32 %v287, 16
        %v498 = vrot.slane %v496, 5
        %v499 = vor.u32 %v495, %v498
        %v500 = vrot.slane %v499, 4
        %v502 = vshll.u32 %v288, 16
        %v504 = vrot.slane %v502, 5
        %v505 = vsel %vm323, %v500, %v504
        %v506 = vshrl.u32 %v288, 16
        %v508 = vrot.slane %v506, 4
        %v509 = vor.u32 %v508, %v504
        %v510 = vrot.slane %v509, 4
        %v512 = vshll.u32 %v289, 16
        %v514 = vrot.slane %v512, 5
        %v515 = vsel %vm323, %v510, %v514
        %v517 = vshrl.u32 %v290, 16
        %v519 = vrot.slane %v517, 4
        %v520 = vshll.u32 %v290, 16
        %v522 = vrot.slane %v520, 5
        %v523 = vor.u32 %v519, %v522
        %v524 = vrot.slane %v523, 4
        %v526 = vshll.u32 %v291, 16
        %v528 = vrot.slane %v526, 5
        %v529 = vsel %vm323, %v524, %v528
        %v530 = vshrl.u32 %v291, 16
        %v532 = vrot.slane %v530, 4
        %v533 = vor.u32 %v532, %v528
        %v534 = vrot.slane %v533, 4
        %v536 = vshll.u32 %v292, 16
        %v538 = vrot.slane %v536, 5
        %v539 = vsel %vm323, %v534, %v538
        %v541 = vshrl.u32 %v293, 16
        %v543 = vrot.slane %v541, 4
        %v544 = vshll.u32 %v293, 16
        %v546 = vrot.slane %v544, 5
        %v547 = vor.u32 %v543, %v546
        %v548 = vrot.slane %v547, 4
        %v550 = vshll.u32 %v294, 16
        %v552 = vrot.slane %v550, 5
        %v553 = vsel %vm323, %v548, %v552
        %v554 = vshrl.u32 %v294, 16
        %v556 = vrot.slane %v554, 4
        %v557 = vor.u32 %v556, %v552
        %v558 = vrot.slane %v557, 4
        %v560 = vshll.u32 %v295, 16
        %v562 = vrot.slane %v560, 5
        %v563 = vsel %vm323, %v558, %v562
        %v565 = vshrl.u32 %v296, 16
        %v567 = vrot.slane %v565, 4
        %v568 = vshll.u32 %v296, 16
        %v570 = vrot.slane %v568, 5
        %v571 = vor.u32 %v567, %v570
        %v572 = vrot.slane %v571, 4
        %v574 = vshll.u32 %v297, 16
        %v576 = vrot.slane %v574, 5
        %v577 = vsel %vm323, %v572, %v576
        %v578 = vshrl.u32 %v297, 16
        %v580 = vrot.slane %v578, 4
        %v581 = vor.u32 %v580, %v576
        %v582 = vrot.slane %v581, 4
        %v584 = vshll.u32 %v298, 16
        %v586 = vrot.slane %v584, 5
        %v587 = vsel %vm323, %v582, %v586
        %v589 = vshrl.u32 %v299, 16
        %v591 = vrot.slane %v589, 4
        %v592 = vshll.u32 %v299, 16
        %v594 = vrot.slane %v592, 5
        %v595 = vor.u32 %v591, %v594
        %v596 = vrot.slane %v595, 4
        %v598 = vshll.u32 %v300, 16
        %v600 = vrot.slane %v598, 5
        %v601 = vsel %vm323, %v596, %v600
        %v602 = vshrl.u32 %v300, 16
        %v604 = vrot.slane %v602, 4
        %v605 = vor.u32 %v604, %v600
        %v606 = vrot.slane %v605, 4
        %v608 = vshll.u32 %v301, 16
        %v610 = vrot.slane %v608, 5
        %v611 = vsel %vm323, %v606, %v610
        %v613 = vshrl.u32 %v302, 16
        %v615 = vrot.slane %v613, 4
        %v616 = vshll.u32 %v302, 16
        %v618 = vrot.slane %v616, 5
        %v619 = vor.u32 %v615, %v618
        %v620 = vrot.slane %v619, 4
        %v622 = vshll.u32 %v303, 16
        %v624 = vrot.slane %v622, 5
        %v625 = vsel %vm323, %v620, %v624
        %v626 = vshrl.u32 %v303, 16
        %v628 = vrot.slane %v626, 4
        %v629 = vor.u32 %v628, %v624
        %v630 = vrot.slane %v629, 4
        %v632 = vshll.u32 %v304, 16
        %v634 = vrot.slane %v632, 5
        %v635 = vsel %vm323, %v630, %v634
        %v637 = vshrl.u32 %v305, 16
        %v639 = vrot.slane %v637, 4
        %v640 = vshll.u32 %v305, 16
        %v642 = vrot.slane %v640, 5
        %v643 = vor.u32 %v639, %v642
        %v644 = vrot.slane %v643, 4
        %v646 = vshll.u32 %v306, 16
        %v648 = vrot.slane %v646, 5
        %v649 = vsel %vm323, %v644, %v648
        %v650 = vshrl.u32 %v306, 16
        %v652 = vrot.slane %v650, 4
        %v653 = vor.u32 %v652, %v648
        %v654 = vrot.slane %v653, 4
        %v656 = vshll.u32 %v307, 16
        %v658 = vrot.slane %v656, 5
        %v659 = vsel %vm323, %v654, %v658
        %v661 = vshrl.u32 %v308, 16
        %v663 = vrot.slane %v661, 4
        %v664 = vshll.u32 %v308, 16
        %v666 = vrot.slane %v664, 5
        %v667 = vor.u32 %v663, %v666
        %v668 = vrot.slane %v667, 4
        %v670 = vshll.u32 %v309, 16
        %v672 = vrot.slane %v670, 5
        %v673 = vsel %vm323, %v668, %v672
        %v674 = vshrl.u32 %v309, 16
        %v676 = vrot.slane %v674, 4
        %v677 = vor.u32 %v676, %v672
        %v678 = vrot.slane %v677, 4
        %v680 = vshll.u32 %v310, 16
        %v682 = vrot.slane %v680, 5
        %v683 = vsel %vm323, %v678, %v682
        %v685 = vshrl.u32 %v311, 16
        %v687 = vrot.slane %v685, 4
        %v688 = vshll.u32 %v311, 16
        %v690 = vrot.slane %v688, 5
        %v691 = vor.u32 %v687, %v690
        %v692 = vrot.slane %v691, 4
        %v694 = vshll.u32 %v312, 16
        %v696 = vrot.slane %v694, 5
        %v697 = vsel %vm323, %v692, %v696
        %v698 = vshrl.u32 %v312, 16
        %v700 = vrot.slane %v698, 4
        %v701 = vor.u32 %v700, %v696
        %v702 = vrot.slane %v701, 4
        %v704 = vshll.u32 %v313, 16
        %v706 = vrot.slane %v704, 5
        %v707 = vsel %vm323, %v702, %v706
        %s708 = scalar_lea.vmem %s1, 2
        %v709 = vld [vmem:[%s708] sm:$0x3]
        %v710 = vunpack.c.l.b16 %v337
        %v711 = vunpack.c.l.b16 %v347
        %v712 = vunpack.c.l.b16 %v361
        %v713 = vunpack.c.l.b16 %v371
        %v714 = vunpack.c.l.b16 %v385
        %v715 = vunpack.c.l.b16 %v395
        %v716 = vunpack.c.l.b16 %v409
        %v717 = vunpack.c.l.b16 %v419
        %v718 = vunpack.c.l.b16 %v433
        %v719 = vunpack.c.l.b16 %v443
        %v720 = vunpack.c.l.b16 %v457
        %v721 = vunpack.c.l.b16 %v467
        %v722 = vunpack.c.l.b16 %v481
        %v723 = vunpack.c.l.b16 %v491
        %v724 = vunpack.c.l.b16 %v505
        %v725 = vunpack.c.l.b16 %v515
        %v726 = vunpack.c.l.b16 %v529
        %v727 = vunpack.c.l.b16 %v539
        %v728 = vunpack.c.l.b16 %v553
        %v729 = vunpack.c.l.b16 %v563
        %v730 = vunpack.c.l.b16 %v577
        %v731 = vunpack.c.l.b16 %v587
        %v732 = vunpack.c.l.b16 %v601
        %v733 = vunpack.c.l.b16 %v611
        %v734 = vunpack.c.l.b16 %v625
        %v735 = vunpack.c.l.b16 %v635
        %v736 = vunpack.c.l.b16 %v649
        %v737 = vunpack.c.l.b16 %v659
        %v738 = vunpack.c.l.b16 %v673
        %v739 = vunpack.c.l.b16 %v683
        %v740 = vunpack.c.l.b16 %v697
        %v741 = vunpack.c.l.b16 %v707
        %v742 = vpack.c.b16 %v711, %v710
        %v743 = vpack.c.b16 %v713, %v712
        %v744 = vpack.c.b16 %v715, %v714
        %v745 = vpack.c.b16 %v717, %v716
        %v746 = vpack.c.b16 %v719, %v718
        %v747 = vpack.c.b16 %v721, %v720
        %v748 = vpack.c.b16 %v723, %v722
        %v749 = vpack.c.b16 %v725, %v724
        %v750 = vpack.c.b16 %v727, %v726
        %v751 = vpack.c.b16 %v729, %v728
        %v752 = vpack.c.b16 %v731, %v730
        %v753 = vpack.c.b16 %v733, %v732
        %v754 = vpack.c.b16 %v735, %v734
        %v755 = vpack.c.b16 %v737, %v736
        %v756 = vpack.c.b16 %v739, %v738
        %v757 = vpack.c.b16 %v741, %v740
        %vm758 = vcmask 31744
        %v760 = vsel %vm758, %v742, 0
        %v763 = vsel %vm758, %v743, 0
        %v766 = vsel %vm758, %v744, 0
        %v769 = vsel %vm758, %v745, 0
        %v772 = vsel %vm758, %v746, 0
        %v775 = vsel %vm758, %v747, 0
        %v778 = vsel %vm758, %v748, 0
        %v781 = vsel %vm758, %v749, 0
        %v784 = vsel %vm758, %v750, 0
        %v787 = vsel %vm758, %v751, 0
        %v790 = vsel %vm758, %v752, 0
        %v793 = vsel %vm758, %v753, 0
        %v796 = vsel %vm758, %v754, 0
        %v799 = vsel %vm758, %v755, 0
        %v802 = vsel %vm758, %v756, 0
        %v805 = vsel %vm758, %v757, 0
        %vm807 = vcmask 1041408
        %v809 = vsel %vm807, %v709, 0
        %811 = vmatprep.subr.bf16.mxu0 0
        %812 = vmatpush1.bf16.msra.mxu0 %v809
        %813 = vmatprep.subr.bf16.mxu0 0
        %814 = vmatpush1.bf16.msra.mxu0 0
        %815 = vmatprep.subr.bf16.mxu0 0
        %816 = vmatpush1.bf16.msra.mxu0 0
        %817 = vmatprep.subr.bf16.mxu0 0
        %818 = vmatpush1.bf16.msra.mxu0 0
        %819 = vmatprep.subr.bf16.mxu0 0
        %820 = vmatpush1.bf16.msra.mxu0 0
        %821 = vmatprep.subr.bf16.mxu0 0
        %822 = vmatpush1.bf16.msra.mxu0 0
        %823 = vmatprep.subr.bf16.mxu0 0
        %824 = vmatpush1.bf16.msra.mxu0 0
        %825 = vmatprep.subr.bf16.mxu0 0
        %826 = vmatpush1.bf16.msra.mxu0 0
        %827 = vmatprep.subr.bf16.mxu0 0
        %828 = vmatpush1.bf16.msra.mxu0 0
        %829 = vmatprep.subr.bf16.mxu0 0
        %830 = vmatpush1.bf16.msra.mxu0 0
        %831 = vmatprep.subr.bf16.mxu0 0
        %832 = vmatpush1.bf16.msra.mxu0 0
        %833 = vmatprep.subr.bf16.mxu0 0
        %834 = vmatpush1.bf16.msra.mxu0 0
        %835 = vmatprep.subr.bf16.mxu0 0
        %836 = vmatpush1.bf16.msra.mxu0 0
        %837 = vmatprep.subr.bf16.mxu0 0
        %838 = vmatpush1.bf16.msra.mxu0 0
        %839 = vmatprep.subr.bf16.mxu0 0
        %840 = vmatpush1.bf16.msra.mxu0 0
        %841 = vmatprep.subr.bf16.mxu0 0
        %842 = vmatpush1.bf16.msra.mxu0 0
        %843 = vmatprep.mubr.bf16.mxu0 0
        %844 = vmatmul.mubr.bf16.gmra.mrb[0].mxu0 %v760
        %v845 = vpop.f32.mrb[0].mxu0
        %v846 = vadd.f32 0.0, %v845
        %v847 = vpop.f32.mrb[0].mxu0
        %v848 = vpop.f32.mrb[0].mxu0
        %v849 = vadd.f32 0.0, %v848
        %v850 = vpop.f32.mrb[0].mxu0
        %851 = vmatprep.mubr.bf16.mxu0 0
        %852 = vmatmul.mubr.bf16.gmra.mrb[0].mxu0 %v763
        %v853 = vpop.f32.mrb[0].mxu0
        %v854 = vadd.f32 0.0, %v853
        %v855 = vpop.f32.mrb[0].mxu0
        %v856 = vpop.f32.mrb[0].mxu0
        %v857 = vadd.f32 0.0, %v856
        %v858 = vpop.f32.mrb[0].mxu0
        %859 = vmatprep.mubr.bf16.mxu0 0
        %860 = vmatmul.mubr.bf16.gmra.mrb[0].mxu0 %v766
        %v861 = vpop.f32.mrb[0].mxu0
        %v862 = vadd.f32 0.0, %v861
        %v863 = vpop.f32.mrb[0].mxu0
        %v864 = vpop.f32.mrb[0].mxu0
        %v865 = vadd.f32 0.0, %v864
        %v866 = vpop.f32.mrb[0].mxu0
        %867 = vmatprep.mubr.bf16.mxu0 0
        %868 = vmatmul.mubr.bf16.gmra.mrb[0].mxu0 %v769
        %v869 = vpop.f32.mrb[0].mxu0
        %v870 = vadd.f32 0.0, %v869
        %v871 = vpop.f32.mrb[0].mxu0
        %v872 = vpop.f32.mrb[0].mxu0
        %v873 = vadd.f32 0.0, %v872
        %v874 = vpop.f32.mrb[0].mxu0
        %875 = vmatprep.mubr.bf16.mxu0 0
        %876 = vmatmul.mubr.bf16.gmra.mrb[0].mxu0 %v772
        %v877 = vpop.f32.mrb[0].mxu0
        %v878 = vadd.f32 0.0, %v877
        %v879 = vpop.f32.mrb[0].mxu0
        %v880 = vpop.f32.mrb[0].mxu0
        %v881 = vadd.f32 0.0, %v880
        %v882 = vpop.f32.mrb[0].mxu0
        %883 = vmatprep.mubr.bf16.mxu0 0
        %884 = vmatmul.mubr.bf16.gmra.mrb[0].mxu0 %v775
        %v885 = vpop.f32.mrb[0].mxu0
        %v886 = vadd.f32 0.0, %v885
        %v887 = vpop.f32.mrb[0].mxu0
        %v888 = vpop.f32.mrb[0].mxu0
        %v889 = vadd.f32 0.0, %v888
        %v890 = vpop.f32.mrb[0].mxu0
        %891 = vmatprep.mubr.bf16.mxu0 0
        %892 = vmatmul.mubr.bf16.gmra.mrb[0].mxu0 %v778
        %v893 = vpop.f32.mrb[0].mxu0
        %v894 = vadd.f32 0.0, %v893
        %v895 = vpop.f32.mrb[0].mxu0
        %v896 = vpop.f32.mrb[0].mxu0
        %v897 = vadd.f32 0.0, %v896
        %v898 = vpop.f32.mrb[0].mxu0
        %899 = vmatprep.mubr.bf16.mxu0 0
        %900 = vmatmul.mubr.bf16.gmra.mrb[0].mxu0 %v781
        %v901 = vpop.f32.mrb[0].mxu0
        %v902 = vadd.f32 0.0, %v901
        %v903 = vpop.f32.mrb[0].mxu0
        %v904 = vpop.f32.mrb[0].mxu0
        %v905 = vadd.f32 0.0, %v904
        %v906 = vpop.f32.mrb[0].mxu0
        %907 = vmatprep.mubr.bf16.mxu0 0
        %908 = vmatmul.mubr.bf16.gmra.mrb[0].mxu0 %v784
        %v909 = vpop.f32.mrb[0].mxu0
        %v910 = vadd.f32 0.0, %v909
        %v911 = vpop.f32.mrb[0].mxu0
        %v912 = vpop.f32.mrb[0].mxu0
        %v913 = vadd.f32 0.0, %v912
        %v914 = vpop.f32.mrb[0].mxu0
        %915 = vmatprep.mubr.bf16.mxu0 0
        %916 = vmatmul.mubr.bf16.gmra.mrb[0].mxu0 %v787
        %v917 = vpop.f32.mrb[0].mxu0
        %v918 = vadd.f32 0.0, %v917
        %v919 = vpop.f32.mrb[0].mxu0
        %v920 = vpop.f32.mrb[0].mxu0
        %v921 = vadd.f32 0.0, %v920
        %v922 = vpop.f32.mrb[0].mxu0
        %923 = vmatprep.mubr.bf16.mxu0 0
        %924 = vmatmul.mubr.bf16.gmra.mrb[0].mxu0 %v790
        %v925 = vpop.f32.mrb[0].mxu0
        %v926 = vadd.f32 0.0, %v925
        %v927 = vpop.f32.mrb[0].mxu0
        %v928 = vpop.f32.mrb[0].mxu0
        %v929 = vadd.f32 0.0, %v928
        %v930 = vpop.f32.mrb[0].mxu0
        %931 = vmatprep.mubr.bf16.mxu0 0
        %932 = vmatmul.mubr.bf16.gmra.mrb[0].mxu0 %v793
        %v933 = vpop.f32.mrb[0].mxu0
        %v934 = vadd.f32 0.0, %v933
        %v935 = vpop.f32.mrb[0].mxu0
        %v936 = vpop.f32.mrb[0].mxu0
        %v937 = vadd.f32 0.0, %v936
        %v938 = vpop.f32.mrb[0].mxu0
        %939 = vmatprep.mubr.bf16.mxu0 0
        %940 = vmatmul.mubr.bf16.gmra.mrb[0].mxu0 %v796
        %v941 = vpop.f32.mrb[0].mxu0
        %v942 = vadd.f32 0.0, %v941
        %v943 = vpop.f32.mrb[0].mxu0
        %v944 = vpop.f32.mrb[0].mxu0
        %v945 = vadd.f32 0.0, %v944
        %v946 = vpop.f32.mrb[0].mxu0
        %947 = vmatprep.mubr.bf16.mxu0 0
        %948 = vmatmul.mubr.bf16.gmra.mrb[0].mxu0 %v799
        %v949 = vpop.f32.mrb[0].mxu0
        %v950 = vadd.f32 0.0, %v949
        %v951 = vpop.f32.mrb[0].mxu0
        %v952 = vpop.f32.mrb[0].mxu0
        %v953 = vadd.f32 0.0, %v952
        %v954 = vpop.f32.mrb[0].mxu0
        %955 = vmatprep.mubr.bf16.mxu0 0
        %956 = vmatmul.mubr.bf16.gmra.mrb[0].mxu0 %v802
        %v957 = vpop.f32.mrb[0].mxu0
        %v958 = vadd.f32 0.0, %v957
        %v959 = vpop.f32.mrb[0].mxu0
        %v960 = vpop.f32.mrb[0].mxu0
        %v961 = vadd.f32 0.0, %v960
        %v962 = vpop.f32.mrb[0].mxu0
        %963 = vmatprep.mubr.bf16.mxu0 0
        %964 = vmatmul.mubr.bf16.gmra.mrb[0].mxu0 %v805
        %v965 = vpop.f32.mrb[0].mxu0
        %v966 = vadd.f32 0.0, %v965
        %v967 = vpop.f32.mrb[0].mxu0
        %v968 = vpop.f32.mrb[0].mxu0
        %v969 = vadd.f32 0.0, %v968
        %v970 = vpop.f32.mrb[0].mxu0
        %971 = vdwg.mxu0
        %v1004 = vunpack.c.l.b16 %v266
        %v1005 = vunpack.c.l.b16 %v267
        %v1006 = vunpack.c.l.b16 %v269
        %v1007 = vunpack.c.l.b16 %v270
        %v1008 = vunpack.c.l.b16 %v272
        %v1009 = vunpack.c.l.b16 %v273
        %v1010 = vunpack.c.l.b16 %v275
        %v1011 = vunpack.c.l.b16 %v276
        %v1012 = vunpack.c.l.b16 %v278
        %v1013 = vunpack.c.l.b16 %v279
        %v1014 = vunpack.c.l.b16 %v281
        %v1015 = vunpack.c.l.b16 %v282
        %v1016 = vunpack.c.l.b16 %v284
        %v1017 = vunpack.c.l.b16 %v285
        %v1018 = vunpack.c.l.b16 %v287
        %v1019 = vunpack.c.l.b16 %v288
        %v1020 = vunpack.c.l.b16 %v290
        %v1021 = vunpack.c.l.b16 %v291
        %v1022 = vunpack.c.l.b16 %v293
        %v1023 = vunpack.c.l.b16 %v294
        %v1024 = vunpack.c.l.b16 %v296
        %v1025 = vunpack.c.l.b16 %v297
        %v1026 = vunpack.c.l.b16 %v299
        %v1027 = vunpack.c.l.b16 %v300
        %v1028 = vunpack.c.l.b16 %v302
        %v1029 = vunpack.c.l.b16 %v303
        %v1030 = vunpack.c.l.b16 %v305
        %v1031 = vunpack.c.l.b16 %v306
        %v1032 = vunpack.c.l.b16 %v308
        %v1033 = vunpack.c.l.b16 %v309
        %v1034 = vunpack.c.l.b16 %v311
        %v1035 = vunpack.c.l.b16 %v312
        %v1036 = vpack.c.b16 %v1005, %v1004
        %v1037 = vpack.c.b16 %v1007, %v1006
        %v1038 = vpack.c.b16 %v1009, %v1008
        %v1039 = vpack.c.b16 %v1011, %v1010
        %v1040 = vpack.c.b16 %v1013, %v1012
        %v1041 = vpack.c.b16 %v1015, %v1014
        %v1042 = vpack.c.b16 %v1017, %v1016
        %v1043 = vpack.c.b16 %v1019, %v1018
        %v1044 = vpack.c.b16 %v1021, %v1020
        %v1045 = vpack.c.b16 %v1023, %v1022
        %v1046 = vpack.c.b16 %v1025, %v1024
        %v1047 = vpack.c.b16 %v1027, %v1026
        %v1048 = vpack.c.b16 %v1029, %v1028
        %v1049 = vpack.c.b16 %v1031, %v1030
        %v1050 = vpack.c.b16 %v1033, %v1032
        %v1051 = vpack.c.b16 %v1035, %v1034
        %v1053 = vsel %vm758, %v1036, 0
        %v1056 = vsel %vm758, %v1037, 0
        %v1059 = vsel %vm758, %v1038, 0
        %v1062 = vsel %vm758, %v1039, 0
        %v1065 = vsel %vm758, %v1040, 0
        %v1068 = vsel %vm758, %v1041, 0
        %v1071 = vsel %vm758, %v1042, 0
        %v1074 = vsel %vm758, %v1043, 0
        %v1077 = vsel %vm758, %v1044, 0
        %v1080 = vsel %vm758, %v1045, 0
        %v1083 = vsel %vm758, %v1046, 0
        %v1086 = vsel %vm758, %v1047, 0
        %v1089 = vsel %vm758, %v1048, 0
        %v1092 = vsel %vm758, %v1049, 0
        %v1095 = vsel %vm758, %v1050, 0
        %v1098 = vsel %vm758, %v1051, 0
        %v1101 = vsel %vm807, %v320, 0
        %1103 = vmatprep.subr.bf16.mxu0 0
        %1104 = vmatpush1.bf16.msra.mxu0 %v1101
        %1105 = vmatprep.subr.bf16.mxu0 0
        %1106 = vmatpush1.bf16.msra.mxu0 0
        %1107 = vmatprep.subr.bf16.mxu0 0
        %1108 = vmatpush1.bf16.msra.mxu0 0
        %1109 = vmatprep.subr.bf16.mxu0 0
        %1110 = vmatpush1.bf16.msra.mxu0 0
        %1111 = vmatprep.subr.bf16.mxu0 0
        %1112 = vmatpush1.bf16.msra.mxu0 0
        %1113 = vmatprep.subr.bf16.mxu0 0
        %1114 = vmatpush1.bf16.msra.mxu0 0
        %1115 = vmatprep.subr.bf16.mxu0 0
        %1116 = vmatpush1.bf16.msra.mxu0 0
        %1117 = vmatprep.subr.bf16.mxu0 0
        %1118 = vmatpush1.bf16.msra.mxu0 0
        %1119 = vmatprep.subr.bf16.mxu0 0
        %1120 = vmatpush1.bf16.msra.mxu0 0
        %1121 = vmatprep.subr.bf16.mxu0 0
        %1122 = vmatpush1.bf16.msra.mxu0 0
        %1123 = vmatprep.subr.bf16.mxu0 0
        %1124 = vmatpush1.bf16.msra.mxu0 0
        %1125 = vmatprep.subr.bf16.mxu0 0
        %1126 = vmatpush1.bf16.msra.mxu0 0
        %1127 = vmatprep.subr.bf16.mxu0 0
        %1128 = vmatpush1.bf16.msra.mxu0 0
        %1129 = vmatprep.subr.bf16.mxu0 0
        %1130 = vmatpush1.bf16.msra.mxu0 0
        %1131 = vmatprep.subr.bf16.mxu0 0
        %1132 = vmatpush1.bf16.msra.mxu0 0
        %1133 = vmatprep.subr.bf16.mxu0 0
        %1134 = vmatpush1.bf16.msra.mxu0 0
        %1135 = vmatprep.mubr.bf16.mxu0 0
        %1136 = vmatmul.mubr.bf16.gmra.mrb[0].mxu0 %v1053
        %v1137 = vpop.f32.mrb[0].mxu0
        %v1138 = vadd.f32 %v846, %v1137
        %v1139 = vpop.f32.mrb[0].mxu0
        %v1140 = vpop.f32.mrb[0].mxu0
        %v1141 = vadd.f32 %v849, %v1140
        %v1142 = vpop.f32.mrb[0].mxu0
        %1143 = vmatprep.mubr.bf16.mxu0 0
        %1144 = vmatmul.mubr.bf16.gmra.mrb[0].mxu0 %v1056
        %v1145 = vpop.f32.mrb[0].mxu0
        %v1146 = vadd.f32 %v854, %v1145
        %v1147 = vpop.f32.mrb[0].mxu0
        %v1148 = vpop.f32.mrb[0].mxu0
        %v1149 = vadd.f32 %v857, %v1148
        %v1150 = vpop.f32.mrb[0].mxu0
        %1151 = vmatprep.mubr.bf16.mxu0 0
        %1152 = vmatmul.mubr.bf16.gmra.mrb[0].mxu0 %v1059
        %v1153 = vpop.f32.mrb[0].mxu0
        %v1154 = vadd.f32 %v862, %v1153
        %v1155 = vpop.f32.mrb[0].mxu0
        %v1156 = vpop.f32.mrb[0].mxu0
        %v1157 = vadd.f32 %v865, %v1156
        %v1158 = vpop.f32.mrb[0].mxu0
        %1159 = vmatprep.mubr.bf16.mxu0 0
        %1160 = vmatmul.mubr.bf16.gmra.mrb[0].mxu0 %v1062
        %v1161 = vpop.f32.mrb[0].mxu0
        %v1162 = vadd.f32 %v870, %v1161
        %v1163 = vpop.f32.mrb[0].mxu0
        %v1164 = vpop.f32.mrb[0].mxu0
        %v1165 = vadd.f32 %v873, %v1164
        %v1166 = vpop.f32.mrb[0].mxu0
        %1167 = vmatprep.mubr.bf16.mxu0 0
        %1168 = vmatmul.mubr.bf16.gmra.mrb[0].mxu0 %v1065
        %v1169 = vpop.f32.mrb[0].mxu0
        %v1170 = vadd.f32 %v878, %v1169
        %v1171 = vpop.f32.mrb[0].mxu0
        %v1172 = vpop.f32.mrb[0].mxu0
        %v1173 = vadd.f32 %v881, %v1172
        %v1174 = vpop.f32.mrb[0].mxu0
        %1175 = vmatprep.mubr.bf16.mxu0 0
        %1176 = vmatmul.mubr.bf16.gmra.mrb[0].mxu0 %v1068
        %v1177 = vpop.f32.mrb[0].mxu0
        %v1178 = vadd.f32 %v886, %v1177
        %v1179 = vpop.f32.mrb[0].mxu0
        %v1180 = vpop.f32.mrb[0].mxu0
        %v1181 = vadd.f32 %v889, %v1180
        %v1182 = vpop.f32.mrb[0].mxu0
        %1183 = vmatprep.mubr.bf16.mxu0 0
        %1184 = vmatmul.mubr.bf16.gmra.mrb[0].mxu0 %v1071
        %v1185 = vpop.f32.mrb[0].mxu0
        %v1186 = vadd.f32 %v894, %v1185
        %v1187 = vpop.f32.mrb[0].mxu0
        %v1188 = vpop.f32.mrb[0].mxu0
        %v1189 = vadd.f32 %v897, %v1188
        %v1190 = vpop.f32.mrb[0].mxu0
        %1191 = vmatprep.mubr.bf16.mxu0 0
        %1192 = vmatmul.mubr.bf16.gmra.mrb[0].mxu0 %v1074
        %v1193 = vpop.f32.mrb[0].mxu0
        %v1194 = vadd.f32 %v902, %v1193
        %v1195 = vpop.f32.mrb[0].mxu0
        %v1196 = vpop.f32.mrb[0].mxu0
        %v1197 = vadd.f32 %v905, %v1196
        %v1198 = vpop.f32.mrb[0].mxu0
        %1199 = vmatprep.mubr.bf16.mxu0 0
        %1200 = vmatmul.mubr.bf16.gmra.mrb[0].mxu0 %v1077
        %v1201 = vpop.f32.mrb[0].mxu0
        %v1202 = vadd.f32 %v910, %v1201
        %v1203 = vpop.f32.mrb[0].mxu0
        %v1204 = vpop.f32.mrb[0].mxu0
        %v1205 = vadd.f32 %v913, %v1204
        %v1206 = vpop.f32.mrb[0].mxu0
        %1207 = vmatprep.mubr.bf16.mxu0 0
        %1208 = vmatmul.mubr.bf16.gmra.mrb[0].mxu0 %v1080
        %v1209 = vpop.f32.mrb[0].mxu0
        %v1210 = vadd.f32 %v918, %v1209
        %v1211 = vpop.f32.mrb[0].mxu0
        %v1212 = vpop.f32.mrb[0].mxu0
        %v1213 = vadd.f32 %v921, %v1212
        %v1214 = vpop.f32.mrb[0].mxu0
        %1215 = vmatprep.mubr.bf16.mxu0 0
        %1216 = vmatmul.mubr.bf16.gmra.mrb[0].mxu0 %v1083
        %v1217 = vpop.f32.mrb[0].mxu0
        %v1218 = vadd.f32 %v926, %v1217
        %v1219 = vpop.f32.mrb[0].mxu0
        %v1220 = vpop.f32.mrb[0].mxu0
        %v1221 = vadd.f32 %v929, %v1220
        %v1222 = vpop.f32.mrb[0].mxu0
        %1223 = vmatprep.mubr.bf16.mxu0 0
        %1224 = vmatmul.mubr.bf16.gmra.mrb[0].mxu0 %v1086
        %v1225 = vpop.f32.mrb[0].mxu0
        %v1226 = vadd.f32 %v934, %v1225
        %v1227 = vpop.f32.mrb[0].mxu0
        %v1228 = vpop.f32.mrb[0].mxu0
        %v1229 = vadd.f32 %v937, %v1228
        %v1230 = vpop.f32.mrb[0].mxu0
        %1231 = vmatprep.mubr.bf16.mxu0 0
        %1232 = vmatmul.mubr.bf16.gmra.mrb[0].mxu0 %v1089
        %v1233 = vpop.f32.mrb[0].mxu0
        %v1234 = vadd.f32 %v942, %v1233
        %v1235 = vpop.f32.mrb[0].mxu0
        %v1236 = vpop.f32.mrb[0].mxu0
        %v1237 = vadd.f32 %v945, %v1236
        %v1238 = vpop.f32.mrb[0].mxu0
        %1239 = vmatprep.mubr.bf16.mxu0 0
        %1240 = vmatmul.mubr.bf16.gmra.mrb[0].mxu0 %v1092
        %v1241 = vpop.f32.mrb[0].mxu0
        %v1242 = vadd.f32 %v950, %v1241
        %v1243 = vpop.f32.mrb[0].mxu0
        %v1244 = vpop.f32.mrb[0].mxu0
        %v1245 = vadd.f32 %v953, %v1244
        %v1246 = vpop.f32.mrb[0].mxu0
        %1247 = vmatprep.mubr.bf16.mxu0 0
        %1248 = vmatmul.mubr.bf16.gmra.mrb[0].mxu0 %v1095
        %v1249 = vpop.f32.mrb[0].mxu0
        %v1250 = vadd.f32 %v958, %v1249
        %v1251 = vpop.f32.mrb[0].mxu0
        %v1252 = vpop.f32.mrb[0].mxu0
        %v1253 = vadd.f32 %v961, %v1252
        %v1254 = vpop.f32.mrb[0].mxu0
        %1255 = vmatprep.mubr.bf16.mxu0 0
        %1256 = vmatmul.mubr.bf16.gmra.mrb[0].mxu0 %v1098
        %v1257 = vpop.f32.mrb[0].mxu0
        %v1258 = vadd.f32 %v966, %v1257
        %v1259 = vpop.f32.mrb[0].mxu0
        %v1260 = vpop.f32.mrb[0].mxu0
        %v1261 = vadd.f32 %v969, %v1260
        %v1262 = vpop.f32.mrb[0].mxu0
        %1263 = vdwg.mxu0
        %vm1280 = vcmask 1042432
        %vm1281 = vcmask 1046532
        %vm1282 = vmor %vm1280, %vm1281
        %v1283 = vrot.slane %v266, 5
        %v1284 = vrot.slane %v1283, 4
        %v1285 = vrot.slane %v267, 5
        %v1286 = vsel %vm1282, %v1284, %v1285
        %v1287 = vrot.slane %v1285, 4
        %v1288 = vrot.slane %v268, 5
        %v1289 = vsel %vm1282, %v1287, %v1288
        %v1290 = vrot.slane %v269, 5
        %v1291 = vrot.slane %v1290, 4
        %v1292 = vrot.slane %v270, 5
        %v1293 = vsel %vm1282, %v1291, %v1292
        %v1294 = vrot.slane %v1292, 4
        %v1295 = vrot.slane %v271, 5
        %v1296 = vsel %vm1282, %v1294, %v1295
        %v1297 = vrot.slane %v272, 5
        %v1298 = vrot.slane %v1297, 4
        %v1299 = vrot.slane %v273, 5
        %v1300 = vsel %vm1282, %v1298, %v1299
        %v1301 = vrot.slane %v1299, 4
        %v1302 = vrot.slane %v274, 5
        %v1303 = vsel %vm1282, %v1301, %v1302
        %v1304 = vrot.slane %v275, 5
        %v1305 = vrot.slane %v1304, 4
        %v1306 = vrot.slane %v276, 5
        %v1307 = vsel %vm1282, %v1305, %v1306
        %v1308 = vrot.slane %v1306, 4
        %v1309 = vrot.slane %v277, 5
        %v1310 = vsel %vm1282, %v1308, %v1309
        %v1311 = vrot.slane %v278, 5
        %v1312 = vrot.slane %v1311, 4
        %v1313 = vrot.slane %v279, 5
        %v1314 = vsel %vm1282, %v1312, %v1313
        %v1315 = vrot.slane %v1313, 4
        %v1316 = vrot.slane %v280, 5
        %v1317 = vsel %vm1282, %v1315, %v1316
        %v1318 = vrot.slane %v281, 5
        %v1319 = vrot.slane %v1318, 4
        %v1320 = vrot.slane %v282, 5
        %v1321 = vsel %vm1282, %v1319, %v1320
        %v1322 = vrot.slane %v1320, 4
        %v1323 = vrot.slane %v283, 5
        %v1324 = vsel %vm1282, %v1322, %v1323
        %v1325 = vrot.slane %v284, 5
        %v1326 = vrot.slane %v1325, 4
        %v1327 = vrot.slane %v285, 5
        %v1328 = vsel %vm1282, %v1326, %v1327
        %v1329 = vrot.slane %v1327, 4
        %v1330 = vrot.slane %v286, 5
        %v1331 = vsel %vm1282, %v1329, %v1330
        %v1332 = vrot.slane %v287, 5
        %v1333 = vrot.slane %v1332, 4
        %v1334 = vrot.slane %v288, 5
        %v1335 = vsel %vm1282, %v1333, %v1334
        %v1336 = vrot.slane %v1334, 4
        %v1337 = vrot.slane %v289, 5
        %v1338 = vsel %vm1282, %v1336, %v1337
        %v1339 = vrot.slane %v290, 5
        %v1340 = vrot.slane %v1339, 4
        %v1341 = vrot.slane %v291, 5
        %v1342 = vsel %vm1282, %v1340, %v1341
        %v1343 = vrot.slane %v1341, 4
        %v1344 = vrot.slane %v292, 5
        %v1345 = vsel %vm1282, %v1343, %v1344
        %v1346 = vrot.slane %v293, 5
        %v1347 = vrot.slane %v1346, 4
        %v1348 = vrot.slane %v294, 5
        %v1349 = vsel %vm1282, %v1347, %v1348
        %v1350 = vrot.slane %v1348, 4
        %v1351 = vrot.slane %v295, 5
        %v1352 = vsel %vm1282, %v1350, %v1351
        %v1353 = vrot.slane %v296, 5
        %v1354 = vrot.slane %v1353, 4
        %v1355 = vrot.slane %v297, 5
        %v1356 = vsel %vm1282, %v1354, %v1355
        %v1357 = vrot.slane %v1355, 4
        %v1358 = vrot.slane %v298, 5
        %v1359 = vsel %vm1282, %v1357, %v1358
        %v1360 = vrot.slane %v299, 5
        %v1361 = vrot.slane %v1360, 4
        %v1362 = vrot.slane %v300, 5
        %v1363 = vsel %vm1282, %v1361, %v1362
        %v1364 = vrot.slane %v1362, 4
        %v1365 = vrot.slane %v301, 5
        %v1366 = vsel %vm1282, %v1364, %v1365
        %v1367 = vrot.slane %v302, 5
        %v1368 = vrot.slane %v1367, 4
        %v1369 = vrot.slane %v303, 5
        %v1370 = vsel %vm1282, %v1368, %v1369
        %v1371 = vrot.slane %v1369, 4
        %v1372 = vrot.slane %v304, 5
        %v1373 = vsel %vm1282, %v1371, %v1372
        %v1374 = vrot.slane %v305, 5
        %v1375 = vrot.slane %v1374, 4
        %v1376 = vrot.slane %v306, 5
        %v1377 = vsel %vm1282, %v1375, %v1376
        %v1378 = vrot.slane %v1376, 4
        %v1379 = vrot.slane %v307, 5
        %v1380 = vsel %vm1282, %v1378, %v1379
        %v1381 = vrot.slane %v308, 5
        %v1382 = vrot.slane %v1381, 4
        %v1383 = vrot.slane %v309, 5
        %v1384 = vsel %vm1282, %v1382, %v1383
        %v1385 = vrot.slane %v1383, 4
        %v1386 = vrot.slane %v310, 5
        %v1387 = vsel %vm1282, %v1385, %v1386
        %v1388 = vrot.slane %v311, 5
        %v1389 = vrot.slane %v1388, 4
        %v1390 = vrot.slane %v312, 5
        %v1391 = vsel %vm1282, %v1389, %v1390
        %v1392 = vrot.slane %v1390, 4
        %v1393 = vrot.slane %v313, 5
        %v1394 = vsel %vm1282, %v1392, %v1393
        %s1395 = scalar_lea.vmem %s1, 4
        %v1396 = vld [vmem:[%s1395] sm:$0x3]
        %v1397 = vunpack.c.l.b16 %v1286
        %v1398 = vunpack.c.l.b16 %v1289
        %v1399 = vunpack.c.l.b16 %v1293
        %v1400 = vunpack.c.l.b16 %v1296
        %v1401 = vunpack.c.l.b16 %v1300
        %v1402 = vunpack.c.l.b16 %v1303
        %v1403 = vunpack.c.l.b16 %v1307
        %v1404 = vunpack.c.l.b16 %v1310
        %v1405 = vunpack.c.l.b16 %v1314
        %v1406 = vunpack.c.l.b16 %v1317
        %v1407 = vunpack.c.l.b16 %v1321
        %v1408 = vunpack.c.l.b16 %v1324
        %v1409 = vunpack.c.l.b16 %v1328
        %v1410 = vunpack.c.l.b16 %v1331
        %v1411 = vunpack.c.l.b16 %v1335
        %v1412 = vunpack.c.l.b16 %v1338
        %v1413 = vunpack.c.l.b16 %v1342
        %v1414 = vunpack.c.l.b16 %v1345
        %v1415 = vunpack.c.l.b16 %v1349
        %v1416 = vunpack.c.l.b16 %v1352
        %v1417 = vunpack.c.l.b16 %v1356
        %v1418 = vunpack.c.l.b16 %v1359
        %v1419 = vunpack.c.l.b16 %v1363
        %v1420 = vunpack.c.l.b16 %v1366
        %v1421 = vunpack.c.l.b16 %v1370
        %v1422 = vunpack.c.l.b16 %v1373
        %v1423 = vunpack.c.l.b16 %v1377
        %v1424 = vunpack.c.l.b16 %v1380
        %v1425 = vunpack.c.l.b16 %v1384
        %v1426 = vunpack.c.l.b16 %v1387
        %v1427 = vunpack.c.l.b16 %v1391
        %v1428 = vunpack.c.l.b16 %v1394
        %v1429 = vpack.c.b16 %v1398, %v1397
        %v1430 = vpack.c.b16 %v1400, %v1399
        %v1431 = vpack.c.b16 %v1402, %v1401
        %v1432 = vpack.c.b16 %v1404, %v1403
        %v1433 = vpack.c.b16 %v1406, %v1405
        %v1434 = vpack.c.b16 %v1408, %v1407
        %v1435 = vpack.c.b16 %v1410, %v1409
        %v1436 = vpack.c.b16 %v1412, %v1411
        %v1437 = vpack.c.b16 %v1414, %v1413
        %v1438 = vpack.c.b16 %v1416, %v1415
        %v1439 = vpack.c.b16 %v1418, %v1417
        %v1440 = vpack.c.b16 %v1420, %v1419
        %v1441 = vpack.c.b16 %v1422, %v1421
        %v1442 = vpack.c.b16 %v1424, %v1423
        %v1443 = vpack.c.b16 %v1426, %v1425
        %v1444 = vpack.c.b16 %v1428, %v1427
        %v1446 = vsel %vm758, %v1429, 0
        %v1449 = vsel %vm758, %v1430, 0
        %v1452 = vsel %vm758, %v1431, 0
        %v1455 = vsel %vm758, %v1432, 0
        %v1458 = vsel %vm758, %v1433, 0
        %v1461 = vsel %vm758, %v1434, 0
        %v1464 = vsel %vm758, %v1435, 0
        %v1467 = vsel %vm758, %v1436, 0
        %v1470 = vsel %vm758, %v1437, 0
        %v1473 = vsel %vm758, %v1438, 0
        %v1476 = vsel %vm758, %v1439, 0
        %v1479 = vsel %vm758, %v1440, 0
        %v1482 = vsel %vm758, %v1441, 0
        %v1485 = vsel %vm758, %v1442, 0
        %v1488 = vsel %vm758, %v1443, 0
        %v1491 = vsel %vm758, %v1444, 0
        %v1494 = vsel %vm807, %v1396, 0
        %1496 = vmatprep.subr.bf16.mxu0 0
        %1497 = vmatpush1.bf16.msra.mxu0 %v1494
        %1498 = vmatprep.subr.bf16.mxu0 0
        %1499 = vmatpush1.bf16.msra.mxu0 0
        %1500 = vmatprep.subr.bf16.mxu0 0
        %1501 = vmatpush1.bf16.msra.mxu0 0
        %1502 = vmatprep.subr.bf16.mxu0 0
        %1503 = vmatpush1.bf16.msra.mxu0 0
        %1504 = vmatprep.subr.bf16.mxu0 0
        %1505 = vmatpush1.bf16.msra.mxu0 0
        %1506 = vmatprep.subr.bf16.mxu0 0
        %1507 = vmatpush1.bf16.msra.mxu0 0
        %1508 = vmatprep.subr.bf16.mxu0 0
        %1509 = vmatpush1.bf16.msra.mxu0 0
        %1510 = vmatprep.subr.bf16.mxu0 0
        %1511 = vmatpush1.bf16.msra.mxu0 0
        %1512 = vmatprep.subr.bf16.mxu0 0
        %1513 = vmatpush1.bf16.msra.mxu0 0
        %1514 = vmatprep.subr.bf16.mxu0 0
        %1515 = vmatpush1.bf16.msra.mxu0 0
        %1516 = vmatprep.subr.bf16.mxu0 0
        %1517 = vmatpush1.bf16.msra.mxu0 0
        %1518 = vmatprep.subr.bf16.mxu0 0
        %1519 = vmatpush1.bf16.msra.mxu0 0
        %1520 = vmatprep.subr.bf16.mxu0 0
        %1521 = vmatpush1.bf16.msra.mxu0 0
        %1522 = vmatprep.subr.bf16.mxu0 0
        %1523 = vmatpush1.bf16.msra.mxu0 0
        %1524 = vmatprep.subr.bf16.mxu0 0
        %1525 = vmatpush1.bf16.msra.mxu0 0
        %1526 = vmatprep.subr.bf16.mxu0 0
        %1527 = vmatpush1.bf16.msra.mxu0 0
        %1528 = vmatprep.mubr.bf16.mxu0 0
        %1529 = vmatmul.mubr.bf16.gmra.mrb[0].mxu0 %v1446
        %v1530 = vpop.f32.mrb[0].mxu0
        %v1531 = vadd.f32 0.0, %v1530
        %v1532 = vpop.f32.mrb[0].mxu0
        %v1533 = vpop.f32.mrb[0].mxu0
        %v1534 = vadd.f32 0.0, %v1533
        %v1535 = vpop.f32.mrb[0].mxu0
        %1536 = vmatprep.mubr.bf16.mxu0 0
        %1537 = vmatmul.mubr.bf16.gmra.mrb[0].mxu0 %v1449
        %v1538 = vpop.f32.mrb[0].mxu0
        %v1539 = vadd.f32 0.0, %v1538
        %v1540 = vpop.f32.mrb[0].mxu0
        %v1541 = vpop.f32.mrb[0].mxu0
        %v1542 = vadd.f32 0.0, %v1541
        %v1543 = vpop.f32.mrb[0].mxu0
        %1544 = vmatprep.mubr.bf16.mxu0 0
        %1545 = vmatmul.mubr.bf16.gmra.mrb[0].mxu0 %v1452
        %v1546 = vpop.f32.mrb[0].mxu0
        %v1547 = vadd.f32 0.0, %v1546
        %v1548 = vpop.f32.mrb[0].mxu0
        %v1549 = vpop.f32.mrb[0].mxu0
        %v1550 = vadd.f32 0.0, %v1549
        %v1551 = vpop.f32.mrb[0].mxu0
        %1552 = vmatprep.mubr.bf16.mxu0 0
        %1553 = vmatmul.mubr.bf16.gmra.mrb[0].mxu0 %v1455
        %v1554 = vpop.f32.mrb[0].mxu0
        %v1555 = vadd.f32 0.0, %v1554
        %v1556 = vpop.f32.mrb[0].mxu0
        %v1557 = vpop.f32.mrb[0].mxu0
        %v1558 = vadd.f32 0.0, %v1557
        %v1559 = vpop.f32.mrb[0].mxu0
        %1560 = vmatprep.mubr.bf16.mxu0 0
        %1561 = vmatmul.mubr.bf16.gmra.mrb[0].mxu0 %v1458
        %v1562 = vpop.f32.mrb[0].mxu0
        %v1563 = vadd.f32 0.0, %v1562
        %v1564 = vpop.f32.mrb[0].mxu0
        %v1565 = vpop.f32.mrb[0].mxu0
        %v1566 = vadd.f32 0.0, %v1565
        %v1567 = vpop.f32.mrb[0].mxu0
        %1568 = vmatprep.mubr.bf16.mxu0 0
        %1569 = vmatmul.mubr.bf16.gmra.mrb[0].mxu0 %v1461
        %v1570 = vpop.f32.mrb[0].mxu0
        %v1571 = vadd.f32 0.0, %v1570
        %v1572 = vpop.f32.mrb[0].mxu0
        %v1573 = vpop.f32.mrb[0].mxu0
        %v1574 = vadd.f32 0.0, %v1573
        %v1575 = vpop.f32.mrb[0].mxu0
        %1576 = vmatprep.mubr.bf16.mxu0 0
        %1577 = vmatmul.mubr.bf16.gmra.mrb[0].mxu0 %v1464
        %v1578 = vpop.f32.mrb[0].mxu0
        %v1579 = vadd.f32 0.0, %v1578
        %v1580 = vpop.f32.mrb[0].mxu0
        %v1581 = vpop.f32.mrb[0].mxu0
        %v1582 = vadd.f32 0.0, %v1581
        %v1583 = vpop.f32.mrb[0].mxu0
        %1584 = vmatprep.mubr.bf16.mxu0 0
        %1585 = vmatmul.mubr.bf16.gmra.mrb[0].mxu0 %v1467
        %v1586 = vpop.f32.mrb[0].mxu0
        %v1587 = vadd.f32 0.0, %v1586
        %v1588 = vpop.f32.mrb[0].mxu0
        %v1589 = vpop.f32.mrb[0].mxu0
        %v1590 = vadd.f32 0.0, %v1589
        %v1591 = vpop.f32.mrb[0].mxu0
        %1592 = vmatprep.mubr.bf16.mxu0 0
        %1593 = vmatmul.mubr.bf16.gmra.mrb[0].mxu0 %v1470
        %v1594 = vpop.f32.mrb[0].mxu0
        %v1595 = vadd.f32 0.0, %v1594
        %v1596 = vpop.f32.mrb[0].mxu0
        %v1597 = vpop.f32.mrb[0].mxu0
        %v1598 = vadd.f32 0.0, %v1597
        %v1599 = vpop.f32.mrb[0].mxu0
        %1600 = vmatprep.mubr.bf16.mxu0 0
        %1601 = vmatmul.mubr.bf16.gmra.mrb[0].mxu0 %v1473
        %v1602 = vpop.f32.mrb[0].mxu0
        %v1603 = vadd.f32 0.0, %v1602
        %v1604 = vpop.f32.mrb[0].mxu0
        %v1605 = vpop.f32.mrb[0].mxu0
        %v1606 = vadd.f32 0.0, %v1605
        %v1607 = vpop.f32.mrb[0].mxu0
        %1608 = vmatprep.mubr.bf16.mxu0 0
        %1609 = vmatmul.mubr.bf16.gmra.mrb[0].mxu0 %v1476
        %v1610 = vpop.f32.mrb[0].mxu0
        %v1611 = vadd.f32 0.0, %v1610
        %v1612 = vpop.f32.mrb[0].mxu0
        %v1613 = vpop.f32.mrb[0].mxu0
        %v1614 = vadd.f32 0.0, %v1613
        %v1615 = vpop.f32.mrb[0].mxu0
        %1616 = vmatprep.mubr.bf16.mxu0 0
        %1617 = vmatmul.mubr.bf16.gmra.mrb[0].mxu0 %v1479
        %v1618 = vpop.f32.mrb[0].mxu0
        %v1619 = vadd.f32 0.0, %v1618
        %v1620 = vpop.f32.mrb[0].mxu0
        %v1621 = vpop.f32.mrb[0].mxu0
        %v1622 = vadd.f32 0.0, %v1621
        %v1623 = vpop.f32.mrb[0].mxu0
        %1624 = vmatprep.mubr.bf16.mxu0 0
        %1625 = vmatmul.mubr.bf16.gmra.mrb[0].mxu0 %v1482
        %v1626 = vpop.f32.mrb[0].mxu0
        %v1627 = vadd.f32 0.0, %v1626
        %v1628 = vpop.f32.mrb[0].mxu0
        %v1629 = vpop.f32.mrb[0].mxu0
        %v1630 = vadd.f32 0.0, %v1629
        %v1631 = vpop.f32.mrb[0].mxu0
        %1632 = vmatprep.mubr.bf16.mxu0 0
        %1633 = vmatmul.mubr.bf16.gmra.mrb[0].mxu0 %v1485
        %v1634 = vpop.f32.mrb[0].mxu0
        %v1635 = vadd.f32 0.0, %v1634
        %v1636 = vpop.f32.mrb[0].mxu0
        %v1637 = vpop.f32.mrb[0].mxu0
        %v1638 = vadd.f32 0.0, %v1637
        %v1639 = vpop.f32.mrb[0].mxu0
        %1640 = vmatprep.mubr.bf16.mxu0 0
        %1641 = vmatmul.mubr.bf16.gmra.mrb[0].mxu0 %v1488
        %v1642 = vpop.f32.mrb[0].mxu0
        %v1643 = vadd.f32 0.0, %v1642
        %v1644 = vpop.f32.mrb[0].mxu0
        %v1645 = vpop.f32.mrb[0].mxu0
        %v1646 = vadd.f32 0.0, %v1645
        %v1647 = vpop.f32.mrb[0].mxu0
        %1648 = vmatprep.mubr.bf16.mxu0 0
        %1649 = vmatmul.mubr.bf16.gmra.mrb[0].mxu0 %v1491
        %v1650 = vpop.f32.mrb[0].mxu0
        %v1651 = vadd.f32 0.0, %v1650
        %v1652 = vpop.f32.mrb[0].mxu0
        %v1653 = vpop.f32.mrb[0].mxu0
        %v1654 = vadd.f32 0.0, %v1653
        %v1655 = vpop.f32.mrb[0].mxu0
        %1656 = vdwg.mxu0
        %v1657 = vadd.f32 %v1138, %v1531
        %v1658 = vadd.f32 %v1141, %v1534
        %v1659 = vadd.f32 %v1146, %v1539
        %v1660 = vadd.f32 %v1149, %v1542
        %v1661 = vadd.f32 %v1154, %v1547
        %v1662 = vadd.f32 %v1157, %v1550
        %v1663 = vadd.f32 %v1162, %v1555
        %v1664 = vadd.f32 %v1165, %v1558
        %v1665 = vadd.f32 %v1170, %v1563
        %v1666 = vadd.f32 %v1173, %v1566
        %v1667 = vadd.f32 %v1178, %v1571
        %v1668 = vadd.f32 %v1181, %v1574
        %v1669 = vadd.f32 %v1186, %v1579
        %v1670 = vadd.f32 %v1189, %v1582
        %v1671 = vadd.f32 %v1194, %v1587
        %v1672 = vadd.f32 %v1197, %v1590
        %v1673 = vadd.f32 %v1202, %v1595
        %v1674 = vadd.f32 %v1205, %v1598
        %v1675 = vadd.f32 %v1210, %v1603
        %v1676 = vadd.f32 %v1213, %v1606
        %v1677 = vadd.f32 %v1218, %v1611
        %v1678 = vadd.f32 %v1221, %v1614
        %v1679 = vadd.f32 %v1226, %v1619
        %v1680 = vadd.f32 %v1229, %v1622
        %v1681 = vadd.f32 %v1234, %v1627
        %v1682 = vadd.f32 %v1237, %v1630
        %v1683 = vadd.f32 %v1242, %v1635
        %v1684 = vadd.f32 %v1245, %v1638
        %v1685 = vadd.f32 %v1250, %v1643
        %v1686 = vadd.f32 %v1253, %v1646
        %v1687 = vadd.f32 %v1258, %v1651
        %v1688 = vadd.f32 %v1261, %v1654
        %s1689 = scalar_lea.vmem %s1, 6
        %v1690 = vld [vmem:[%s1689] sm:$0x3]
        %v1693 = vunpack.c.l.b16 %v314
        %v1694 = vunpack.c.l.b16 %v315
        %v1695 = vpack.c.b16 %v1694, %v1693
        %v1697 = vsel %vm758, %v1695, 0
        %v1700 = vsel %vm807, %v1690, 0
        %1702 = vmatprep.subr.bf16.mxu0 0
        %1703 = vmatpush1.bf16.msra.mxu0 %v1700
        %1704 = vmatprep.subr.bf16.mxu0 0
        %1705 = vmatpush1.bf16.msra.mxu0 0
        %1706 = vmatprep.subr.bf16.mxu0 0
        %1707 = vmatpush1.bf16.msra.mxu0 0
        %1708 = vmatprep.subr.bf16.mxu0 0
        %1709 = vmatpush1.bf16.msra.mxu0 0
        %1710 = vmatprep.subr.bf16.mxu0 0
        %1711 = vmatpush1.bf16.msra.mxu0 0
        %1712 = vmatprep.subr.bf16.mxu0 0
        %1713 = vmatpush1.bf16.msra.mxu0 0
        %1714 = vmatprep.subr.bf16.mxu0 0
        %1715 = vmatpush1.bf16.msra.mxu0 0
        %1716 = vmatprep.subr.bf16.mxu0 0
        %1717 = vmatpush1.bf16.msra.mxu0 0
        %1718 = vmatprep.subr.bf16.mxu0 0
        %1719 = vmatpush1.bf16.msra.mxu0 0
        %1720 = vmatprep.subr.bf16.mxu0 0
        %1721 = vmatpush1.bf16.msra.mxu0 0
        %1722 = vmatprep.subr.bf16.mxu0 0
        %1723 = vmatpush1.bf16.msra.mxu0 0
        %1724 = vmatprep.subr.bf16.mxu0 0
        %1725 = vmatpush1.bf16.msra.mxu0 0
        %1726 = vmatprep.subr.bf16.mxu0 0
        %1727 = vmatpush1.bf16.msra.mxu0 0
        %1728 = vmatprep.subr.bf16.mxu0 0
        %1729 = vmatpush1.bf16.msra.mxu0 0
        %1730 = vmatprep.subr.bf16.mxu0 0
        %1731 = vmatpush1.bf16.msra.mxu0 0
        %1732 = vmatprep.subr.bf16.mxu0 0
        %1733 = vmatpush1.bf16.msra.mxu0 0
        %1734 = vmatprep.mubr.bf16.mxu0 0
        %1735 = vmatmul.mubr.bf16.gmra.mrb[0].mxu0 %v1056
        %v1736 = vpop.f32.mrb[0].mxu0
        %v1737 = vadd.f32 0.0, %v1736
        %v1738 = vpop.f32.mrb[0].mxu0
        %v1739 = vpop.f32.mrb[0].mxu0
        %v1740 = vadd.f32 0.0, %v1739
        %v1741 = vpop.f32.mrb[0].mxu0
        %1742 = vmatprep.mubr.bf16.mxu0 0
        %1743 = vmatmul.mubr.bf16.gmra.mrb[0].mxu0 %v1059
        %v1744 = vpop.f32.mrb[0].mxu0
        %v1745 = vadd.f32 0.0, %v1744
        %v1746 = vpop.f32.mrb[0].mxu0
        %v1747 = vpop.f32.mrb[0].mxu0
        %v1748 = vadd.f32 0.0, %v1747
        %v1749 = vpop.f32.mrb[0].mxu0
        %1750 = vmatprep.mubr.bf16.mxu0 0
        %1751 = vmatmul.mubr.bf16.gmra.mrb[0].mxu0 %v1062
        %v1752 = vpop.f32.mrb[0].mxu0
        %v1753 = vadd.f32 0.0, %v1752
        %v1754 = vpop.f32.mrb[0].mxu0
        %v1755 = vpop.f32.mrb[0].mxu0
        %v1756 = vadd.f32 0.0, %v1755
        %v1757 = vpop.f32.mrb[0].mxu0
        %1758 = vmatprep.mubr.bf16.mxu0 0
        %1759 = vmatmul.mubr.bf16.gmra.mrb[0].mxu0 %v1065
        %v1760 = vpop.f32.mrb[0].mxu0
        %v1761 = vadd.f32 0.0, %v1760
        %v1762 = vpop.f32.mrb[0].mxu0
        %v1763 = vpop.f32.mrb[0].mxu0
        %v1764 = vadd.f32 0.0, %v1763
        %v1765 = vpop.f32.mrb[0].mxu0
        %1766 = vmatprep.mubr.bf16.mxu0 0
        %1767 = vmatmul.mubr.bf16.gmra.mrb[0].mxu0 %v1068
        %v1768 = vpop.f32.mrb[0].mxu0
        %v1769 = vadd.f32 0.0, %v1768
        %v1770 = vpop.f32.mrb[0].mxu0
        %v1771 = vpop.f32.mrb[0].mxu0
        %v1772 = vadd.f32 0.0, %v1771
        %v1773 = vpop.f32.mrb[0].mxu0
        %1774 = vmatprep.mubr.bf16.mxu0 0
        %1775 = vmatmul.mubr.bf16.gmra.mrb[0].mxu0 %v1071
        %v1776 = vpop.f32.mrb[0].mxu0
        %v1777 = vadd.f32 0.0, %v1776
        %v1778 = vpop.f32.mrb[0].mxu0
        %v1779 = vpop.f32.mrb[0].mxu0
        %v1780 = vadd.f32 0.0, %v1779
        %v1781 = vpop.f32.mrb[0].mxu0
        %1782 = vmatprep.mubr.bf16.mxu0 0
        %1783 = vmatmul.mubr.bf16.gmra.mrb[0].mxu0 %v1074
        %v1784 = vpop.f32.mrb[0].mxu0
        %v1785 = vadd.f32 0.0, %v1784
        %v1786 = vpop.f32.mrb[0].mxu0
        %v1787 = vpop.f32.mrb[0].mxu0
        %v1788 = vadd.f32 0.0, %v1787
        %v1789 = vpop.f32.mrb[0].mxu0
        %1790 = vmatprep.mubr.bf16.mxu0 0
        %1791 = vmatmul.mubr.bf16.gmra.mrb[0].mxu0 %v1077
        %v1792 = vpop.f32.mrb[0].mxu0
        %v1793 = vadd.f32 0.0, %v1792
        %v1794 = vpop.f32.mrb[0].mxu0
        %v1795 = vpop.f32.mrb[0].mxu0
        %v1796 = vadd.f32 0.0, %v1795
        %v1797 = vpop.f32.mrb[0].mxu0
        %1798 = vmatprep.mubr.bf16.mxu0 0
        %1799 = vmatmul.mubr.bf16.gmra.mrb[0].mxu0 %v1080
        %v1800 = vpop.f32.mrb[0].mxu0
        %v1801 = vadd.f32 0.0, %v1800
        %v1802 = vpop.f32.mrb[0].mxu0
        %v1803 = vpop.f32.mrb[0].mxu0
        %v1804 = vadd.f32 0.0, %v1803
        %v1805 = vpop.f32.mrb[0].mxu0
        %1806 = vmatprep.mubr.bf16.mxu0 0
        %1807 = vmatmul.mubr.bf16.gmra.mrb[0].mxu0 %v1083
        %v1808 = vpop.f32.mrb[0].mxu0
        %v1809 = vadd.f32 0.0, %v1808
        %v1810 = vpop.f32.mrb[0].mxu0
        %v1811 = vpop.f32.mrb[0].mxu0
        %v1812 = vadd.f32 0.0, %v1811
        %v1813 = vpop.f32.mrb[0].mxu0
        %1814 = vmatprep.mubr.bf16.mxu0 0
        %1815 = vmatmul.mubr.bf16.gmra.mrb[0].mxu0 %v1086
        %v1816 = vpop.f32.mrb[0].mxu0
        %v1817 = vadd.f32 0.0, %v1816
        %v1818 = vpop.f32.mrb[0].mxu0
        %v1819 = vpop.f32.mrb[0].mxu0
        %v1820 = vadd.f32 0.0, %v1819
        %v1821 = vpop.f32.mrb[0].mxu0
        %1822 = vmatprep.mubr.bf16.mxu0 0
        %1823 = vmatmul.mubr.bf16.gmra.mrb[0].mxu0 %v1089
        %v1824 = vpop.f32.mrb[0].mxu0
        %v1825 = vadd.f32 0.0, %v1824
        %v1826 = vpop.f32.mrb[0].mxu0
        %v1827 = vpop.f32.mrb[0].mxu0
        %v1828 = vadd.f32 0.0, %v1827
        %v1829 = vpop.f32.mrb[0].mxu0
        %1830 = vmatprep.mubr.bf16.mxu0 0
        %1831 = vmatmul.mubr.bf16.gmra.mrb[0].mxu0 %v1092
        %v1832 = vpop.f32.mrb[0].mxu0
        %v1833 = vadd.f32 0.0, %v1832
        %v1834 = vpop.f32.mrb[0].mxu0
        %v1835 = vpop.f32.mrb[0].mxu0
        %v1836 = vadd.f32 0.0, %v1835
        %v1837 = vpop.f32.mrb[0].mxu0
        %1838 = vmatprep.mubr.bf16.mxu0 0
        %1839 = vmatmul.mubr.bf16.gmra.mrb[0].mxu0 %v1095
        %v1840 = vpop.f32.mrb[0].mxu0
        %v1841 = vadd.f32 0.0, %v1840
        %v1842 = vpop.f32.mrb[0].mxu0
        %v1843 = vpop.f32.mrb[0].mxu0
        %v1844 = vadd.f32 0.0, %v1843
        %v1845 = vpop.f32.mrb[0].mxu0
        %1846 = vmatprep.mubr.bf16.mxu0 0
        %1847 = vmatmul.mubr.bf16.gmra.mrb[0].mxu0 %v1098
        %v1848 = vpop.f32.mrb[0].mxu0
        %v1849 = vadd.f32 0.0, %v1848
        %v1850 = vpop.f32.mrb[0].mxu0
        %v1851 = vpop.f32.mrb[0].mxu0
        %v1852 = vadd.f32 0.0, %v1851
        %v1853 = vpop.f32.mrb[0].mxu0
        %1854 = vmatprep.mubr.bf16.mxu0 0
        %1855 = vmatmul.mubr.bf16.gmra.mrb[0].mxu0 %v1697
        %v1856 = vpop.f32.mrb[0].mxu0
        %v1857 = vadd.f32 0.0, %v1856
        %v1858 = vpop.f32.mrb[0].mxu0
        %v1859 = vpop.f32.mrb[0].mxu0
        %v1860 = vadd.f32 0.0, %v1859
        %v1861 = vpop.f32.mrb[0].mxu0
        %1862 = vdwg.mxu0
        %v1863 = vadd.f32 %v1657, %v1737
        %v1864 = vadd.f32 %v1658, %v1740
        %v1865 = vadd.f32 %v1659, %v1745
        %v1866 = vadd.f32 %v1660, %v1748
        %v1867 = vadd.f32 %v1661, %v1753
        %v1868 = vadd.f32 %v1662, %v1756
        %v1869 = vadd.f32 %v1663, %v1761
        %v1870 = vadd.f32 %v1664, %v1764
        %v1871 = vadd.f32 %v1665, %v1769
        %v1872 = vadd.f32 %v1666, %v1772
        %v1873 = vadd.f32 %v1667, %v1777
        %v1874 = vadd.f32 %v1668, %v1780
        %v1875 = vadd.f32 %v1669, %v1785
        %v1876 = vadd.f32 %v1670, %v1788
        %v1877 = vadd.f32 %v1671, %v1793
        %v1878 = vadd.f32 %v1672, %v1796
        %v1879 = vadd.f32 %v1673, %v1801
        %v1880 = vadd.f32 %v1674, %v1804
        %v1881 = vadd.f32 %v1675, %v1809
        %v1882 = vadd.f32 %v1676, %v1812
        %v1883 = vadd.f32 %v1677, %v1817
        %v1884 = vadd.f32 %v1678, %v1820
        %v1885 = vadd.f32 %v1679, %v1825
        %v1886 = vadd.f32 %v1680, %v1828
        %v1887 = vadd.f32 %v1681, %v1833
        %v1888 = vadd.f32 %v1682, %v1836
        %v1889 = vadd.f32 %v1683, %v1841
        %v1890 = vadd.f32 %v1684, %v1844
        %v1891 = vadd.f32 %v1685, %v1849
        %v1892 = vadd.f32 %v1686, %v1852
        %v1893 = vadd.f32 %v1687, %v1857
        %v1894 = vadd.f32 %v1688, %v1860
        %v1896 = vshrl.u32 %v314, 16
        %v1898 = vrot.slane %v1896, 4
        %v1899 = vshll.u32 %v314, 16
        %v1901 = vrot.slane %v1899, 5
        %v1902 = vor.u32 %v1898, %v1901
        %v1903 = vrot.slane %v1902, 4
        %v1905 = vshll.u32 %v315, 16
        %v1907 = vrot.slane %v1905, 5
        %v1908 = vsel %vm323, %v1903, %v1907
        %v1909 = vshrl.u32 %v315, 16
        %v1911 = vrot.slane %v1909, 4
        %v1912 = vor.u32 %v1911, %v1907
        %v1913 = vrot.slane %v1912, 4
        %v1915 = vshll.u32 %v316, 16
        %v1917 = vrot.slane %v1915, 5
        %v1918 = vsel %vm323, %v1913, %v1917
        %s1919 = scalar_lea.vmem %s1, 8
        %v1920 = vld [vmem:[%s1919] sm:$0x3]
        %v1921 = vunpack.c.l.b16 %v1908
        %v1922 = vunpack.c.l.b16 %v1918
        %v1923 = vpack.c.b16 %v1922, %v1921
        %v1925 = vsel %vm758, %v1923, 0
        %v1928 = vsel %vm807, %v1920, 0
        %1930 = vmatprep.subr.bf16.mxu0 0
        %1931 = vmatpush1.bf16.msra.mxu0 %v1928
        %1932 = vmatprep.subr.bf16.mxu0 0
        %1933 = vmatpush1.bf16.msra.mxu0 0
        %1934 = vmatprep.subr.bf16.mxu0 0
        %1935 = vmatpush1.bf16.msra.mxu0 0
        %1936 = vmatprep.subr.bf16.mxu0 0
        %1937 = vmatpush1.bf16.msra.mxu0 0
        %1938 = vmatprep.subr.bf16.mxu0 0
        %1939 = vmatpush1.bf16.msra.mxu0 0
        %1940 = vmatprep.subr.bf16.mxu0 0
        %1941 = vmatpush1.bf16.msra.mxu0 0
        %1942 = vmatprep.subr.bf16.mxu0 0
        %1943 = vmatpush1.bf16.msra.mxu0 0
        %1944 = vmatprep.subr.bf16.mxu0 0
        %1945 = vmatpush1.bf16.msra.mxu0 0
        %1946 = vmatprep.subr.bf16.mxu0 0
        %1947 = vmatpush1.bf16.msra.mxu0 0
        %1948 = vmatprep.subr.bf16.mxu0 0
        %1949 = vmatpush1.bf16.msra.mxu0 0
        %1950 = vmatprep.subr.bf16.mxu0 0
        %1951 = vmatpush1.bf16.msra.mxu0 0
        %1952 = vmatprep.subr.bf16.mxu0 0
        %1953 = vmatpush1.bf16.msra.mxu0 0
        %1954 = vmatprep.subr.bf16.mxu0 0
        %1955 = vmatpush1.bf16.msra.mxu0 0
        %1956 = vmatprep.subr.bf16.mxu0 0
        %1957 = vmatpush1.bf16.msra.mxu0 0
        %1958 = vmatprep.subr.bf16.mxu0 0
        %1959 = vmatpush1.bf16.msra.mxu0 0
        %1960 = vmatprep.subr.bf16.mxu0 0
        %1961 = vmatpush1.bf16.msra.mxu0 0
        %1962 = vmatprep.mubr.bf16.mxu0 0
        %1963 = vmatmul.mubr.bf16.gmra.mrb[0].mxu0 %v763
        %v1964 = vpop.f32.mrb[0].mxu0
        %v1965 = vadd.f32 0.0, %v1964
        %v1966 = vpop.f32.mrb[0].mxu0
        %v1967 = vpop.f32.mrb[0].mxu0
        %v1968 = vadd.f32 0.0, %v1967
        %v1969 = vpop.f32.mrb[0].mxu0
        %1970 = vmatprep.mubr.bf16.mxu0 0
        %1971 = vmatmul.mubr.bf16.gmra.mrb[0].mxu0 %v766
        %v1972 = vpop.f32.mrb[0].mxu0
        %v1973 = vadd.f32 0.0, %v1972
        %v1974 = vpop.f32.mrb[0].mxu0
        %v1975 = vpop.f32.mrb[0].mxu0
        %v1976 = vadd.f32 0.0, %v1975
        %v1977 = vpop.f32.mrb[0].mxu0
        %1978 = vmatprep.mubr.bf16.mxu0 0
        %1979 = vmatmul.mubr.bf16.gmra.mrb[0].mxu0 %v769
        %v1980 = vpop.f32.mrb[0].mxu0
        %v1981 = vadd.f32 0.0, %v1980
        %v1982 = vpop.f32.mrb[0].mxu0
        %v1983 = vpop.f32.mrb[0].mxu0
        %v1984 = vadd.f32 0.0, %v1983
        %v1985 = vpop.f32.mrb[0].mxu0
        %1986 = vmatprep.mubr.bf16.mxu0 0
        %1987 = vmatmul.mubr.bf16.gmra.mrb[0].mxu0 %v772
        %v1988 = vpop.f32.mrb[0].mxu0
        %v1989 = vadd.f32 0.0, %v1988
        %v1990 = vpop.f32.mrb[0].mxu0
        %v1991 = vpop.f32.mrb[0].mxu0
        %v1992 = vadd.f32 0.0, %v1991
        %v1993 = vpop.f32.mrb[0].mxu0
        %1994 = vmatprep.mubr.bf16.mxu0 0
        %1995 = vmatmul.mubr.bf16.gmra.mrb[0].mxu0 %v775
        %v1996 = vpop.f32.mrb[0].mxu0
        %v1997 = vadd.f32 0.0, %v1996
        %v1998 = vpop.f32.mrb[0].mxu0
        %v1999 = vpop.f32.mrb[0].mxu0
        %v2000 = vadd.f32 0.0, %v1999
        %v2001 = vpop.f32.mrb[0].mxu0
        %2002 = vmatprep.mubr.bf16.mxu0 0
        %2003 = vmatmul.mubr.bf16.gmra.mrb[0].mxu0 %v778
        %v2004 = vpop.f32.mrb[0].mxu0
        %v2005 = vadd.f32 0.0, %v2004
        %v2006 = vpop.f32.mrb[0].mxu0
        %v2007 = vpop.f32.mrb[0].mxu0
        %v2008 = vadd.f32 0.0, %v2007
        %v2009 = vpop.f32.mrb[0].mxu0
        %2010 = vmatprep.mubr.bf16.mxu0 0
        %2011 = vmatmul.mubr.bf16.gmra.mrb[0].mxu0 %v781
        %v2012 = vpop.f32.mrb[0].mxu0
        %v2013 = vadd.f32 0.0, %v2012
        %v2014 = vpop.f32.mrb[0].mxu0
        %v2015 = vpop.f32.mrb[0].mxu0
        %v2016 = vadd.f32 0.0, %v2015
        %v2017 = vpop.f32.mrb[0].mxu0
        %2018 = vmatprep.mubr.bf16.mxu0 0
        %2019 = vmatmul.mubr.bf16.gmra.mrb[0].mxu0 %v784
        %v2020 = vpop.f32.mrb[0].mxu0
        %v2021 = vadd.f32 0.0, %v2020
        %v2022 = vpop.f32.mrb[0].mxu0
        %v2023 = vpop.f32.mrb[0].mxu0
        %v2024 = vadd.f32 0.0, %v2023
        %v2025 = vpop.f32.mrb[0].mxu0
        %2026 = vmatprep.mubr.bf16.mxu0 0
        %2027 = vmatmul.mubr.bf16.gmra.mrb[0].mxu0 %v787
        %v2028 = vpop.f32.mrb[0].mxu0
        %v2029 = vadd.f32 0.0, %v2028
        %v2030 = vpop.f32.mrb[0].mxu0
        %v2031 = vpop.f32.mrb[0].mxu0
        %v2032 = vadd.f32 0.0, %v2031
        %v2033 = vpop.f32.mrb[0].mxu0
        %2034 = vmatprep.mubr.bf16.mxu0 0
        %2035 = vmatmul.mubr.bf16.gmra.mrb[0].mxu0 %v790
        %v2036 = vpop.f32.mrb[0].mxu0
        %v2037 = vadd.f32 0.0, %v2036
        %v2038 = vpop.f32.mrb[0].mxu0
        %v2039 = vpop.f32.mrb[0].mxu0
        %v2040 = vadd.f32 0.0, %v2039
        %v2041 = vpop.f32.mrb[0].mxu0
        %2042 = vmatprep.mubr.bf16.mxu0 0
        %2043 = vmatmul.mubr.bf16.gmra.mrb[0].mxu0 %v793
        %v2044 = vpop.f32.mrb[0].mxu0
        %v2045 = vadd.f32 0.0, %v2044
        %v2046 = vpop.f32.mrb[0].mxu0
        %v2047 = vpop.f32.mrb[0].mxu0
        %v2048 = vadd.f32 0.0, %v2047
        %v2049 = vpop.f32.mrb[0].mxu0
        %2050 = vmatprep.mubr.bf16.mxu0 0
        %2051 = vmatmul.mubr.bf16.gmra.mrb[0].mxu0 %v796
        %v2052 = vpop.f32.mrb[0].mxu0
        %v2053 = vadd.f32 0.0, %v2052
        %v2054 = vpop.f32.mrb[0].mxu0
        %v2055 = vpop.f32.mrb[0].mxu0
        %v2056 = vadd.f32 0.0, %v2055
        %v2057 = vpop.f32.mrb[0].mxu0
        %2058 = vmatprep.mubr.bf16.mxu0 0
        %2059 = vmatmul.mubr.bf16.gmra.mrb[0].mxu0 %v799
        %v2060 = vpop.f32.mrb[0].mxu0
        %v2061 = vadd.f32 0.0, %v2060
        %v2062 = vpop.f32.mrb[0].mxu0
        %v2063 = vpop.f32.mrb[0].mxu0
        %v2064 = vadd.f32 0.0, %v2063
        %v2065 = vpop.f32.mrb[0].mxu0
        %2066 = vmatprep.mubr.bf16.mxu0 0
        %2067 = vmatmul.mubr.bf16.gmra.mrb[0].mxu0 %v802
        %v2068 = vpop.f32.mrb[0].mxu0
        %v2069 = vadd.f32 0.0, %v2068
        %v2070 = vpop.f32.mrb[0].mxu0
        %v2071 = vpop.f32.mrb[0].mxu0
        %v2072 = vadd.f32 0.0, %v2071
        %v2073 = vpop.f32.mrb[0].mxu0
        %2074 = vmatprep.mubr.bf16.mxu0 0
        %2075 = vmatmul.mubr.bf16.gmra.mrb[0].mxu0 %v805
        %v2076 = vpop.f32.mrb[0].mxu0
        %v2077 = vadd.f32 0.0, %v2076
        %v2078 = vpop.f32.mrb[0].mxu0
        %v2079 = vpop.f32.mrb[0].mxu0
        %v2080 = vadd.f32 0.0, %v2079
        %v2081 = vpop.f32.mrb[0].mxu0
        %2082 = vmatprep.mubr.bf16.mxu0 0
        %2083 = vmatmul.mubr.bf16.gmra.mrb[0].mxu0 %v1925
        %v2084 = vpop.f32.mrb[0].mxu0
        %v2085 = vadd.f32 0.0, %v2084
        %v2086 = vpop.f32.mrb[0].mxu0
        %v2087 = vpop.f32.mrb[0].mxu0
        %v2088 = vadd.f32 0.0, %v2087
        %v2089 = vpop.f32.mrb[0].mxu0
        %2090 = vdwg.mxu0
        %v2091 = vadd.f32 %v1863, %v1965
        %v2092 = vadd.f32 %v1864, %v1968
        %v2093 = vadd.f32 %v1865, %v1973
        %v2094 = vadd.f32 %v1866, %v1976
        %v2095 = vadd.f32 %v1867, %v1981
        %v2096 = vadd.f32 %v1868, %v1984
        %v2097 = vadd.f32 %v1869, %v1989
        %v2098 = vadd.f32 %v1870, %v1992
        %v2099 = vadd.f32 %v1871, %v1997
        %v2100 = vadd.f32 %v1872, %v2000
        %v2101 = vadd.f32 %v1873, %v2005
        %v2102 = vadd.f32 %v1874, %v2008
        %v2103 = vadd.f32 %v1875, %v2013
        %v2104 = vadd.f32 %v1876, %v2016
        %v2105 = vadd.f32 %v1877, %v2021
        %v2106 = vadd.f32 %v1878, %v2024
        %v2107 = vadd.f32 %v1879, %v2029
        %v2108 = vadd.f32 %v1880, %v2032
        %v2109 = vadd.f32 %v1881, %v2037
        %v2110 = vadd.f32 %v1882, %v2040
        %v2111 = vadd.f32 %v1883, %v2045
        %v2112 = vadd.f32 %v1884, %v2048
        %v2113 = vadd.f32 %v1885, %v2053
        %v2114 = vadd.f32 %v1886, %v2056
        %v2115 = vadd.f32 %v1887, %v2061
        %v2116 = vadd.f32 %v1888, %v2064
        %v2117 = vadd.f32 %v1889, %v2069
        %v2118 = vadd.f32 %v1890, %v2072
        %v2119 = vadd.f32 %v1891, %v2077
        %v2120 = vadd.f32 %v1892, %v2080
        %v2121 = vadd.f32 %v1893, %v2085
        %v2122 = vadd.f32 %v1894, %v2088
        %v2124 = vrot.slane %v314, 5
        %v2125 = vrot.slane %v2124, 4
        %v2126 = vrot.slane %v315, 5
        %v2127 = vsel %vm1282, %v2125, %v2126
        %v2128 = vrot.slane %v2126, 4
        %v2129 = vrot.slane %v316, 5
        %v2130 = vsel %vm1282, %v2128, %v2129
        %s2131 = scalar_lea.vmem %s1, 10
        %v2132 = vld [vmem:[%s2131] sm:$0x3]
        %v2133 = vunpack.c.l.b16 %v2127
        %v2134 = vunpack.c.l.b16 %v2130
        %v2135 = vpack.c.b16 %v2134, %v2133
        %v2137 = vsel %vm758, %v2135, 0
        %v2140 = vsel %vm807, %v2132, 0
        %2142 = vmatprep.subr.bf16.mxu0 0
        %2143 = vmatpush1.bf16.msra.mxu0 %v2140
        %2144 = vmatprep.subr.bf16.mxu0 0
        %2145 = vmatpush1.bf16.msra.mxu0 0
        %2146 = vmatprep.subr.bf16.mxu0 0
        %2147 = vmatpush1.bf16.msra.mxu0 0
        %2148 = vmatprep.subr.bf16.mxu0 0
        %2149 = vmatpush1.bf16.msra.mxu0 0
        %2150 = vmatprep.subr.bf16.mxu0 0
        %2151 = vmatpush1.bf16.msra.mxu0 0
        %2152 = vmatprep.subr.bf16.mxu0 0
        %2153 = vmatpush1.bf16.msra.mxu0 0
        %2154 = vmatprep.subr.bf16.mxu0 0
        %2155 = vmatpush1.bf16.msra.mxu0 0
        %2156 = vmatprep.subr.bf16.mxu0 0
        %2157 = vmatpush1.bf16.msra.mxu0 0
        %2158 = vmatprep.subr.bf16.mxu0 0
        %2159 = vmatpush1.bf16.msra.mxu0 0
        %2160 = vmatprep.subr.bf16.mxu0 0
        %2161 = vmatpush1.bf16.msra.mxu0 0
        %2162 = vmatprep.subr.bf16.mxu0 0
        %2163 = vmatpush1.bf16.msra.mxu0 0
        %2164 = vmatprep.subr.bf16.mxu0 0
        %2165 = vmatpush1.bf16.msra.mxu0 0
        %2166 = vmatprep.subr.bf16.mxu0 0
        %2167 = vmatpush1.bf16.msra.mxu0 0
        %2168 = vmatprep.subr.bf16.mxu0 0
        %2169 = vmatpush1.bf16.msra.mxu0 0
        %2170 = vmatprep.subr.bf16.mxu0 0
        %2171 = vmatpush1.bf16.msra.mxu0 0
        %2172 = vmatprep.subr.bf16.mxu0 0
        %2173 = vmatpush1.bf16.msra.mxu0 0
        %2174 = vmatprep.mubr.bf16.mxu0 0
        %2175 = vmatmul.mubr.bf16.gmra.mrb[0].mxu0 %v1449
        %v2176 = vpop.f32.mrb[0].mxu0
        %v2177 = vadd.f32 0.0, %v2176
        %v2178 = vpop.f32.mrb[0].mxu0
        %v2179 = vpop.f32.mrb[0].mxu0
        %v2180 = vadd.f32 0.0, %v2179
        %v2181 = vpop.f32.mrb[0].mxu0
        %2182 = vmatprep.mubr.bf16.mxu0 0
        %2183 = vmatmul.mubr.bf16.gmra.mrb[0].mxu0 %v1452
        %v2184 = vpop.f32.mrb[0].mxu0
        %v2185 = vadd.f32 0.0, %v2184
        %v2186 = vpop.f32.mrb[0].mxu0
        %v2187 = vpop.f32.mrb[0].mxu0
        %v2188 = vadd.f32 0.0, %v2187
        %v2189 = vpop.f32.mrb[0].mxu0
        %2190 = vmatprep.mubr.bf16.mxu0 0
        %2191 = vmatmul.mubr.bf16.gmra.mrb[0].mxu0 %v1455
        %v2192 = vpop.f32.mrb[0].mxu0
        %v2193 = vadd.f32 0.0, %v2192
        %v2194 = vpop.f32.mrb[0].mxu0
        %v2195 = vpop.f32.mrb[0].mxu0
        %v2196 = vadd.f32 0.0, %v2195
        %v2197 = vpop.f32.mrb[0].mxu0
        %2198 = vmatprep.mubr.bf16.mxu0 0
        %2199 = vmatmul.mubr.bf16.gmra.mrb[0].mxu0 %v1458
        %v2200 = vpop.f32.mrb[0].mxu0
        %v2201 = vadd.f32 0.0, %v2200
        %v2202 = vpop.f32.mrb[0].mxu0
        %v2203 = vpop.f32.mrb[0].mxu0
        %v2204 = vadd.f32 0.0, %v2203
        %v2205 = vpop.f32.mrb[0].mxu0
        %2206 = vmatprep.mubr.bf16.mxu0 0
        %2207 = vmatmul.mubr.bf16.gmra.mrb[0].mxu0 %v1461
        %v2208 = vpop.f32.mrb[0].mxu0
        %v2209 = vadd.f32 0.0, %v2208
        %v2210 = vpop.f32.mrb[0].mxu0
        %v2211 = vpop.f32.mrb[0].mxu0
        %v2212 = vadd.f32 0.0, %v2211
        %v2213 = vpop.f32.mrb[0].mxu0
        %2214 = vmatprep.mubr.bf16.mxu0 0
        %2215 = vmatmul.mubr.bf16.gmra.mrb[0].mxu0 %v1464
        %v2216 = vpop.f32.mrb[0].mxu0
        %v2217 = vadd.f32 0.0, %v2216
        %v2218 = vpop.f32.mrb[0].mxu0
        %v2219 = vpop.f32.mrb[0].mxu0
        %v2220 = vadd.f32 0.0, %v2219
        %v2221 = vpop.f32.mrb[0].mxu0
        %2222 = vmatprep.mubr.bf16.mxu0 0
        %2223 = vmatmul.mubr.bf16.gmra.mrb[0].mxu0 %v1467
        %v2224 = vpop.f32.mrb[0].mxu0
        %v2225 = vadd.f32 0.0, %v2224
        %v2226 = vpop.f32.mrb[0].mxu0
        %v2227 = vpop.f32.mrb[0].mxu0
        %v2228 = vadd.f32 0.0, %v2227
        %v2229 = vpop.f32.mrb[0].mxu0
        %2230 = vmatprep.mubr.bf16.mxu0 0
        %2231 = vmatmul.mubr.bf16.gmra.mrb[0].mxu0 %v1470
        %v2232 = vpop.f32.mrb[0].mxu0
        %v2233 = vadd.f32 0.0, %v2232
        %v2234 = vpop.f32.mrb[0].mxu0
        %v2235 = vpop.f32.mrb[0].mxu0
        %v2236 = vadd.f32 0.0, %v2235
        %v2237 = vpop.f32.mrb[0].mxu0
        %2238 = vmatprep.mubr.bf16.mxu0 0
        %2239 = vmatmul.mubr.bf16.gmra.mrb[0].mxu0 %v1473
        %v2240 = vpop.f32.mrb[0].mxu0
        %v2241 = vadd.f32 0.0, %v2240
        %v2242 = vpop.f32.mrb[0].mxu0
        %v2243 = vpop.f32.mrb[0].mxu0
        %v2244 = vadd.f32 0.0, %v2243
        %v2245 = vpop.f32.mrb[0].mxu0
        %2246 = vmatprep.mubr.bf16.mxu0 0
        %2247 = vmatmul.mubr.bf16.gmra.mrb[0].mxu0 %v1476
        %v2248 = vpop.f32.mrb[0].mxu0
        %v2249 = vadd.f32 0.0, %v2248
        %v2250 = vpop.f32.mrb[0].mxu0
        %v2251 = vpop.f32.mrb[0].mxu0
        %v2252 = vadd.f32 0.0, %v2251
        %v2253 = vpop.f32.mrb[0].mxu0
        %2254 = vmatprep.mubr.bf16.mxu0 0
        %2255 = vmatmul.mubr.bf16.gmra.mrb[0].mxu0 %v1479
        %v2256 = vpop.f32.mrb[0].mxu0
        %v2257 = vadd.f32 0.0, %v2256
        %v2258 = vpop.f32.mrb[0].mxu0
        %v2259 = vpop.f32.mrb[0].mxu0
        %v2260 = vadd.f32 0.0, %v2259
        %v2261 = vpop.f32.mrb[0].mxu0
        %2262 = vmatprep.mubr.bf16.mxu0 0
        %2263 = vmatmul.mubr.bf16.gmra.mrb[0].mxu0 %v1482
        %v2264 = vpop.f32.mrb[0].mxu0
        %v2265 = vadd.f32 0.0, %v2264
        %v2266 = vpop.f32.mrb[0].mxu0
        %v2267 = vpop.f32.mrb[0].mxu0
        %v2268 = vadd.f32 0.0, %v2267
        %v2269 = vpop.f32.mrb[0].mxu0
        %2270 = vmatprep.mubr.bf16.mxu0 0
        %2271 = vmatmul.mubr.bf16.gmra.mrb[0].mxu0 %v1485
        %v2272 = vpop.f32.mrb[0].mxu0
        %v2273 = vadd.f32 0.0, %v2272
        %v2274 = vpop.f32.mrb[0].mxu0
        %v2275 = vpop.f32.mrb[0].mxu0
        %v2276 = vadd.f32 0.0, %v2275
        %v2277 = vpop.f32.mrb[0].mxu0
        %2278 = vmatprep.mubr.bf16.mxu0 0
        %2279 = vmatmul.mubr.bf16.gmra.mrb[0].mxu0 %v1488
        %v2280 = vpop.f32.mrb[0].mxu0
        %v2281 = vadd.f32 0.0, %v2280
        %v2282 = vpop.f32.mrb[0].mxu0
        %v2283 = vpop.f32.mrb[0].mxu0
        %v2284 = vadd.f32 0.0, %v2283
        %v2285 = vpop.f32.mrb[0].mxu0
        %2286 = vmatprep.mubr.bf16.mxu0 0
        %2287 = vmatmul.mubr.bf16.gmra.mrb[0].mxu0 %v1491
        %v2288 = vpop.f32.mrb[0].mxu0
        %v2289 = vadd.f32 0.0, %v2288
        %v2290 = vpop.f32.mrb[0].mxu0
        %v2291 = vpop.f32.mrb[0].mxu0
        %v2292 = vadd.f32 0.0, %v2291
        %v2293 = vpop.f32.mrb[0].mxu0
        %2294 = vmatprep.mubr.bf16.mxu0 0
        %2295 = vmatmul.mubr.bf16.gmra.mrb[0].mxu0 %v2137
        %v2296 = vpop.f32.mrb[0].mxu0
        %v2297 = vadd.f32 0.0, %v2296
        %v2298 = vpop.f32.mrb[0].mxu0
        %v2299 = vpop.f32.mrb[0].mxu0
        %v2300 = vadd.f32 0.0, %v2299
        %v2301 = vpop.f32.mrb[0].mxu0
        %2302 = vdwg.mxu0
        %v2303 = vadd.f32 %v2091, %v2177
        %v2304 = vadd.f32 %v2092, %v2180
        %v2305 = vadd.f32 %v2093, %v2185
        %v2306 = vadd.f32 %v2094, %v2188
        %v2307 = vadd.f32 %v2095, %v2193
        %v2308 = vadd.f32 %v2096, %v2196
        %v2309 = vadd.f32 %v2097, %v2201
        %v2310 = vadd.f32 %v2098, %v2204
        %v2311 = vadd.f32 %v2099, %v2209
        %v2312 = vadd.f32 %v2100, %v2212
        %v2313 = vadd.f32 %v2101, %v2217
        %v2314 = vadd.f32 %v2102, %v2220
        %v2315 = vadd.f32 %v2103, %v2225
        %v2316 = vadd.f32 %v2104, %v2228
        %v2317 = vadd.f32 %v2105, %v2233
        %v2318 = vadd.f32 %v2106, %v2236
        %v2319 = vadd.f32 %v2107, %v2241
        %v2320 = vadd.f32 %v2108, %v2244
        %v2321 = vadd.f32 %v2109, %v2249
        %v2322 = vadd.f32 %v2110, %v2252
        %v2323 = vadd.f32 %v2111, %v2257
        %v2324 = vadd.f32 %v2112, %v2260
        %v2325 = vadd.f32 %v2113, %v2265
        %v2326 = vadd.f32 %v2114, %v2268
        %v2327 = vadd.f32 %v2115, %v2273
        %v2328 = vadd.f32 %v2116, %v2276
        %v2329 = vadd.f32 %v2117, %v2281
        %v2330 = vadd.f32 %v2118, %v2284
        %v2331 = vadd.f32 %v2119, %v2289
        %v2332 = vadd.f32 %v2120, %v2292
        %v2333 = vadd.f32 %v2121, %v2297
        %v2334 = vadd.f32 %v2122, %v2300
        %s2335 = scalar_lea.vmem %s1, 12
        %v2336 = vld [vmem:[%s2335] sm:$0x3]
        %v2339 = vunpack.c.l.b16 %v317
        %v2340 = vunpack.c.l.b16 %v318
        %v2341 = vpack.c.b16 %v2340, %v2339
        %v2343 = vsel %vm758, %v2341, 0
        %v2346 = vsel %vm807, %v2336, 0
        %2348 = vmatprep.subr.bf16.mxu0 0
        %2349 = vmatpush1.bf16.msra.mxu0 %v2346
        %2350 = vmatprep.subr.bf16.mxu0 0
        %2351 = vmatpush1.bf16.msra.mxu0 0
        %2352 = vmatprep.subr.bf16.mxu0 0
        %2353 = vmatpush1.bf16.msra.mxu0 0
        %2354 = vmatprep.subr.bf16.mxu0 0
        %2355 = vmatpush1.bf16.msra.mxu0 0
        %2356 = vmatprep.subr.bf16.mxu0 0
        %2357 = vmatpush1.bf16.msra.mxu0 0
        %2358 = vmatprep.subr.bf16.mxu0 0
        %2359 = vmatpush1.bf16.msra.mxu0 0
        %2360 = vmatprep.subr.bf16.mxu0 0
        %2361 = vmatpush1.bf16.msra.mxu0 0
        %2362 = vmatprep.subr.bf16.mxu0 0
        %2363 = vmatpush1.bf16.msra.mxu0 0
        %2364 = vmatprep.subr.bf16.mxu0 0
        %2365 = vmatpush1.bf16.msra.mxu0 0
        %2366 = vmatprep.subr.bf16.mxu0 0
        %2367 = vmatpush1.bf16.msra.mxu0 0
        %2368 = vmatprep.subr.bf16.mxu0 0
        %2369 = vmatpush1.bf16.msra.mxu0 0
        %2370 = vmatprep.subr.bf16.mxu0 0
        %2371 = vmatpush1.bf16.msra.mxu0 0
        %2372 = vmatprep.subr.bf16.mxu0 0
        %2373 = vmatpush1.bf16.msra.mxu0 0
        %2374 = vmatprep.subr.bf16.mxu0 0
        %2375 = vmatpush1.bf16.msra.mxu0 0
        %2376 = vmatprep.subr.bf16.mxu0 0
        %2377 = vmatpush1.bf16.msra.mxu0 0
        %2378 = vmatprep.subr.bf16.mxu0 0
        %2379 = vmatpush1.bf16.msra.mxu0 0
        %2380 = vmatprep.mubr.bf16.mxu0 0
        %2381 = vmatmul.mubr.bf16.gmra.mrb[0].mxu0 %v1059
        %v2382 = vpop.f32.mrb[0].mxu0
        %v2383 = vadd.f32 0.0, %v2382
        %v2384 = vpop.f32.mrb[0].mxu0
        %v2385 = vpop.f32.mrb[0].mxu0
        %v2386 = vadd.f32 0.0, %v2385
        %v2387 = vpop.f32.mrb[0].mxu0
        %2388 = vmatprep.mubr.bf16.mxu0 0
        %2389 = vmatmul.mubr.bf16.gmra.mrb[0].mxu0 %v1062
        %v2390 = vpop.f32.mrb[0].mxu0
        %v2391 = vadd.f32 0.0, %v2390
        %v2392 = vpop.f32.mrb[0].mxu0
        %v2393 = vpop.f32.mrb[0].mxu0
        %v2394 = vadd.f32 0.0, %v2393
        %v2395 = vpop.f32.mrb[0].mxu0
        %2396 = vmatprep.mubr.bf16.mxu0 0
        %2397 = vmatmul.mubr.bf16.gmra.mrb[0].mxu0 %v1065
        %v2398 = vpop.f32.mrb[0].mxu0
        %v2399 = vadd.f32 0.0, %v2398
        %v2400 = vpop.f32.mrb[0].mxu0
        %v2401 = vpop.f32.mrb[0].mxu0
        %v2402 = vadd.f32 0.0, %v2401
        %v2403 = vpop.f32.mrb[0].mxu0
        %2404 = vmatprep.mubr.bf16.mxu0 0
        %2405 = vmatmul.mubr.bf16.gmra.mrb[0].mxu0 %v1068
        %v2406 = vpop.f32.mrb[0].mxu0
        %v2407 = vadd.f32 0.0, %v2406
        %v2408 = vpop.f32.mrb[0].mxu0
        %v2409 = vpop.f32.mrb[0].mxu0
        %v2410 = vadd.f32 0.0, %v2409
        %v2411 = vpop.f32.mrb[0].mxu0
        %2412 = vmatprep.mubr.bf16.mxu0 0
        %2413 = vmatmul.mubr.bf16.gmra.mrb[0].mxu0 %v1071
        %v2414 = vpop.f32.mrb[0].mxu0
        %v2415 = vadd.f32 0.0, %v2414
        %v2416 = vpop.f32.mrb[0].mxu0
        %v2417 = vpop.f32.mrb[0].mxu0
        %v2418 = vadd.f32 0.0, %v2417
        %v2419 = vpop.f32.mrb[0].mxu0
        %2420 = vmatprep.mubr.bf16.mxu0 0
        %2421 = vmatmul.mubr.bf16.gmra.mrb[0].mxu0 %v1074
        %v2422 = vpop.f32.mrb[0].mxu0
        %v2423 = vadd.f32 0.0, %v2422
        %v2424 = vpop.f32.mrb[0].mxu0
        %v2425 = vpop.f32.mrb[0].mxu0
        %v2426 = vadd.f32 0.0, %v2425
        %v2427 = vpop.f32.mrb[0].mxu0
        %2428 = vmatprep.mubr.bf16.mxu0 0
        %2429 = vmatmul.mubr.bf16.gmra.mrb[0].mxu0 %v1077
        %v2430 = vpop.f32.mrb[0].mxu0
        %v2431 = vadd.f32 0.0, %v2430
        %v2432 = vpop.f32.mrb[0].mxu0
        %v2433 = vpop.f32.mrb[0].mxu0
        %v2434 = vadd.f32 0.0, %v2433
        %v2435 = vpop.f32.mrb[0].mxu0
        %2436 = vmatprep.mubr.bf16.mxu0 0
        %2437 = vmatmul.mubr.bf16.gmra.mrb[0].mxu0 %v1080
        %v2438 = vpop.f32.mrb[0].mxu0
        %v2439 = vadd.f32 0.0, %v2438
        %v2440 = vpop.f32.mrb[0].mxu0
        %v2441 = vpop.f32.mrb[0].mxu0
        %v2442 = vadd.f32 0.0, %v2441
        %v2443 = vpop.f32.mrb[0].mxu0
        %2444 = vmatprep.mubr.bf16.mxu0 0
        %2445 = vmatmul.mubr.bf16.gmra.mrb[0].mxu0 %v1083
        %v2446 = vpop.f32.mrb[0].mxu0
        %v2447 = vadd.f32 0.0, %v2446
        %v2448 = vpop.f32.mrb[0].mxu0
        %v2449 = vpop.f32.mrb[0].mxu0
        %v2450 = vadd.f32 0.0, %v2449
        %v2451 = vpop.f32.mrb[0].mxu0
        %2452 = vmatprep.mubr.bf16.mxu0 0
        %2453 = vmatmul.mubr.bf16.gmra.mrb[0].mxu0 %v1086
        %v2454 = vpop.f32.mrb[0].mxu0
        %v2455 = vadd.f32 0.0, %v2454
        %v2456 = vpop.f32.mrb[0].mxu0
        %v2457 = vpop.f32.mrb[0].mxu0
        %v2458 = vadd.f32 0.0, %v2457
        %v2459 = vpop.f32.mrb[0].mxu0
        %2460 = vmatprep.mubr.bf16.mxu0 0
        %2461 = vmatmul.mubr.bf16.gmra.mrb[0].mxu0 %v1089
        %v2462 = vpop.f32.mrb[0].mxu0
        %v2463 = vadd.f32 0.0, %v2462
        %v2464 = vpop.f32.mrb[0].mxu0
        %v2465 = vpop.f32.mrb[0].mxu0
        %v2466 = vadd.f32 0.0, %v2465
        %v2467 = vpop.f32.mrb[0].mxu0
        %2468 = vmatprep.mubr.bf16.mxu0 0
        %2469 = vmatmul.mubr.bf16.gmra.mrb[0].mxu0 %v1092
        %v2470 = vpop.f32.mrb[0].mxu0
        %v2471 = vadd.f32 0.0, %v2470
        %v2472 = vpop.f32.mrb[0].mxu0
        %v2473 = vpop.f32.mrb[0].mxu0
        %v2474 = vadd.f32 0.0, %v2473
        %v2475 = vpop.f32.mrb[0].mxu0
        %2476 = vmatprep.mubr.bf16.mxu0 0
        %2477 = vmatmul.mubr.bf16.gmra.mrb[0].mxu0 %v1095
        %v2478 = vpop.f32.mrb[0].mxu0
        %v2479 = vadd.f32 0.0, %v2478
        %v2480 = vpop.f32.mrb[0].mxu0
        %v2481 = vpop.f32.mrb[0].mxu0
        %v2482 = vadd.f32 0.0, %v2481
        %v2483 = vpop.f32.mrb[0].mxu0
        %2484 = vmatprep.mubr.bf16.mxu0 0
        %2485 = vmatmul.mubr.bf16.gmra.mrb[0].mxu0 %v1098
        %v2486 = vpop.f32.mrb[0].mxu0
        %v2487 = vadd.f32 0.0, %v2486
        %v2488 = vpop.f32.mrb[0].mxu0
        %v2489 = vpop.f32.mrb[0].mxu0
        %v2490 = vadd.f32 0.0, %v2489
        %v2491 = vpop.f32.mrb[0].mxu0
        %2492 = vmatprep.mubr.bf16.mxu0 0
        %2493 = vmatmul.mubr.bf16.gmra.mrb[0].mxu0 %v1697
        %v2494 = vpop.f32.mrb[0].mxu0
        %v2495 = vadd.f32 0.0, %v2494
        %v2496 = vpop.f32.mrb[0].mxu0
        %v2497 = vpop.f32.mrb[0].mxu0
        %v2498 = vadd.f32 0.0, %v2497
        %v2499 = vpop.f32.mrb[0].mxu0
        %2500 = vmatprep.mubr.bf16.mxu0 0
        %2501 = vmatmul.mubr.bf16.gmra.mrb[0].mxu0 %v2343
        %v2502 = vpop.f32.mrb[0].mxu0
        %v2503 = vadd.f32 0.0, %v2502
        %v2504 = vpop.f32.mrb[0].mxu0
        %v2505 = vpop.f32.mrb[0].mxu0
        %v2506 = vadd.f32 0.0, %v2505
        %v2507 = vpop.f32.mrb[0].mxu0
        %2508 = vdwg.mxu0
        %v2509 = vadd.f32 %v2303, %v2383
        %v2510 = vadd.f32 %v2304, %v2386
        %v2511 = vadd.f32 %v2305, %v2391
        %v2512 = vadd.f32 %v2306, %v2394
        %v2513 = vadd.f32 %v2307, %v2399
        %v2514 = vadd.f32 %v2308, %v2402
        %v2515 = vadd.f32 %v2309, %v2407
        %v2516 = vadd.f32 %v2310, %v2410
        %v2517 = vadd.f32 %v2311, %v2415
        %v2518 = vadd.f32 %v2312, %v2418
        %v2519 = vadd.f32 %v2313, %v2423
        %v2520 = vadd.f32 %v2314, %v2426
        %v2521 = vadd.f32 %v2315, %v2431
        %v2522 = vadd.f32 %v2316, %v2434
        %v2523 = vadd.f32 %v2317, %v2439
        %v2524 = vadd.f32 %v2318, %v2442
        %v2525 = vadd.f32 %v2319, %v2447
        %v2526 = vadd.f32 %v2320, %v2450
        %v2527 = vadd.f32 %v2321, %v2455
        %v2528 = vadd.f32 %v2322, %v2458
        %v2529 = vadd.f32 %v2323, %v2463
        %v2530 = vadd.f32 %v2324, %v2466
        %v2531 = vadd.f32 %v2325, %v2471
        %v2532 = vadd.f32 %v2326, %v2474
        %v2533 = vadd.f32 %v2327, %v2479
        %v2534 = vadd.f32 %v2328, %v2482
        %v2535 = vadd.f32 %v2329, %v2487
        %v2536 = vadd.f32 %v2330, %v2490
        %v2537 = vadd.f32 %v2331, %v2495
        %v2538 = vadd.f32 %v2332, %v2498
        %v2539 = vadd.f32 %v2333, %v2503
        %v2540 = vadd.f32 %v2334, %v2506
        %v2542 = vshrl.u32 %v317, 16
        %v2544 = vrot.slane %v2542, 4
        %v2545 = vshll.u32 %v317, 16
        %v2547 = vrot.slane %v2545, 5
        %v2548 = vor.u32 %v2544, %v2547
        %v2549 = vrot.slane %v2548, 4
        %v2551 = vshll.u32 %v318, 16
        %v2553 = vrot.slane %v2551, 5
        %v2554 = vsel %vm323, %v2549, %v2553
        %v2555 = vshrl.u32 %v318, 16
        %v2557 = vrot.slane %v2555, 4
        %v2558 = vor.u32 %v2557, %v2553
        %v2559 = vrot.slane %v2558, 4
        %v2561 = vshll.u32 %v319, 16
        %v2563 = vrot.slane %v2561, 5
        %v2564 = vsel %vm323, %v2559, %v2563
        %s2565 = scalar_lea.vmem %s1, 14
        %v2566 = vld [vmem:[%s2565] sm:$0x3]
        %v2567 = vunpack.c.l.b16 %v2554
        %v2568 = vunpack.c.l.b16 %v2564
        %v2569 = vpack.c.b16 %v2568, %v2567
        %v2571 = vsel %vm758, %v2569, 0
        %v2574 = vsel %vm807, %v2566, 0
        %2576 = vmatprep.subr.bf16.mxu0 0
        %2577 = vmatpush1.bf16.msra.mxu0 %v2574
        %2578 = vmatprep.subr.bf16.mxu0 0
        %2579 = vmatpush1.bf16.msra.mxu0 0
        %2580 = vmatprep.subr.bf16.mxu0 0
        %2581 = vmatpush1.bf16.msra.mxu0 0
        %2582 = vmatprep.subr.bf16.mxu0 0
        %2583 = vmatpush1.bf16.msra.mxu0 0
        %2584 = vmatprep.subr.bf16.mxu0 0
        %2585 = vmatpush1.bf16.msra.mxu0 0
        %2586 = vmatprep.subr.bf16.mxu0 0
        %2587 = vmatpush1.bf16.msra.mxu0 0
        %2588 = vmatprep.subr.bf16.mxu0 0
        %2589 = vmatpush1.bf16.msra.mxu0 0
        %2590 = vmatprep.subr.bf16.mxu0 0
        %2591 = vmatpush1.bf16.msra.mxu0 0
        %2592 = vmatprep.subr.bf16.mxu0 0
        %2593 = vmatpush1.bf16.msra.mxu0 0
        %2594 = vmatprep.subr.bf16.mxu0 0
        %2595 = vmatpush1.bf16.msra.mxu0 0
        %2596 = vmatprep.subr.bf16.mxu0 0
        %2597 = vmatpush1.bf16.msra.mxu0 0
        %2598 = vmatprep.subr.bf16.mxu0 0
        %2599 = vmatpush1.bf16.msra.mxu0 0
        %2600 = vmatprep.subr.bf16.mxu0 0
        %2601 = vmatpush1.bf16.msra.mxu0 0
        %2602 = vmatprep.subr.bf16.mxu0 0
        %2603 = vmatpush1.bf16.msra.mxu0 0
        %2604 = vmatprep.subr.bf16.mxu0 0
        %2605 = vmatpush1.bf16.msra.mxu0 0
        %2606 = vmatprep.subr.bf16.mxu0 0
        %2607 = vmatpush1.bf16.msra.mxu0 0
        %2608 = vmatprep.mubr.bf16.mxu0 0
        %2609 = vmatmul.mubr.bf16.gmra.mrb[0].mxu0 %v766
        %v2610 = vpop.f32.mrb[0].mxu0
        %v2611 = vadd.f32 0.0, %v2610
        %v2612 = vpop.f32.mrb[0].mxu0
        %v2613 = vpop.f32.mrb[0].mxu0
        %v2614 = vadd.f32 0.0, %v2613
        %v2615 = vpop.f32.mrb[0].mxu0
        %2616 = vmatprep.mubr.bf16.mxu0 0
        %2617 = vmatmul.mubr.bf16.gmra.mrb[0].mxu0 %v769
        %v2618 = vpop.f32.mrb[0].mxu0
        %v2619 = vadd.f32 0.0, %v2618
        %v2620 = vpop.f32.mrb[0].mxu0
        %v2621 = vpop.f32.mrb[0].mxu0
        %v2622 = vadd.f32 0.0, %v2621
        %v2623 = vpop.f32.mrb[0].mxu0
        %2624 = vmatprep.mubr.bf16.mxu0 0
        %2625 = vmatmul.mubr.bf16.gmra.mrb[0].mxu0 %v772
        %v2626 = vpop.f32.mrb[0].mxu0
        %v2627 = vadd.f32 0.0, %v2626
        %v2628 = vpop.f32.mrb[0].mxu0
        %v2629 = vpop.f32.mrb[0].mxu0
        %v2630 = vadd.f32 0.0, %v2629
        %v2631 = vpop.f32.mrb[0].mxu0
        %2632 = vmatprep.mubr.bf16.mxu0 0
        %2633 = vmatmul.mubr.bf16.gmra.mrb[0].mxu0 %v775
        %v2634 = vpop.f32.mrb[0].mxu0
        %v2635 = vadd.f32 0.0, %v2634
        %v2636 = vpop.f32.mrb[0].mxu0
        %v2637 = vpop.f32.mrb[0].mxu0
        %v2638 = vadd.f32 0.0, %v2637
        %v2639 = vpop.f32.mrb[0].mxu0
        %2640 = vmatprep.mubr.bf16.mxu0 0
        %2641 = vmatmul.mubr.bf16.gmra.mrb[0].mxu0 %v778
        %v2642 = vpop.f32.mrb[0].mxu0
        %v2643 = vadd.f32 0.0, %v2642
        %v2644 = vpop.f32.mrb[0].mxu0
        %v2645 = vpop.f32.mrb[0].mxu0
        %v2646 = vadd.f32 0.0, %v2645
        %v2647 = vpop.f32.mrb[0].mxu0
        %2648 = vmatprep.mubr.bf16.mxu0 0
        %2649 = vmatmul.mubr.bf16.gmra.mrb[0].mxu0 %v781
        %v2650 = vpop.f32.mrb[0].mxu0
        %v2651 = vadd.f32 0.0, %v2650
        %v2652 = vpop.f32.mrb[0].mxu0
        %v2653 = vpop.f32.mrb[0].mxu0
        %v2654 = vadd.f32 0.0, %v2653
        %v2655 = vpop.f32.mrb[0].mxu0
        %2656 = vmatprep.mubr.bf16.mxu0 0
        %2657 = vmatmul.mubr.bf16.gmra.mrb[0].mxu0 %v784
        %v2658 = vpop.f32.mrb[0].mxu0
        %v2659 = vadd.f32 0.0, %v2658
        %v2660 = vpop.f32.mrb[0].mxu0
        %v2661 = vpop.f32.mrb[0].mxu0
        %v2662 = vadd.f32 0.0, %v2661
        %v2663 = vpop.f32.mrb[0].mxu0
        %2664 = vmatprep.mubr.bf16.mxu0 0
        %2665 = vmatmul.mubr.bf16.gmra.mrb[0].mxu0 %v787
        %v2666 = vpop.f32.mrb[0].mxu0
        %v2667 = vadd.f32 0.0, %v2666
        %v2668 = vpop.f32.mrb[0].mxu0
        %v2669 = vpop.f32.mrb[0].mxu0
        %v2670 = vadd.f32 0.0, %v2669
        %v2671 = vpop.f32.mrb[0].mxu0
        %2672 = vmatprep.mubr.bf16.mxu0 0
        %2673 = vmatmul.mubr.bf16.gmra.mrb[0].mxu0 %v790
        %v2674 = vpop.f32.mrb[0].mxu0
        %v2675 = vadd.f32 0.0, %v2674
        %v2676 = vpop.f32.mrb[0].mxu0
        %v2677 = vpop.f32.mrb[0].mxu0
        %v2678 = vadd.f32 0.0, %v2677
        %v2679 = vpop.f32.mrb[0].mxu0
        %2680 = vmatprep.mubr.bf16.mxu0 0
        %2681 = vmatmul.mubr.bf16.gmra.mrb[0].mxu0 %v793
        %v2682 = vpop.f32.mrb[0].mxu0
        %v2683 = vadd.f32 0.0, %v2682
        %v2684 = vpop.f32.mrb[0].mxu0
        %v2685 = vpop.f32.mrb[0].mxu0
        %v2686 = vadd.f32 0.0, %v2685
        %v2687 = vpop.f32.mrb[0].mxu0
        %2688 = vmatprep.mubr.bf16.mxu0 0
        %2689 = vmatmul.mubr.bf16.gmra.mrb[0].mxu0 %v796
        %v2690 = vpop.f32.mrb[0].mxu0
        %v2691 = vadd.f32 0.0, %v2690
        %v2692 = vpop.f32.mrb[0].mxu0
        %v2693 = vpop.f32.mrb[0].mxu0
        %v2694 = vadd.f32 0.0, %v2693
        %v2695 = vpop.f32.mrb[0].mxu0
        %2696 = vmatprep.mubr.bf16.mxu0 0
        %2697 = vmatmul.mubr.bf16.gmra.mrb[0].mxu0 %v799
        %v2698 = vpop.f32.mrb[0].mxu0
        %v2699 = vadd.f32 0.0, %v2698
        %v2700 = vpop.f32.mrb[0].mxu0
        %v2701 = vpop.f32.mrb[0].mxu0
        %v2702 = vadd.f32 0.0, %v2701
        %v2703 = vpop.f32.mrb[0].mxu0
        %2704 = vmatprep.mubr.bf16.mxu0 0
        %2705 = vmatmul.mubr.bf16.gmra.mrb[0].mxu0 %v802
        %v2706 = vpop.f32.mrb[0].mxu0
        %v2707 = vadd.f32 0.0, %v2706
        %v2708 = vpop.f32.mrb[0].mxu0
        %v2709 = vpop.f32.mrb[0].mxu0
        %v2710 = vadd.f32 0.0, %v2709
        %v2711 = vpop.f32.mrb[0].mxu0
        %2712 = vmatprep.mubr.bf16.mxu0 0
        %2713 = vmatmul.mubr.bf16.gmra.mrb[0].mxu0 %v805
        %v2714 = vpop.f32.mrb[0].mxu0
        %v2715 = vadd.f32 0.0, %v2714
        %v2716 = vpop.f32.mrb[0].mxu0
        %v2717 = vpop.f32.mrb[0].mxu0
        %v2718 = vadd.f32 0.0, %v2717
        %v2719 = vpop.f32.mrb[0].mxu0
        %2720 = vmatprep.mubr.bf16.mxu0 0
        %2721 = vmatmul.mubr.bf16.gmra.mrb[0].mxu0 %v1925
        %v2722 = vpop.f32.mrb[0].mxu0
        %v2723 = vadd.f32 0.0, %v2722
        %v2724 = vpop.f32.mrb[0].mxu0
        %v2725 = vpop.f32.mrb[0].mxu0
        %v2726 = vadd.f32 0.0, %v2725
        %v2727 = vpop.f32.mrb[0].mxu0
        %2728 = vmatprep.mubr.bf16.mxu0 0
        %2729 = vmatmul.mubr.bf16.gmra.mrb[0].mxu0 %v2571
        %v2730 = vpop.f32.mrb[0].mxu0
        %v2731 = vadd.f32 0.0, %v2730
        %v2732 = vpop.f32.mrb[0].mxu0
        %v2733 = vpop.f32.mrb[0].mxu0
        %v2734 = vadd.f32 0.0, %v2733
        %v2735 = vpop.f32.mrb[0].mxu0
        %2736 = vdwg.mxu0
        %v2737 = vadd.f32 %v2509, %v2611
        %v2738 = vadd.f32 %v2510, %v2614
        %v2739 = vadd.f32 %v2511, %v2619
        %v2740 = vadd.f32 %v2512, %v2622
        %v2741 = vadd.f32 %v2513, %v2627
        %v2742 = vadd.f32 %v2514, %v2630
        %v2743 = vadd.f32 %v2515, %v2635
        %v2744 = vadd.f32 %v2516, %v2638
        %v2745 = vadd.f32 %v2517, %v2643
        %v2746 = vadd.f32 %v2518, %v2646
        %v2747 = vadd.f32 %v2519, %v2651
        %v2748 = vadd.f32 %v2520, %v2654
        %v2749 = vadd.f32 %v2521, %v2659
        %v2750 = vadd.f32 %v2522, %v2662
        %v2751 = vadd.f32 %v2523, %v2667
        %v2752 = vadd.f32 %v2524, %v2670
        %v2753 = vadd.f32 %v2525, %v2675
        %v2754 = vadd.f32 %v2526, %v2678
        %v2755 = vadd.f32 %v2527, %v2683
        %v2756 = vadd.f32 %v2528, %v2686
        %v2757 = vadd.f32 %v2529, %v2691
        %v2758 = vadd.f32 %v2530, %v2694
        %v2759 = vadd.f32 %v2531, %v2699
        %v2760 = vadd.f32 %v2532, %v2702
        %v2761 = vadd.f32 %v2533, %v2707
        %v2762 = vadd.f32 %v2534, %v2710
        %v2763 = vadd.f32 %v2535, %v2715
        %v2764 = vadd.f32 %v2536, %v2718
        %v2765 = vadd.f32 %v2537, %v2723
        %v2766 = vadd.f32 %v2538, %v2726
        %v2767 = vadd.f32 %v2539, %v2731
        %v2768 = vadd.f32 %v2540, %v2734
        %v2770 = vrot.slane %v317, 5
        %v2771 = vrot.slane %v2770, 4
        %v2772 = vrot.slane %v318, 5
        %v2773 = vsel %vm1282, %v2771, %v2772
        %v2774 = vrot.slane %v2772, 4
        %v2775 = vrot.slane %v319, 5
        %v2776 = vsel %vm1282, %v2774, %v2775
        %s2777 = scalar_lea.vmem %s1, 16
        %v2778 = vld [vmem:[%s2777] sm:$0x3]
        %v2779 = vunpack.c.l.b16 %v2773
        %v2780 = vunpack.c.l.b16 %v2776
        %v2781 = vpack.c.b16 %v2780, %v2779
        %v2783 = vsel %vm758, %v2781, 0
        %v2786 = vsel %vm807, %v2778, 0
        %2788 = vmatprep.subr.bf16.mxu0 0
        %2789 = vmatpush1.bf16.msra.mxu0 %v2786
        %2790 = vmatprep.subr.bf16.mxu0 0
        %2791 = vmatpush1.bf16.msra.mxu0 0
        %2792 = vmatprep.subr.bf16.mxu0 0
        %2793 = vmatpush1.bf16.msra.mxu0 0
        %2794 = vmatprep.subr.bf16.mxu0 0
        %2795 = vmatpush1.bf16.msra.mxu0 0
        %2796 = vmatprep.subr.bf16.mxu0 0
        %2797 = vmatpush1.bf16.msra.mxu0 0
        %2798 = vmatprep.subr.bf16.mxu0 0
        %2799 = vmatpush1.bf16.msra.mxu0 0
        %2800 = vmatprep.subr.bf16.mxu0 0
        %2801 = vmatpush1.bf16.msra.mxu0 0
        %2802 = vmatprep.subr.bf16.mxu0 0
        %2803 = vmatpush1.bf16.msra.mxu0 0
        %2804 = vmatprep.subr.bf16.mxu0 0
        %2805 = vmatpush1.bf16.msra.mxu0 0
        %2806 = vmatprep.subr.bf16.mxu0 0
        %2807 = vmatpush1.bf16.msra.mxu0 0
        %2808 = vmatprep.subr.bf16.mxu0 0
        %2809 = vmatpush1.bf16.msra.mxu0 0
        %2810 = vmatprep.subr.bf16.mxu0 0
        %2811 = vmatpush1.bf16.msra.mxu0 0
        %2812 = vmatprep.subr.bf16.mxu0 0
        %2813 = vmatpush1.bf16.msra.mxu0 0
        %2814 = vmatprep.subr.bf16.mxu0 0
        %2815 = vmatpush1.bf16.msra.mxu0 0
        %2816 = vmatprep.subr.bf16.mxu0 0
        %2817 = vmatpush1.bf16.msra.mxu0 0
        %2818 = vmatprep.subr.bf16.mxu0 0
        %2819 = vmatpush1.bf16.msra.mxu0 0
        %2820 = vmatprep.mubr.bf16.mxu0 0
        %2821 = vmatmul.mubr.bf16.gmra.mrb[0].mxu0 %v1452
        %v2822 = vpop.f32.mrb[0].mxu0
        %v2823 = vadd.f32 0.0, %v2822
        %v2824 = vpop.f32.mrb[0].mxu0
        %v2825 = vpop.f32.mrb[0].mxu0
        %v2826 = vadd.f32 0.0, %v2825
        %v2827 = vpop.f32.mrb[0].mxu0
        %2828 = vmatprep.mubr.bf16.mxu0 0
        %2829 = vmatmul.mubr.bf16.gmra.mrb[0].mxu0 %v1455
        %v2830 = vpop.f32.mrb[0].mxu0
        %v2831 = vadd.f32 0.0, %v2830
        %v2832 = vpop.f32.mrb[0].mxu0
        %v2833 = vpop.f32.mrb[0].mxu0
        %v2834 = vadd.f32 0.0, %v2833
        %v2835 = vpop.f32.mrb[0].mxu0
        %2836 = vmatprep.mubr.bf16.mxu0 0
        %2837 = vmatmul.mubr.bf16.gmra.mrb[0].mxu0 %v1458
        %v2838 = vpop.f32.mrb[0].mxu0
        %v2839 = vadd.f32 0.0, %v2838
        %v2840 = vpop.f32.mrb[0].mxu0
        %v2841 = vpop.f32.mrb[0].mxu0
        %v2842 = vadd.f32 0.0, %v2841
        %v2843 = vpop.f32.mrb[0].mxu0
        %2844 = vmatprep.mubr.bf16.mxu0 0
        %2845 = vmatmul.mubr.bf16.gmra.mrb[0].mxu0 %v1461
        %v2846 = vpop.f32.mrb[0].mxu0
        %v2847 = vadd.f32 0.0, %v2846
        %v2848 = vpop.f32.mrb[0].mxu0
        %v2849 = vpop.f32.mrb[0].mxu0
        %v2850 = vadd.f32 0.0, %v2849
        %v2851 = vpop.f32.mrb[0].mxu0
        %2852 = vmatprep.mubr.bf16.mxu0 0
        %2853 = vmatmul.mubr.bf16.gmra.mrb[0].mxu0 %v1464
        %v2854 = vpop.f32.mrb[0].mxu0
        %v2855 = vadd.f32 0.0, %v2854
        %v2856 = vpop.f32.mrb[0].mxu0
        %v2857 = vpop.f32.mrb[0].mxu0
        %v2858 = vadd.f32 0.0, %v2857
        %v2859 = vpop.f32.mrb[0].mxu0
        %2860 = vmatprep.mubr.bf16.mxu0 0
        %2861 = vmatmul.mubr.bf16.gmra.mrb[0].mxu0 %v1467
        %v2862 = vpop.f32.mrb[0].mxu0
        %v2863 = vadd.f32 0.0, %v2862
        %v2864 = vpop.f32.mrb[0].mxu0
        %v2865 = vpop.f32.mrb[0].mxu0
        %v2866 = vadd.f32 0.0, %v2865
        %v2867 = vpop.f32.mrb[0].mxu0
        %2868 = vmatprep.mubr.bf16.mxu0 0
        %2869 = vmatmul.mubr.bf16.gmra.mrb[0].mxu0 %v1470
        %v2870 = vpop.f32.mrb[0].mxu0
        %v2871 = vadd.f32 0.0, %v2870
        %v2872 = vpop.f32.mrb[0].mxu0
        %v2873 = vpop.f32.mrb[0].mxu0
        %v2874 = vadd.f32 0.0, %v2873
        %v2875 = vpop.f32.mrb[0].mxu0
        %2876 = vmatprep.mubr.bf16.mxu0 0
        %2877 = vmatmul.mubr.bf16.gmra.mrb[0].mxu0 %v1473
        %v2878 = vpop.f32.mrb[0].mxu0
        %v2879 = vadd.f32 0.0, %v2878
        %v2880 = vpop.f32.mrb[0].mxu0
        %v2881 = vpop.f32.mrb[0].mxu0
        %v2882 = vadd.f32 0.0, %v2881
        %v2883 = vpop.f32.mrb[0].mxu0
        %2884 = vmatprep.mubr.bf16.mxu0 0
        %2885 = vmatmul.mubr.bf16.gmra.mrb[0].mxu0 %v1476
        %v2886 = vpop.f32.mrb[0].mxu0
        %v2887 = vadd.f32 0.0, %v2886
        %v2888 = vpop.f32.mrb[0].mxu0
        %v2889 = vpop.f32.mrb[0].mxu0
        %v2890 = vadd.f32 0.0, %v2889
        %v2891 = vpop.f32.mrb[0].mxu0
        %2892 = vmatprep.mubr.bf16.mxu0 0
        %2893 = vmatmul.mubr.bf16.gmra.mrb[0].mxu0 %v1479
        %v2894 = vpop.f32.mrb[0].mxu0
        %v2895 = vadd.f32 0.0, %v2894
        %v2896 = vpop.f32.mrb[0].mxu0
        %v2897 = vpop.f32.mrb[0].mxu0
        %v2898 = vadd.f32 0.0, %v2897
        %v2899 = vpop.f32.mrb[0].mxu0
        %2900 = vmatprep.mubr.bf16.mxu0 0
        %2901 = vmatmul.mubr.bf16.gmra.mrb[0].mxu0 %v1482
        %v2902 = vpop.f32.mrb[0].mxu0
        %v2903 = vadd.f32 0.0, %v2902
        %v2904 = vpop.f32.mrb[0].mxu0
        %v2905 = vpop.f32.mrb[0].mxu0
        %v2906 = vadd.f32 0.0, %v2905
        %v2907 = vpop.f32.mrb[0].mxu0
        %2908 = vmatprep.mubr.bf16.mxu0 0
        %2909 = vmatmul.mubr.bf16.gmra.mrb[0].mxu0 %v1485
        %v2910 = vpop.f32.mrb[0].mxu0
        %v2911 = vadd.f32 0.0, %v2910
        %v2912 = vpop.f32.mrb[0].mxu0
        %v2913 = vpop.f32.mrb[0].mxu0
        %v2914 = vadd.f32 0.0, %v2913
        %v2915 = vpop.f32.mrb[0].mxu0
        %2916 = vmatprep.mubr.bf16.mxu0 0
        %2917 = vmatmul.mubr.bf16.gmra.mrb[0].mxu0 %v1488
        %v2918 = vpop.f32.mrb[0].mxu0
        %v2919 = vadd.f32 0.0, %v2918
        %v2920 = vpop.f32.mrb[0].mxu0
        %v2921 = vpop.f32.mrb[0].mxu0
        %v2922 = vadd.f32 0.0, %v2921
        %v2923 = vpop.f32.mrb[0].mxu0
        %2924 = vmatprep.mubr.bf16.mxu0 0
        %2925 = vmatmul.mubr.bf16.gmra.mrb[0].mxu0 %v1491
        %v2926 = vpop.f32.mrb[0].mxu0
        %v2927 = vadd.f32 0.0, %v2926
        %v2928 = vpop.f32.mrb[0].mxu0
        %v2929 = vpop.f32.mrb[0].mxu0
        %v2930 = vadd.f32 0.0, %v2929
        %v2931 = vpop.f32.mrb[0].mxu0
        %2932 = vmatprep.mubr.bf16.mxu0 0
        %2933 = vmatmul.mubr.bf16.gmra.mrb[0].mxu0 %v2137
        %v2934 = vpop.f32.mrb[0].mxu0
        %v2935 = vadd.f32 0.0, %v2934
        %v2936 = vpop.f32.mrb[0].mxu0
        %v2937 = vpop.f32.mrb[0].mxu0
        %v2938 = vadd.f32 0.0, %v2937
        %v2939 = vpop.f32.mrb[0].mxu0
        %2940 = vmatprep.mubr.bf16.mxu0 0
        %2941 = vmatmul.mubr.bf16.gmra.mrb[0].mxu0 %v2783
        %v2942 = vpop.f32.mrb[0].mxu0
        %v2943 = vadd.f32 0.0, %v2942
        %v2944 = vpop.f32.mrb[0].mxu0
        %v2945 = vpop.f32.mrb[0].mxu0
        %v2946 = vadd.f32 0.0, %v2945
        %v2947 = vpop.f32.mrb[0].mxu0
        %2948 = vdwg.mxu0
        %v2949 = vadd.f32 %v2737, %v2823
        %v2950 = vadd.f32 %v2738, %v2826
        %v2951 = vadd.f32 %v2739, %v2831
        %v2952 = vadd.f32 %v2740, %v2834
        %v2953 = vadd.f32 %v2741, %v2839
        %v2954 = vadd.f32 %v2742, %v2842
        %v2955 = vadd.f32 %v2743, %v2847
        %v2956 = vadd.f32 %v2744, %v2850
        %v2957 = vadd.f32 %v2745, %v2855
        %v2958 = vadd.f32 %v2746, %v2858
        %v2959 = vadd.f32 %v2747, %v2863
        %v2960 = vadd.f32 %v2748, %v2866
        %v2961 = vadd.f32 %v2749, %v2871
        %v2962 = vadd.f32 %v2750, %v2874
        %v2963 = vadd.f32 %v2751, %v2879
        %v2964 = vadd.f32 %v2752, %v2882
        %v2965 = vadd.f32 %v2753, %v2887
        %v2966 = vadd.f32 %v2754, %v2890
        %v2967 = vadd.f32 %v2755, %v2895
        %v2968 = vadd.f32 %v2756, %v2898
        %v2969 = vadd.f32 %v2757, %v2903
        %v2970 = vadd.f32 %v2758, %v2906
        %v2971 = vadd.f32 %v2759, %v2911
        %v2972 = vadd.f32 %v2760, %v2914
        %v2973 = vadd.f32 %v2761, %v2919
        %v2974 = vadd.f32 %v2762, %v2922
        %v2975 = vadd.f32 %v2763, %v2927
        %v2976 = vadd.f32 %v2764, %v2930
        %v2977 = vadd.f32 %v2765, %v2935
        %v2978 = vadd.f32 %v2766, %v2938
        %v2979 = vadd.f32 %v2767, %v2943
        %v2980 = vadd.f32 %v2768, %v2946
        %v2981 = vld [vmem:[%s2] sm:$0x1]
        %v2983 = vlaneseq
        %v2984 = vshrl.u32 %v2983, 7
        %v2985 = vsub.s32 0, %v2984
        %v2986 = vrot.slane %v2981, %v2985
        %v2988 = vadd.f32 %v2949, %v2986
        %v2989 = vadd.f32 %v2950, %v2986
        %v2990 = vadd.f32 %v2951, %v2986
        %v2991 = vadd.f32 %v2952, %v2986
        %v2992 = vadd.f32 %v2953, %v2986
        %v2993 = vadd.f32 %v2954, %v2986
        %v2994 = vadd.f32 %v2955, %v2986
        %v2995 = vadd.f32 %v2956, %v2986
        %v2996 = vadd.f32 %v2957, %v2986
        %v2997 = vadd.f32 %v2958, %v2986
        %v2998 = vadd.f32 %v2959, %v2986
        %v2999 = vadd.f32 %v2960, %v2986
        %v3000 = vadd.f32 %v2961, %v2986
        %v3001 = vadd.f32 %v2962, %v2986
        %v3002 = vadd.f32 %v2963, %v2986
        %v3003 = vadd.f32 %v2964, %v2986
        %v3004 = vadd.f32 %v2965, %v2986
        %v3005 = vadd.f32 %v2966, %v2986
        %v3006 = vadd.f32 %v2967, %v2986
        %v3007 = vadd.f32 %v2968, %v2986
        %v3008 = vadd.f32 %v2969, %v2986
        %v3009 = vadd.f32 %v2970, %v2986
        %v3010 = vadd.f32 %v2971, %v2986
        %v3011 = vadd.f32 %v2972, %v2986
        %v3012 = vadd.f32 %v2973, %v2986
        %v3013 = vadd.f32 %v2974, %v2986
        %v3014 = vadd.f32 %v2975, %v2986
        %v3015 = vadd.f32 %v2976, %v2986
        %v3016 = vadd.f32 %v2977, %v2986
        %v3017 = vadd.f32 %v2978, %v2986
        %v3018 = vadd.f32 %v2979, %v2986
        %v3019 = vadd.f32 %v2980, %v2986
        %v3020 = vmax.f32 %v2988, 0.0
        %v3021 = vmax.f32 %v2989, 0.0
        %v3022 = vmax.f32 %v2990, 0.0
        %v3023 = vmax.f32 %v2991, 0.0
        %v3024 = vmax.f32 %v2992, 0.0
        %v3025 = vmax.f32 %v2993, 0.0
        %v3026 = vmax.f32 %v2994, 0.0
        %v3027 = vmax.f32 %v2995, 0.0
        %v3028 = vmax.f32 %v2996, 0.0
        %v3029 = vmax.f32 %v2997, 0.0
        %v3030 = vmax.f32 %v2998, 0.0
        %v3031 = vmax.f32 %v2999, 0.0
        %v3032 = vmax.f32 %v3000, 0.0
        %v3033 = vmax.f32 %v3001, 0.0
        %v3034 = vmax.f32 %v3002, 0.0
        %v3035 = vmax.f32 %v3003, 0.0
        %v3036 = vmax.f32 %v3004, 0.0
        %v3037 = vmax.f32 %v3005, 0.0
        %v3038 = vmax.f32 %v3006, 0.0
        %v3039 = vmax.f32 %v3007, 0.0
        %v3040 = vmax.f32 %v3008, 0.0
        %v3041 = vmax.f32 %v3009, 0.0
        %v3042 = vmax.f32 %v3010, 0.0
        %v3043 = vmax.f32 %v3011, 0.0
        %v3044 = vmax.f32 %v3012, 0.0
        %v3045 = vmax.f32 %v3013, 0.0
        %v3046 = vmax.f32 %v3014, 0.0
        %v3047 = vmax.f32 %v3015, 0.0
        %v3048 = vmax.f32 %v3016, 0.0
        %v3049 = vmax.f32 %v3017, 0.0
        %v3050 = vmax.f32 %v3018, 0.0
        %v3051 = vmax.f32 %v3019, 0.0
        %v3052 = vadd.f32 %v3020, %v3021
        %v3053 = vadd.f32 %v3052, %v3022
        %v3054 = vadd.f32 %v3053, %v3023
        %v3055 = vadd.f32 %v3054, %v3024
        %v3056 = vadd.f32 %v3055, %v3025
        %v3057 = vadd.f32 %v3056, %v3026
        %v3058 = vadd.f32 %v3057, %v3027
        %v3059 = vadd.f32 %v3058, %v3028
        %v3060 = vadd.f32 %v3059, %v3029
        %v3061 = vadd.f32 %v3060, %v3030
        %v3062 = vadd.f32 %v3061, %v3031
        %v3063 = vadd.f32 %v3062, %v3032
        %v3064 = vadd.f32 %v3063, %v3033
        %v3065 = vadd.f32 %v3064, %v3034
        %v3066 = vadd.f32 %v3065, %v3035
        %v3067 = vadd.f32 %v3066, %v3036
        %v3068 = vadd.f32 %v3067, %v3037
        %v3069 = vadd.f32 %v3068, %v3038
        %v3070 = vadd.f32 %v3069, %v3039
        %v3071 = vadd.f32 %v3070, %v3040
        %v3072 = vadd.f32 %v3071, %v3041
        %v3073 = vadd.f32 %v3072, %v3042
        %v3074 = vadd.f32 %v3073, %v3043
        %v3075 = vadd.f32 %v3074, %v3044
        %v3076 = vadd.f32 %v3075, %v3045
        %v3077 = vadd.f32 %v3076, %v3046
        %v3078 = vadd.f32 %v3077, %v3047
        %v3079 = vadd.f32 %v3078, %v3048
        %v3080 = vadd.f32 %v3079, %v3049
        %v3081 = vadd.f32 %v3080, %v3050
        %v3082 = vadd.f32 %v3081, %v3051
        %v3083 = vrot.slane %v3082, 4
        %v3084 = vadd.f32 %v3082, %v3083
        %v3085 = vrot.slane %v3084, 2
        %v3086 = vadd.f32 %v3084, %v3085
        %v3087 = vrot.slane %v3086, 1
        %v3088 = vadd.f32 %v3086, %v3087
        %v3089 = vmul.f32 %v3088, 0.00390625
        %s3090 = scalar_lea.vmem [#allocation2], %s19
        %3091 = vst [vmem:[%s3090] sm:$0x1] %v3089
        %p3092 = scmp.eq.s32.totalorder %s19, 1
        // Predicated region
        $region49: #{conv_pre_net_forward.1} parent=47 // pred_check
          %p3093 = pneg %p3092
        $region50: #{conv_pre_net_forward.1} parent=47 // pred_check_branch
          %3095 = sbr.rel (%p3093) target = $region52
        $region51: #{conv_pre_net_forward.1} parent=47 // pred_region
          %v3096 = vld [vmem:[#allocation2] sm:$0x3]
          %v3097 = vld [vmem:[%s3] sm:$0xff]
          %v3098 = vld [vmem:[%s3 + $0x8] sm:$0xff]
          %v3099 = vld [vmem:[%s3 + $0x10] sm:$0xff]
          %v3100 = vld [vmem:[%s3 + $0x18] sm:$0xff]
          %v3101 = vld [vmem:[%s3 + $0x20] sm:$0xff]
          %v3102 = vld [vmem:[%s3 + $0x28] sm:$0xff]
          %v3103 = vld [vmem:[%s3 + $0x30] sm:$0xff]
          %v3104 = vld [vmem:[%s3 + $0x38] sm:$0xff]
          %v3105 = vld [vmem:[%s3 + $0x40] sm:$0xff]
          %v3106 = vld [vmem:[%s3 + $0x48] sm:$0xff]
          %v3107 = vld [vmem:[%s3 + $0x50] sm:$0xff]
          %v3108 = vld [vmem:[%s3 + $0x58] sm:$0xff]
          %v3109 = vld [vmem:[%s3 + $0x60] sm:$0xff]
          %v3110 = vld [vmem:[%s3 + $0x68] sm:$0xff]
          %v3111 = vld [vmem:[%s3 + $0x70] sm:$0xff]
          %v3112 = vld [vmem:[%s3 + $0x78] sm:$0xff]
          %v3113 = vld [vmem:[%s3 + $0x80] sm:$0xff]
          %v3114 = vld [vmem:[%s3 + $0x88] sm:$0xff]
          %v3115 = vld [vmem:[%s3 + $0x90] sm:$0xff]
          %v3116 = vld [vmem:[%s3 + $0x98] sm:$0xff]
          %v3117 = vld [vmem:[%s3 + $0xa0] sm:$0xff]
          %v3118 = vld [vmem:[%s3 + $0xa8] sm:$0xff]
          %v3119 = vld [vmem:[%s3 + $0xb0] sm:$0xff]
          %v3120 = vld [vmem:[%s3 + $0xb8] sm:$0xff]
          %v3121 = vld [vmem:[%s3 + $0xc0] sm:$0xff]
          %v3122 = vld [vmem:[%s3 + $0xc8] sm:$0xff]
          %v3123 = vld [vmem:[%s3 + $0xd0] sm:$0xff]
          %v3124 = vld [vmem:[%s3 + $0xd8] sm:$0xff]
          %v3125 = vld [vmem:[%s3 + $0xe0] sm:$0xff]
          %v3126 = vld [vmem:[%s3 + $0xe8] sm:$0xff]
          %v3127 = vld [vmem:[%s3 + $0xf0] sm:$0xff]
          %v3128 = vld [vmem:[%s3 + $0xf8] sm:$0xff]
          %v3129 = vld [vmem:[%s4] sm:$0x3]
          %v3131 = vlaneseq
          %v3132 = vshrl.u32 %v3131, 7
          %v3133 = vsub.s32 0, %v3132
          %v3134 = vrot.slane %v3129, %v3133
          %v3135 = vlaneseq
          %v3136 = vshrl.u32 %v3135, 7
          %v3137 = vsub.s32 1, %v3136
          %v3138 = vrot.slane %v3129, %v3137
          %3141 = vmatprep.subr.mxu0 %v3098
          %3142 = vmatpush1.msra.mxu0 %v3097
          %3143 = vmatprep.subr.mxu0 %v3100
          %3144 = vmatpush1.msra.mxu0 %v3099
          %3145 = vmatprep.subr.mxu0 %v3102
          %3146 = vmatpush1.msra.mxu0 %v3101
          %3147 = vmatprep.subr.mxu0 %v3104
          %3148 = vmatpush1.msra.mxu0 %v3103
          %3149 = vmatprep.subr.mxu0 %v3106
          %3150 = vmatpush1.msra.mxu0 %v3105
          %3151 = vmatprep.subr.mxu0 %v3108
          %3152 = vmatpush1.msra.mxu0 %v3107
          %3153 = vmatprep.subr.mxu0 %v3110
          %3154 = vmatpush1.msra.mxu0 %v3109
          %3155 = vmatprep.subr.mxu0 %v3112
          %3156 = vmatpush1.msra.mxu0 %v3111
          %3157 = vmatprep.subr.mxu0 %v3114
          %3158 = vmatpush1.msra.mxu0 %v3113
          %3159 = vmatprep.subr.mxu0 %v3116
          %3160 = vmatpush1.msra.mxu0 %v3115
          %3161 = vmatprep.subr.mxu0 %v3118
          %3162 = vmatpush1.msra.mxu0 %v3117
          %3163 = vmatprep.subr.mxu0 %v3120
          %3164 = vmatpush1.msra.mxu0 %v3119
          %3165 = vmatprep.subr.mxu0 %v3122
          %3166 = vmatpush1.msra.mxu0 %v3121
          %3167 = vmatprep.subr.mxu0 %v3124
          %3168 = vmatpush1.msra.mxu0 %v3123
          %3169 = vmatprep.subr.mxu0 %v3126
          %3170 = vmatpush1.msra.mxu0 %v3125
          %3171 = vmatprep.subr.mxu0 %v3128
          %3172 = vmatpush1.msra.mxu0 %v3127
          %3173 = vmatprep.subr.mxu0 0.0
          %3174 = vmatpush1.msra.mxu0 0.0
          %3175 = vmatprep.subr.mxu0 0.0
          %3176 = vmatpush1.msra.mxu0 0.0
          %3177 = vmatprep.subr.mxu0 0.0
          %3178 = vmatpush1.msra.mxu0 0.0
          %3179 = vmatprep.subr.mxu0 0.0
          %3180 = vmatpush1.msra.mxu0 0.0
          %3181 = vmatprep.subr.mxu0 0.0
          %3182 = vmatpush1.msra.mxu0 0.0
          %3183 = vmatprep.subr.mxu0 0.0
          %3184 = vmatpush1.msra.mxu0 0.0
          %3185 = vmatprep.subr.mxu0 0.0
          %3186 = vmatpush1.msra.mxu0 0.0
          %3187 = vmatprep.subr.mxu0 0.0
          %3188 = vmatpush1.msra.mxu0 0.0
          %3189 = vmatprep.subr.mxu0 0.0
          %3190 = vmatpush1.msra.mxu0 0.0
          %3191 = vmatprep.subr.mxu0 0.0
          %3192 = vmatpush1.msra.mxu0 0.0
          %3193 = vmatprep.subr.mxu0 0.0
          %3194 = vmatpush1.msra.mxu0 0.0
          %3195 = vmatprep.subr.mxu0 0.0
          %3196 = vmatpush1.msra.mxu0 0.0
          %3197 = vmatprep.subr.mxu0 0.0
          %3198 = vmatpush1.msra.mxu0 0.0
          %3199 = vmatprep.subr.mxu0 0.0
          %3200 = vmatpush1.msra.mxu0 0.0
          %3201 = vmatprep.subr.mxu0 0.0
          %3202 = vmatpush1.msra.mxu0 0.0
          %3203 = vmatprep.subr.mxu0 0.0
          %3204 = vmatpush1.msra.mxu0 0.0
          %3205 = vmatprep.mubr.f32.mxu0 0.0
          %3206 = vmatmul.mubr.f32.gmra.mrb[0].mxu0 %v3096
          %v3207 = vpop.f32.mrb[0].mxu0
          %v3208 = vadd.f32 %v3134, %v3207
          %v3209 = vpop.f32.mrb[0].mxu0
          %v3210 = vadd.f32 %v3138, %v3209
          %3211 = vdwg.mxu0
          %v3212 = vmax.f32 %v3208, 0.0
          %v3213 = vmax.f32 %v3210, 0.0
          %v3214 = vld [vmem:[%s5] sm:$0xff]
          %v3215 = vld [vmem:[%s5 + $0x8] sm:$0xff]
          %v3216 = vld [vmem:[%s5 + $0x10] sm:$0xff]
          %v3217 = vld [vmem:[%s5 + $0x18] sm:$0xff]
          %v3218 = vld [vmem:[%s5 + $0x20] sm:$0xff]
          %v3219 = vld [vmem:[%s5 + $0x28] sm:$0xff]
          %v3220 = vld [vmem:[%s5 + $0x30] sm:$0xff]
          %v3221 = vld [vmem:[%s5 + $0x38] sm:$0xff]
          %v3222 = vld [vmem:[%s5 + $0x40] sm:$0xff]
          %v3223 = vld [vmem:[%s5 + $0x48] sm:$0xff]
          %v3224 = vld [vmem:[%s5 + $0x50] sm:$0xff]
          %v3225 = vld [vmem:[%s5 + $0x58] sm:$0xff]
          %v3226 = vld [vmem:[%s5 + $0x60] sm:$0xff]
          %v3227 = vld [vmem:[%s5 + $0x68] sm:$0xff]
          %v3228 = vld [vmem:[%s5 + $0x70] sm:$0xff]
          %v3229 = vld [vmem:[%s5 + $0x78] sm:$0xff]
          %v3230 = vld [vmem:[%s5 + $0x80] sm:$0xff]
          %v3231 = vld [vmem:[%s5 + $0x88] sm:$0xff]
          %v3232 = vld [vmem:[%s5 + $0x90] sm:$0xff]
          %v3233 = vld [vmem:[%s5 + $0x98] sm:$0xff]
          %v3234 = vld [vmem:[%s5 + $0xa0] sm:$0xff]
          %v3235 = vld [vmem:[%s5 + $0xa8] sm:$0xff]
          %v3236 = vld [vmem:[%s5 + $0xb0] sm:$0xff]
          %v3237 = vld [vmem:[%s5 + $0xb8] sm:$0xff]
          %v3238 = vld [vmem:[%s5 + $0xc0] sm:$0xff]
          %v3239 = vld [vmem:[%s5 + $0xc8] sm:$0xff]
          %v3240 = vld [vmem:[%s5 + $0xd0] sm:$0xff]
          %v3241 = vld [vmem:[%s5 + $0xd8] sm:$0xff]
          %v3242 = vld [vmem:[%s5 + $0xe0] sm:$0xff]
          %v3243 = vld [vmem:[%s5 + $0xe8] sm:$0xff]
          %v3244 = vld [vmem:[%s5 + $0xf0] sm:$0xff]
          %v3245 = vld [vmem:[%s5 + $0xf8] sm:$0xff]
          %v3246 = vld [vmem:[%s6] sm:$0x1]
          %v3248 = vlaneseq
          %v3249 = vshrl.u32 %v3248, 7
          %v3250 = vsub.s32 0, %v3249
          %v3251 = vrot.slane %v3246, %v3250
          %3253 = vmatprep.subr.mxu0 0.0
          %3254 = vmatpush1.msra.mxu0 %v3214
          %3255 = vmatprep.subr.mxu0 0.0
          %3256 = vmatpush1.msra.mxu0 %v3215
          %3257 = vmatprep.subr.mxu0 0.0
          %3258 = vmatpush1.msra.mxu0 %v3216
          %3259 = vmatprep.subr.mxu0 0.0
          %3260 = vmatpush1.msra.mxu0 %v3217
          %3261 = vmatprep.subr.mxu0 0.0
          %3262 = vmatpush1.msra.mxu0 %v3218
          %3263 = vmatprep.subr.mxu0 0.0
          %3264 = vmatpush1.msra.mxu0 %v3219
          %3265 = vmatprep.subr.mxu0 0.0
          %3266 = vmatpush1.msra.mxu0 %v3220
          %3267 = vmatprep.subr.mxu0 0.0
          %3268 = vmatpush1.msra.mxu0 %v3221
          %3269 = vmatprep.subr.mxu0 0.0
          %3270 = vmatpush1.msra.mxu0 %v3222
          %3271 = vmatprep.subr.mxu0 0.0
          %3272 = vmatpush1.msra.mxu0 %v3223
          %3273 = vmatprep.subr.mxu0 0.0
          %3274 = vmatpush1.msra.mxu0 %v3224
          %3275 = vmatprep.subr.mxu0 0.0
          %3276 = vmatpush1.msra.mxu0 %v3225
          %3277 = vmatprep.subr.mxu0 0.0
          %3278 = vmatpush1.msra.mxu0 %v3226
          %3279 = vmatprep.subr.mxu0 0.0
          %3280 = vmatpush1.msra.mxu0 %v3227
          %3281 = vmatprep.subr.mxu0 0.0
          %3282 = vmatpush1.msra.mxu0 %v3228
          %3283 = vmatprep.subr.mxu0 0.0
          %3284 = vmatpush1.msra.mxu0 %v3229
          %3285 = vmatprep.subr.mxu0 0.0
          %3286 = vmatpush1.msra.mxu0 %v3230
          %3287 = vmatprep.subr.mxu0 0.0
          %3288 = vmatpush1.msra.mxu0 %v3231
          %3289 = vmatprep.subr.mxu0 0.0
          %3290 = vmatpush1.msra.mxu0 %v3232
          %3291 = vmatprep.subr.mxu0 0.0
          %3292 = vmatpush1.msra.mxu0 %v3233
          %3293 = vmatprep.subr.mxu0 0.0
          %3294 = vmatpush1.msra.mxu0 %v3234
          %3295 = vmatprep.subr.mxu0 0.0
          %3296 = vmatpush1.msra.mxu0 %v3235
          %3297 = vmatprep.subr.mxu0 0.0
          %3298 = vmatpush1.msra.mxu0 %v3236
          %3299 = vmatprep.subr.mxu0 0.0
          %3300 = vmatpush1.msra.mxu0 %v3237
          %3301 = vmatprep.subr.mxu0 0.0
          %3302 = vmatpush1.msra.mxu0 %v3238
          %3303 = vmatprep.subr.mxu0 0.0
          %3304 = vmatpush1.msra.mxu0 %v3239
          %3305 = vmatprep.subr.mxu0 0.0
          %3306 = vmatpush1.msra.mxu0 %v3240
          %3307 = vmatprep.subr.mxu0 0.0
          %3308 = vmatpush1.msra.mxu0 %v3241
          %3309 = vmatprep.subr.mxu0 0.0
          %3310 = vmatpush1.msra.mxu0 %v3242
          %3311 = vmatprep.subr.mxu0 0.0
          %3312 = vmatpush1.msra.mxu0 %v3243
          %3313 = vmatprep.subr.mxu0 0.0
          %3314 = vmatpush1.msra.mxu0 %v3244
          %3315 = vmatprep.subr.mxu0 0.0
          %3316 = vmatpush1.msra.mxu0 %v3245
          %3317 = vmatprep.mubr.f32.mxu0 %v3213
          %3318 = vmatmul.mubr.f32.gmra.mrb[0].mxu0 %v3212
          %v3319 = vpop.f32.mrb[0].mxu0
          %v3320 = vadd.f32 %v3251, %v3319
          %v3321 = vpop.f32.mrb[0].mxu0
          %3322 = vdwg.mxu0
          %vm3323 = vcmask 9216
          %v3324 = vsel %vm3323, %v3320, -inf
          %3325 = vmax.xlane.f32.xlu0 %v3324
          %v3326 = vpop.xlane.xlu0 %3325
          %v3327 = vsub.f32 %v3320, %v3326
          %v3328 = vmul.f32 %v3327, 1.442695
          %v3329 = vpow.pop %v3328
          %v3330 = vsel %vm3323, %v3329, 0.0
          %3331 = vadd.xlane.f32.xlu0 %v3330
          %v3332 = vpop.xlane.xlu0 %3331
          %v3333 = vlog2.pop %v3332
          %v3334 = vmul.f32 %v3333, 0.6931472
          %v3335 = vadd.f32 %v3334, %v3326
          %v3336 = vsub.f32 %v3320, %v3335
          %3337 = vst.msk [vmem:[#allocation3] sm:$0x3] %vm3323, %v3336
        $region52: #{conv_pre_net_forward.1} parent=47 // pred_fallthru
          _
        // Predicated region
        $region53: #{conv_pre_net_forward.1} parent=47 // pred_check
          %p3338 = pneg %p184
        $region54: #{conv_pre_net_forward.1} parent=47 // pred_check_branch
          %3340 = sbr.rel (%p3338) target = $region56
        $region55: #{conv_pre_net_forward.1} parent=47 // pred_region
          %s3342 = ssub.s32 32, 32
          %3343 = vsyncadd [#allocation4], %s3342
          %s3345 = sshll.u32 [#allocation3], 4
          %s3346 = int_to_ptr.vmem [resolvable:$true] %s3345
          %3348 = dma.vmem_to_hbm [thread:$0]  %s3346, 32, %s7, [#allocation4]
        $region56: #{conv_pre_net_forward.1} parent=47 // pred_fallthru
          _
        // Predicated region
        $region57: #{conv_pre_net_forward.1} parent=47 // pred_check
          %p3349 = pneg %p184
        $region58: #{conv_pre_net_forward.1} parent=47 // pred_check_branch
          %3351 = sbr.rel (%p3349) target = $region60
        $region59: #{conv_pre_net_forward.1} parent=47 // pred_region
          %3352 = dma.done [#allocation4], 32
        $region60: #{conv_pre_net_forward.1} parent=47 // pred_fallthru
          _
      $region48: #{conv_pre_net_forward.1} parent=5 // pred_fallthru
        _
      %p3353 = scmp.le.s32.totalorder 2, %s14
      // Predicated region
      $region61: #{conv_pre_net_forward.1} parent=5 // pred_check
        %p3354 = pneg %p3353
      $region62: #{conv_pre_net_forward.1} parent=5 // pred_check_branch
        %3356 = sbr.rel (%p3354) target = $region64
      $region63: #{conv_pre_net_forward.1} parent=5 // pred_region
        %s3357 = ssub.s32 %s14, 2
      $region64: #{conv_pre_net_forward.1} parent=5 // pred_fallthru
        _
    $region6: #{conv_pre_net_forward.1} parent=1 // loop_footer
      %s18 = sadd.s32 1, %s14
    $region7: #{conv_pre_net_forward.1} parent=1 // loop_footer_branch
      %13 = sbr.rel target = $region3
    $region8: #{conv_pre_net_forward.1} parent=1 // loop_exit
      _
    %3358 = vsyncpa [#allocation4], 1
    %s3359 = scalar_lea.sflag [#allocation4], 1
    %3360 = vsyncpa %s3359, 1

</llo_original>
